<compile_context>
chip_gen: v6e
topology: v6e:2x2x1
jax: 0.10.0
libtpu: 0.0.40
codegen_flags: <defaults>
</compile_context>

<pallas_src>
import functools

import jax
import jax.numpy as jnp
from jax import lax
from jax.experimental import pallas as pl
from jax.experimental.pallas import tpu as pltpu

# ----------------------------- hparams -------------------------------------
HP = dict(
    model_dim=32, nb_patches=8, nb_channels=1, n_mels=16, patch_len=4,
    instance_norm=False, patch_encoder='linear', mlp_layers=1,
    depth=2, heads=4, dim_head=8, mlp_dim=64,
    dropout=0.0, emb_dropout=0.0, pool='mean', pos_embed=True,
)

DIM = HP['model_dim']
P = HP['nb_patches']
C = HP['nb_channels']
F = HP['n_mels']
T = HP['patch_len']
DIN = HP['patch_len'] * HP['n_mels']          # linear patch encoder input dim (C=1)
DEPTH = HP['depth']
H = HP['heads']
DH = HP['dim_head']
INNER = H * DH
MLPD = HP['mlp_dim']
NL = HP['mlp_layers']
NTOK = P + 1                                   # cls token + patches
PP = P * P                                     # mlp_head output dim
SCALE = DH ** (-0.5)
EPS = 1e-5
NEG = -1e30                                    # additive mask value

TOKP = ((NTOK + 7) // 8) * 8                   # sublane-padded tokens per batch element
OUTP = ((PP + 127) // 128) * 128               # lane-padded head output width
BT_MAX = 8                                     # batch elements per grid step
# (on v7x with large batches, cap Bt at Bpad//2 so the 'parallel' grid axis has
#  >=2 steps and both TensorCores are used; with the demo batch this is moot)

# row indices inside the packed (NV32, DIM) vector buffer
R_BPROJ, R_HG, R_HB = 0, 1, 2
R_LAYER = 3                                    # + 6*l + {ln1g, ln1b, bo, ln2g, ln2b, b2}
NV32 = R_LAYER + 6 * DEPTH


# ----------------------------- helpers -------------------------------------
def _layer_norm(x, g, b):
    mu = jnp.mean(x, axis=-1, keepdims=True)
    var = jnp.mean(jnp.square(x - mu), axis=-1, keepdims=True)
    return (x - mu) * lax.rsqrt(var + EPS) * g + b


def _gelu(x):
    # exact GELU (PyTorch nn.GELU default)
    return 0.5 * x * (1.0 + lax.erf(x * (2.0 ** -0.5)))


def _full(a):
    nd = a.ndim
    return pl.BlockSpec(a.shape, lambda i, _nd=nd: (0,) * _nd)


# ----------------------------- fused kernel --------------------------------
def fused_kernel(x_ref, wmlp_ref, wproj_ref, a_ref, vo_ref, w1_ref, w2_ref,
                 whp_ref, bhp_ref, vec32_ref, vec64_ref, scat_ref, tokadd_ref,
                 mask_ref, pool_ref, out_ref, *, bt):
    f32 = jnp.float32
    rows = bt * TOKP

    # ---- linear patch encoder on the whole (bt*P, DIN) slab ----
    e = x_ref[...]
    for i in range(NL):
        e = jnp.dot(e, wmlp_ref[i], preferred_element_type=f32) + vec64_ref[i]
    e = jnp.dot(e, wproj_ref[...], preferred_element_type=f32) + vec32_ref[R_BPROJ]

    # ---- build the padded token slab with one MXU scatter-matmul ----
    # rows b*TOKP..b*TOKP+P-1 = patches (+pos[1:]), row b*TOKP+P = cls (+pos[0]),
    # remaining rows = zero padding (masked out of attention keys and pooling).
    x = jnp.dot(scat_ref[...], e, preferred_element_type=f32) + tokadd_ref[...]

    # ---- transformer blocks (all batch elements processed together) ----
    for l in range(DEPTH):
        base = R_LAYER + 6 * l
        ln1g, ln1b = vec32_ref[base + 0], vec32_ref[base + 1]
        bo = vec32_ref[base + 2]
        ln2g, ln2b = vec32_ref[base + 3], vec32_ref[base + 4]
        b2 = vec32_ref[base + 5]
        b1 = vec64_ref[NL + l]

        # PreNorm + multi-head attention.  Per-head weights are host-folded and
        # lane-packed:  A_all = [scale*Wq_h Wk_h^T]_h  (DIM, H*DIM)
        #               VO_all = [Wv_h Wo_h]_h          (DIM, H*DIM)
        # so q/v projections are single lane-dense matmuls and the only per-head
        # ops are a full-width score matmul + masked softmax + value matmul.
        h = _layer_norm(x, ln1g, ln1b)
        qa = jnp.dot(h, a_ref[l], preferred_element_type=f32)    # (rows, H*DIM)
        vo = jnp.dot(h, vo_ref[l], preferred_element_type=f32)   # (rows, H*DIM)
        y = jnp.zeros((rows, DIM), f32)
        for hd in range(H):
            qa_h = qa[:, hd * DIM:(hd + 1) * DIM]
            vo_h = vo[:, hd * DIM:(hd + 1) * DIM]
            # scores for all batch elements at once; block-diagonal mask keeps
            # batch elements independent and hides the pad-token key columns.
            s = lax.dot_general(qa_h, h, (((1,), (1,)), ((), ())),
                                preferred_element_type=f32) + mask_ref[...]
            m = jnp.max(s, axis=-1, keepdims=True)
            ex = jnp.exp(s - m)
            attn = ex * pl.reciprocal(jnp.sum(ex, axis=-1, keepdims=True),
                                      approx=True)
            y = y + jnp.dot(attn, vo_h, preferred_element_type=f32)
        x = x + y + bo                                            # one slab residual

        # PreNorm + FeedForward on the whole slab (pad rows stay finite & unused).
        h2 = _layer_norm(x, ln2g, ln2b)
        h2 = _gelu(jnp.dot(h2, w1_ref[l], preferred_element_type=f32) + b1)
        x = x + jnp.dot(h2, w2_ref[l], preferred_element_type=f32) + b2

    # ---- mean pool over the NTOK real tokens (one MXU op) + LayerNorm + head ----
    pooled = jnp.dot(pool_ref[...], x, preferred_element_type=f32)   # (bt, DIM)
    pooled = _layer_norm(pooled, vec32_ref[R_HG], vec32_ref[R_HB])
    out_ref[...] = (jnp.dot(pooled, whp_ref[...], preferred_element_type=f32)
                    + bhp_ref[...])                                  # (bt, OUTP)


# ----------------------------- wrapper --------------------------------------
@jax.jit
def speckk_forward(x_nchw, params):
    """x_nchw: (B*P, C, F, T) float32 -> (B, P*P) float32."""
    bp = x_nchw.shape[0]
    assert bp % P == 0
    B = bp // P
    Bt = B if B <= BT_MAX else BT_MAX
    Bpad = ((B + Bt - 1) // Bt) * Bt
    rows = Bt * TOKP

    # '(b p) c f t -> (b p) (c f t)'; pad batch to a multiple of Bt if needed.
    x = x_nchw.reshape(B * P, C * F * T).astype(jnp.float32)
    if Bpad != B:
        x = jnp.pad(x, ((0, (Bpad - B) * P), (0, 0)))

    hi = jax.lax.Precision.HIGHEST
    # Host-side fold of per-head attention weights (tiny, done at full precision),
    # packed along lanes:  A_all[l, d, h*DIM+m] = scale * sum_e Wq[d,h,e] Wk[m,h,e]
    #                      VO_all[l, d, h*DIM+m] = sum_e Wv[d,h,e] Wo[h,e,m]
    wqkv = params['wqkv']                                   # (DEPTH, DIM, 3*INNER)
    wq = wqkv[:, :, :INNER].reshape(DEPTH, DIM, H, DH)
    wk = wqkv[:, :, INNER:2 * INNER].reshape(DEPTH, DIM, H, DH)
    wv = wqkv[:, :, 2 * INNER:].reshape(DEPTH, DIM, H, DH)
    wo = params['wo'].reshape(DEPTH, H, DH, DIM)
    a_all = (SCALE * jnp.einsum('ldhe,lmhe->ldhm', wq, wk, precision=hi)
             ).reshape(DEPTH, DIM, H * DIM)
    vo_all = jnp.einsum('ldhe,lhem->ldhm', wv, wo, precision=hi
                        ).reshape(DEPTH, DIM, H * DIM)

    # Pack all DIM-wide vectors into a single (NV32, DIM) buffer.
    vrows = [params['bproj'].reshape(1, DIM), params['hg'].reshape(1, DIM),
             params['hb'].reshape(1, DIM)]
    for l in range(DEPTH):
        vrows += [params['ln1g'][l:l + 1], params['ln1b'][l:l + 1],
                  params['bo'][l:l + 1], params['ln2g'][l:l + 1],
                  params['ln2b'][l:l + 1], params['b2'][l:l + 1]]
    vec32 = jnp.concatenate(vrows, axis=0)                  # (NV32, DIM)

    assert DIN == MLPD  # both 64 for this instantiation; packed together
    vec64 = jnp.concatenate([params['bmlp'].reshape(NL, DIN),
                             params['b1'].reshape(DEPTH, MLPD)], axis=0)

    # Additive token table (pos / cls), tiled over the Bt batch elements of a step.
    tokadd1 = jnp.zeros((TOKP, DIM), jnp.float32)
    tokadd1 = tokadd1.at[:P].set(params['pos'][0, 1:1 + P])
    tokadd1 = tokadd1.at[P].set(params['cls'][0, 0] + params['pos'][0, 0])
    tokadd = jnp.tile(tokadd1, (Bt, 1))                     # (rows, DIM)

    ti = jnp.arange(rows)[:, None]
    pj = jnp.arange(Bt * P)[None, :]
    tj = jnp.arange(rows)[None, :]
    bi = jnp.arange(Bt)[:, None]
    # Scatter matrix: token-slab row <- encoded patch row (one MXU op in-kernel).
    scat = jnp.where((ti // TOKP == pj // P) & (ti % TOKP == pj % P)
                     & (ti % TOKP < P), 1.0, 0.0).astype(jnp.float32)
    # Block-diagonal additive attention mask: -1e30 on cross-batch blocks and on
    # pad-token key columns; 0 elsewhere.
    mask = jnp.where((ti // TOKP == tj // TOKP) & (tj % TOKP < NTOK),
                     0.0, NEG).astype(jnp.float32)          # (rows, rows)
    # Mean-pool matrix: 1/NTOK over each batch element's real-token rows.
    pool_mat = jnp.where((tj // TOKP == bi) & (tj % TOKP < NTOK),
                         1.0 / NTOK, 0.0).astype(jnp.float32)   # (Bt, rows)

    # Lane-pad the head so the output store is a full 128-lane unmasked store.
    whp = jnp.zeros((DIM, OUTP), jnp.float32).at[:, :PP].set(params['wh'])
    bhp = jnp.zeros((1, OUTP), jnp.float32).at[:, :PP].set(params['bh'].reshape(1, PP))

    ins = [x, params['wmlp'], params['wproj'], a_all, vo_all,
           params['w1'], params['w2'], whp, bhp, vec32, vec64,
           scat, tokadd, mask, pool_mat]
    in_specs = ([pl.BlockSpec((Bt * P, DIN), lambda i: (i, 0))]
                + [_full(a) for a in ins[1:]])

    out = pl.pallas_call(
        functools.partial(fused_kernel, bt=Bt),
        out_shape=jax.ShapeDtypeStruct((Bpad, OUTP), jnp.float32),
        grid=(Bpad // Bt,),
        in_specs=in_specs,
        out_specs=pl.BlockSpec((Bt, OUTP), lambda i: (i, 0)),
        compiler_params=pltpu.CompilerParams(dimension_semantics=("parallel",)),
    )(*ins)
    return out[:B, :PP]


# -------------------------- pure-JAX reference ------------------------------
def ref_forward(x_nchw, params):
    B = x_nchw.shape[0] // P
    x = x_nchw.reshape(B, P, DIN).astype(jnp.float32)
    for i in range(NL):
        x = x @ params['wmlp'][i] + params['bmlp'][i]
    x = x @ params['wproj'] + params['bproj']
    cls = jnp.broadcast_to(params['cls'], (B, 1, DIM))
    x = jnp.concatenate([cls, x], axis=1)
    if HP['pos_embed']:
        x = x + params['pos']
    for l in range(DEPTH):
        h = _layer_norm(x, params['ln1g'][l], params['ln1b'][l])
        qkv = h @ params['wqkv'][l]
        q, k, v = jnp.split(qkv, 3, axis=-1)

        def heads(t):
            return t.reshape(B, NTOK, H, DH).transpose(0, 2, 1, 3)
        q, k, v = heads(q), heads(k), heads(v)
        dots = jnp.einsum('bhnd,bhmd->bhnm', q, k) * SCALE
        attn = jax.nn.softmax(dots, axis=-1)
        o = jnp.einsum('bhnm,bhmd->bhnd', attn, v)
        o = o.transpose(0, 2, 1, 3).reshape(B, NTOK, INNER)
        x = o @ params['wo'][l] + params['bo'][l] + x
        h2 = _layer_norm(x, params['ln2g'][l], params['ln2b'][l])
        h2 = _gelu(h2 @ params['w1'][l] + params['b1'][l])
        x = h2 @ params['w2'][l] + params['b2'][l] + x
    pooled = jnp.mean(x, axis=1)
    pooled = _layer_norm(pooled, params['hg'][0], params['hb'][0])
    return pooled @ params['wh'] + params['bh']


# ----------------------------- params / main --------------------------------
def init_params(key):
    ks = jax.random.split(key, 24)
    n = lambda k, s, scale=0.02: (scale * jax.random.normal(k, s)).astype(jnp.float32)
    params = dict(
        # patch encoder (linear)
        wmlp=n(ks[0], (NL, DIN, DIN)),
        bmlp=n(ks[1], (NL, DIN)),
        wproj=n(ks[2], (DIN, DIM)),
        bproj=n(ks[3], (1, DIM)),
        # tokens / pos embedding (module uses randn)
        cls=jax.random.normal(ks[4], (1, 1, DIM), jnp.float32),
        pos=jax.random.normal(ks[5], (1, NTOK, DIM), jnp.float32),
        # transformer (stacked over depth)
        ln1g=jnp.ones((DEPTH, DIM), jnp.float32),
        ln1b=jnp.zeros((DEPTH, DIM), jnp.float32),
        wqkv=n(ks[6], (DEPTH, DIM, 3 * INNER)),
        wo=n(ks[7], (DEPTH, INNER, DIM)),
        bo=n(ks[8], (DEPTH, DIM)),
        ln2g=jnp.ones((DEPTH, DIM), jnp.float32),
        ln2b=jnp.zeros((DEPTH, DIM), jnp.float32),
        w1=n(ks[9], (DEPTH, DIM, MLPD)),
        b1=n(ks[10], (DEPTH, MLPD)),
        w2=n(ks[11], (DEPTH, MLPD, DIM)),
        b2=n(ks[12], (DEPTH, DIM)),
        # mlp_head
        hg=jnp.ones((1, DIM), jnp.float32),
        hb=jnp.zeros((1, DIM), jnp.float32),
        wh=n(ks[13], (DIM, PP)),
        bh=n(ks[14], (1, PP)),
    )
    return params


if __name__ == "__main__":
    key = jax.random.PRNGKey(0)
    kx, kp = jax.random.split(key)
    B = 2
    # layout: NCHW (PyTorch): (batch*nb_patches, nb_channels, n_mels, patch_len)
    x = jax.random.normal(kx, (B * P, C, F, T), jnp.float32)
    params = init_params(kp)

    out = jax.block_until_ready(speckk_forward(x, params))

    with jax.default_matmul_precision("highest"):
        ref = jax.block_until_ready(ref_forward(x, params))

    assert out.shape == (B, PP), out.shape
    max_err = float(jnp.max(jnp.abs(out - ref)))
    assert max_err < 1e-3, f"mismatch vs reference: {max_err}"
    print("KERNEL_OK")
</pallas_src>

<mosaic_0001>
module attributes {stable_mosaic.version = 11 : i64} {
  func.func @fused_kernel(%arg0: i32, %arg1: memref<16x64xf32, #tpu.memory_space<vmem>>, %arg2: memref<1x64x64xf32, #tpu.memory_space<vmem>>, %arg3: memref<64x32xf32, #tpu.memory_space<vmem>>, %arg4: memref<2x32x128xf32, #tpu.memory_space<vmem>>, %arg5: memref<2x32x128xf32, #tpu.memory_space<vmem>>, %arg6: memref<2x32x64xf32, #tpu.memory_space<vmem>>, %arg7: memref<2x64x32xf32, #tpu.memory_space<vmem>>, %arg8: memref<32x128xf32, #tpu.memory_space<vmem>>, %arg9: memref<1x128xf32, #tpu.memory_space<vmem>>, %arg10: memref<15x32xf32, #tpu.memory_space<vmem>>, %arg11: memref<3x64xf32, #tpu.memory_space<vmem>>, %arg12: memref<32x16xf32, #tpu.memory_space<vmem>>, %arg13: memref<32x32xf32, #tpu.memory_space<vmem>>, %arg14: memref<32x32xf32, #tpu.memory_space<vmem>>, %arg15: memref<2x32xf32, #tpu.memory_space<vmem>>, %arg16: memref<2x128xf32, #tpu.memory_space<vmem>>) attributes {dimension_semantics = [#tpu.dimension_semantics<parallel>], iteration_bounds = array<i64: 1>, scalar_prefetch = 0 : i64, scratch_operands = 0 : i64, tpu.core_type = #tpu.core_type<tc>, window_params = [{transform_indices = @transform_0, window_bounds = array<i64: 16, 64>}, {pipeline_mode = #tpu.pipeline_mode<synchronous>, transform_indices = @transform_1, window_bounds = array<i64: 1, 64, 64>}, {pipeline_mode = #tpu.pipeline_mode<synchronous>, transform_indices = @transform_2, window_bounds = array<i64: 64, 32>}, {pipeline_mode = #tpu.pipeline_mode<synchronous>, transform_indices = @transform_3, window_bounds = array<i64: 2, 32, 128>}, {pipeline_mode = #tpu.pipeline_mode<synchronous>, transform_indices = @transform_4, window_bounds = array<i64: 2, 32, 128>}, {pipeline_mode = #tpu.pipeline_mode<synchronous>, transform_indices = @transform_5, window_bounds = array<i64: 2, 32, 64>}, {pipeline_mode = #tpu.pipeline_mode<synchronous>, transform_indices = @transform_6, window_bounds = array<i64: 2, 64, 32>}, {pipeline_mode = #tpu.pipeline_mode<synchronous>, transform_indices = @transform_7, window_bounds = array<i64: 32, 128>}, {pipeline_mode = #tpu.pipeline_mode<synchronous>, transform_indices = @transform_8, window_bounds = array<i64: 1, 128>}, {pipeline_mode = #tpu.pipeline_mode<synchronous>, transform_indices = @transform_9, window_bounds = array<i64: 15, 32>}, {pipeline_mode = #tpu.pipeline_mode<synchronous>, transform_indices = @transform_10, window_bounds = array<i64: 3, 64>}, {pipeline_mode = #tpu.pipeline_mode<synchronous>, transform_indices = @transform_11, window_bounds = array<i64: 32, 16>}, {pipeline_mode = #tpu.pipeline_mode<synchronous>, transform_indices = @transform_12, window_bounds = array<i64: 32, 32>}, {pipeline_mode = #tpu.pipeline_mode<synchronous>, transform_indices = @transform_13, window_bounds = array<i64: 32, 32>}, {pipeline_mode = #tpu.pipeline_mode<synchronous>, transform_indices = @transform_14, window_bounds = array<i64: 2, 32>}, {transform_indices = @transform_15, window_bounds = array<i64: 2, 128>}]} {
    %c0 = arith.constant 0 : index
    %c0_0 = arith.constant 0 : index
    %0 = vector.load %arg1[%c0, %c0_0] : memref<16x64xf32, #tpu.memory_space<vmem>>, vector<16x64xf32>
    %c0_1 = arith.constant 0 : index
    %c0_2 = arith.constant 0 : index
    %c0_3 = arith.constant 0 : index
    %1 = vector.load %arg2[%c0_1, %c0_2, %c0_3] : memref<1x64x64xf32, #tpu.memory_space<vmem>>, vector<1x64x64xf32>
    %2 = vector.shape_cast %1 : vector<1x64x64xf32> to vector<64x64xf32>
    %cst = arith.constant dense<0.000000e+00> : vector<16x64xf32>
    %3 = tpu.matmul %0, %2, %cst {dimension_numbers = #tpu.dot_dimension_numbers<[1], [0], [0], [1], [0, 0, 1, 1], [], []>} : vector<16x64xf32>, vector<64x64xf32>, vector<16x64xf32> -> vector<16x64xf32>
    %c0_4 = arith.constant 0 : index
    %c0_5 = arith.constant 0 : index
    %4 = vector.load %arg11[%c0_4, %c0_5] : memref<3x64xf32, #tpu.memory_space<vmem>>, vector<1x64xf32>
    %5 = vector.shape_cast %4 : vector<1x64xf32> to vector<64xf32>
    %6 = vector.shape_cast %5 : vector<64xf32> to vector<1x64xf32>
    %7 = vector.broadcast %6 : vector<1x64xf32> to vector<16x64xf32>
    %8 = arith.addf %3, %7 : vector<16x64xf32>
    %c0_6 = arith.constant 0 : index
    %c0_7 = arith.constant 0 : index
    %9 = vector.load %arg3[%c0_6, %c0_7] : memref<64x32xf32, #tpu.memory_space<vmem>>, vector<64x32xf32>
    %cst_8 = arith.constant dense<0.000000e+00> : vector<16x32xf32>
    %10 = tpu.matmul %8, %9, %cst_8 {dimension_numbers = #tpu.dot_dimension_numbers<[1], [0], [0], [1], [0, 0, 1, 1], [], []>} : vector<16x64xf32>, vector<64x32xf32>, vector<16x32xf32> -> vector<16x32xf32>
    %c0_9 = arith.constant 0 : index
    %c0_10 = arith.constant 0 : index
    %11 = vector.load %arg10[%c0_9, %c0_10] : memref<15x32xf32, #tpu.memory_space<vmem>>, vector<1x32xf32>
    %12 = vector.shape_cast %11 : vector<1x32xf32> to vector<32xf32>
    %13 = vector.shape_cast %12 : vector<32xf32> to vector<1x32xf32>
    %14 = vector.broadcast %13 : vector<1x32xf32> to vector<16x32xf32>
    %15 = arith.addf %10, %14 : vector<16x32xf32>
    %c0_11 = arith.constant 0 : index
    %c0_12 = arith.constant 0 : index
    %16 = vector.load %arg12[%c0_11, %c0_12] : memref<32x16xf32, #tpu.memory_space<vmem>>, vector<32x16xf32>
    %cst_13 = arith.constant dense<0.000000e+00> : vector<32x32xf32>
    %17 = tpu.matmul %16, %15, %cst_13 {dimension_numbers = #tpu.dot_dimension_numbers<[1], [0], [0], [1], [0, 0, 1, 1], [], []>} : vector<32x16xf32>, vector<16x32xf32>, vector<32x32xf32> -> vector<32x32xf32>
    %c0_14 = arith.constant 0 : index
    %c0_15 = arith.constant 0 : index
    %18 = vector.load %arg13[%c0_14, %c0_15] : memref<32x32xf32, #tpu.memory_space<vmem>>, vector<32x32xf32>
    %19 = arith.addf %17, %18 : vector<32x32xf32>
    %c3 = arith.constant 3 : index
    %c0_16 = arith.constant 0 : index
    %20 = vector.load %arg10[%c3, %c0_16] : memref<15x32xf32, #tpu.memory_space<vmem>>, vector<1x32xf32>
    %21 = vector.shape_cast %20 : vector<1x32xf32> to vector<32xf32>
    %c4 = arith.constant 4 : index
    %c0_17 = arith.constant 0 : index
    %22 = vector.load %arg10[%c4, %c0_17] : memref<15x32xf32, #tpu.memory_space<vmem>>, vector<1x32xf32>
    %23 = vector.shape_cast %22 : vector<1x32xf32> to vector<32xf32>
    %c5 = arith.constant 5 : index
    %c0_18 = arith.constant 0 : index
    %24 = vector.load %arg10[%c5, %c0_18] : memref<15x32xf32, #tpu.memory_space<vmem>>, vector<1x32xf32>
    %25 = vector.shape_cast %24 : vector<1x32xf32> to vector<32xf32>
    %c6 = arith.constant 6 : index
    %c0_19 = arith.constant 0 : index
    %26 = vector.load %arg10[%c6, %c0_19] : memref<15x32xf32, #tpu.memory_space<vmem>>, vector<1x32xf32>
    %27 = vector.shape_cast %26 : vector<1x32xf32> to vector<32xf32>
    %c7 = arith.constant 7 : index
    %c0_20 = arith.constant 0 : index
    %28 = vector.load %arg10[%c7, %c0_20] : memref<15x32xf32, #tpu.memory_space<vmem>>, vector<1x32xf32>
    %29 = vector.shape_cast %28 : vector<1x32xf32> to vector<32xf32>
    %c8 = arith.constant 8 : index
    %c0_21 = arith.constant 0 : index
    %30 = vector.load %arg10[%c8, %c0_21] : memref<15x32xf32, #tpu.memory_space<vmem>>, vector<1x32xf32>
    %31 = vector.shape_cast %30 : vector<1x32xf32> to vector<32xf32>
    %c1 = arith.constant 1 : index
    %c0_22 = arith.constant 0 : index
    %32 = vector.load %arg11[%c1, %c0_22] : memref<3x64xf32, #tpu.memory_space<vmem>>, vector<1x64xf32>
    %33 = vector.shape_cast %32 : vector<1x64xf32> to vector<64xf32>
    %cst_23 = arith.constant dense<0.000000e+00> : vector<32xf32>
    %34 = vector.multi_reduction <add>, %19, %cst_23 [1] : vector<32x32xf32> to vector<32xf32>
    %35 = vector.shape_cast %34 : vector<32xf32> to vector<32x1xf32>
    %cst_24 = arith.constant 3.200000e+01 : f32
    %36 = vector.broadcast %cst_24 : f32 to vector<32x1xf32>
    %37 = arith.divf %35, %36 : vector<32x1xf32>
    %38 = vector.broadcast %37 : vector<32x1xf32> to vector<32x32xf32>
    %39 = arith.subf %19, %38 : vector<32x32xf32>
    %40 = arith.mulf %39, %39 : vector<32x32xf32>
    %cst_25 = arith.constant dense<0.000000e+00> : vector<32xf32>
    %41 = vector.multi_reduction <add>, %40, %cst_25 [1] : vector<32x32xf32> to vector<32xf32>
    %42 = vector.shape_cast %41 : vector<32xf32> to vector<32x1xf32>
    %cst_26 = arith.constant 3.200000e+01 : f32
    %43 = vector.broadcast %cst_26 : f32 to vector<32x1xf32>
    %44 = arith.divf %42, %43 : vector<32x1xf32>
    %45 = vector.broadcast %37 : vector<32x1xf32> to vector<32x32xf32>
    %46 = arith.subf %19, %45 : vector<32x32xf32>
    %cst_27 = arith.constant 9.99999974E-6 : f32
    %47 = vector.broadcast %cst_27 : f32 to vector<32x1xf32>
    %48 = arith.addf %44, %47 : vector<32x1xf32>
    %49 = math.rsqrt %48 : vector<32x1xf32>
    %50 = vector.broadcast %49 : vector<32x1xf32> to vector<32x32xf32>
    %51 = arith.mulf %46, %50 : vector<32x32xf32>
    %52 = vector.shape_cast %21 : vector<32xf32> to vector<1x32xf32>
    %53 = vector.broadcast %52 : vector<1x32xf32> to vector<32x32xf32>
    %54 = arith.mulf %51, %53 : vector<32x32xf32>
    %55 = vector.shape_cast %23 : vector<32xf32> to vector<1x32xf32>
    %56 = vector.broadcast %55 : vector<1x32xf32> to vector<32x32xf32>
    %57 = arith.addf %54, %56 : vector<32x32xf32>
    %c0_28 = arith.constant 0 : index
    %c0_29 = arith.constant 0 : index
    %c0_30 = arith.constant 0 : index
    %58 = vector.load %arg4[%c0_28, %c0_29, %c0_30] : memref<2x32x128xf32, #tpu.memory_space<vmem>>, vector<1x32x128xf32>
    %59 = vector.shape_cast %58 : vector<1x32x128xf32> to vector<32x128xf32>
    %cst_31 = arith.constant dense<0.000000e+00> : vector<32x128xf32>
    %60 = tpu.matmul %57, %59, %cst_31 {dimension_numbers = #tpu.dot_dimension_numbers<[1], [0], [0], [1], [0, 0, 1, 1], [], []>} : vector<32x32xf32>, vector<32x128xf32>, vector<32x128xf32> -> vector<32x128xf32>
    %c0_32 = arith.constant 0 : index
    %c0_33 = arith.constant 0 : index
    %c0_34 = arith.constant 0 : index
    %61 = vector.load %arg5[%c0_32, %c0_33, %c0_34] : memref<2x32x128xf32, #tpu.memory_space<vmem>>, vector<1x32x128xf32>
    %62 = vector.shape_cast %61 : vector<1x32x128xf32> to vector<32x128xf32>
    %cst_35 = arith.constant dense<0.000000e+00> : vector<32x128xf32>
    %63 = tpu.matmul %57, %62, %cst_35 {dimension_numbers = #tpu.dot_dimension_numbers<[1], [0], [0], [1], [0, 0, 1, 1], [], []>} : vector<32x32xf32>, vector<32x128xf32>, vector<32x128xf32> -> vector<32x128xf32>
    %cst_36 = arith.constant 0.000000e+00 : f32
    %64 = vector.broadcast %cst_36 : f32 to vector<32x32xf32>
    %65 = vector.extract_strided_slice %60 {offsets = [0, 0], sizes = [32, 32], strides = [1, 1]} : vector<32x128xf32> to vector<32x32xf32>
    %66 = vector.extract_strided_slice %63 {offsets = [0, 0], sizes = [32, 32], strides = [1, 1]} : vector<32x128xf32> to vector<32x32xf32>
    %cst_37 = arith.constant dense<0.000000e+00> : vector<32x32xf32>
    %67 = tpu.matmul %65, %57, %cst_37 {dimension_numbers = #tpu.dot_dimension_numbers<[1], [1], [0], [0], [0, 0, 1, 0], [], []>} : vector<32x32xf32>, vector<32x32xf32>, vector<32x32xf32> -> vector<32x32xf32>
    %c0_38 = arith.constant 0 : index
    %c0_39 = arith.constant 0 : index
    %68 = vector.load %arg14[%c0_38, %c0_39] : memref<32x32xf32, #tpu.memory_space<vmem>>, vector<32x32xf32>
    %69 = arith.addf %67, %68 : vector<32x32xf32>
    %cst_40 = arith.constant dense<0xFF800000> : vector<32xf32>
    %70 = vector.multi_reduction <maximumf>, %69, %cst_40 [1] : vector<32x32xf32> to vector<32xf32>
    %71 = vector.shape_cast %70 : vector<32xf32> to vector<32x1xf32>
    %72 = vector.broadcast %71 : vector<32x1xf32> to vector<32x32xf32>
    %73 = arith.subf %69, %72 : vector<32x32xf32>
    %74 = math.exp %73 : vector<32x32xf32>
    %cst_41 = arith.constant dense<0.000000e+00> : vector<32xf32>
    %75 = vector.multi_reduction <add>, %74, %cst_41 [1] : vector<32x32xf32> to vector<32xf32>
    %76 = vector.shape_cast %75 : vector<32xf32> to vector<32x1xf32>
    %77 = tpu.reciprocal %76 {approx = true} : vector<32x1xf32> -> vector<32x1xf32>
    %78 = vector.broadcast %77 : vector<32x1xf32> to vector<32x32xf32>
    %79 = arith.mulf %74, %78 : vector<32x32xf32>
    %cst_42 = arith.constant dense<0.000000e+00> : vector<32x32xf32>
    %80 = tpu.matmul %79, %66, %cst_42 {dimension_numbers = #tpu.dot_dimension_numbers<[1], [0], [0], [1], [0, 0, 1, 1], [], []>} : vector<32x32xf32>, vector<32x32xf32>, vector<32x32xf32> -> vector<32x32xf32>
    %81 = arith.addf %64, %80 : vector<32x32xf32>
    %82 = vector.extract_strided_slice %60 {offsets = [0, 32], sizes = [32, 32], strides = [1, 1]} : vector<32x128xf32> to vector<32x32xf32>
    %83 = vector.extract_strided_slice %63 {offsets = [0, 32], sizes = [32, 32], strides = [1, 1]} : vector<32x128xf32> to vector<32x32xf32>
    %cst_43 = arith.constant dense<0.000000e+00> : vector<32x32xf32>
    %84 = tpu.matmul %82, %57, %cst_43 {dimension_numbers = #tpu.dot_dimension_numbers<[1], [1], [0], [0], [0, 0, 1, 0], [], []>} : vector<32x32xf32>, vector<32x32xf32>, vector<32x32xf32> -> vector<32x32xf32>
    %c0_44 = arith.constant 0 : index
    %c0_45 = arith.constant 0 : index
    %85 = vector.load %arg14[%c0_44, %c0_45] : memref<32x32xf32, #tpu.memory_space<vmem>>, vector<32x32xf32>
    %86 = arith.addf %84, %85 : vector<32x32xf32>
    %cst_46 = arith.constant dense<0xFF800000> : vector<32xf32>
    %87 = vector.multi_reduction <maximumf>, %86, %cst_46 [1] : vector<32x32xf32> to vector<32xf32>
    %88 = vector.shape_cast %87 : vector<32xf32> to vector<32x1xf32>
    %89 = vector.broadcast %88 : vector<32x1xf32> to vector<32x32xf32>
    %90 = arith.subf %86, %89 : vector<32x32xf32>
    %91 = math.exp %90 : vector<32x32xf32>
    %cst_47 = arith.constant dense<0.000000e+00> : vector<32xf32>
    %92 = vector.multi_reduction <add>, %91, %cst_47 [1] : vector<32x32xf32> to vector<32xf32>
    %93 = vector.shape_cast %92 : vector<32xf32> to vector<32x1xf32>
    %94 = tpu.reciprocal %93 {approx = true} : vector<32x1xf32> -> vector<32x1xf32>
    %95 = vector.broadcast %94 : vector<32x1xf32> to vector<32x32xf32>
    %96 = arith.mulf %91, %95 : vector<32x32xf32>
    %cst_48 = arith.constant dense<0.000000e+00> : vector<32x32xf32>
    %97 = tpu.matmul %96, %83, %cst_48 {dimension_numbers = #tpu.dot_dimension_numbers<[1], [0], [0], [1], [0, 0, 1, 1], [], []>} : vector<32x32xf32>, vector<32x32xf32>, vector<32x32xf32> -> vector<32x32xf32>
    %98 = arith.addf %81, %97 : vector<32x32xf32>
    %99 = vector.extract_strided_slice %60 {offsets = [0, 64], sizes = [32, 32], strides = [1, 1]} : vector<32x128xf32> to vector<32x32xf32>
    %100 = vector.extract_strided_slice %63 {offsets = [0, 64], sizes = [32, 32], strides = [1, 1]} : vector<32x128xf32> to vector<32x32xf32>
    %cst_49 = arith.constant dense<0.000000e+00> : vector<32x32xf32>
    %101 = tpu.matmul %99, %57, %cst_49 {dimension_numbers = #tpu.dot_dimension_numbers<[1], [1], [0], [0], [0, 0, 1, 0], [], []>} : vector<32x32xf32>, vector<32x32xf32>, vector<32x32xf32> -> vector<32x32xf32>
    %c0_50 = arith.constant 0 : index
    %c0_51 = arith.constant 0 : index
    %102 = vector.load %arg14[%c0_50, %c0_51] : memref<32x32xf32, #tpu.memory_space<vmem>>, vector<32x32xf32>
    %103 = arith.addf %101, %102 : vector<32x32xf32>
    %cst_52 = arith.constant dense<0xFF800000> : vector<32xf32>
    %104 = vector.multi_reduction <maximumf>, %103, %cst_52 [1] : vector<32x32xf32> to vector<32xf32>
    %105 = vector.shape_cast %104 : vector<32xf32> to vector<32x1xf32>
    %106 = vector.broadcast %105 : vector<32x1xf32> to vector<32x32xf32>
    %107 = arith.subf %103, %106 : vector<32x32xf32>
    %108 = math.exp %107 : vector<32x32xf32>
    %cst_53 = arith.constant dense<0.000000e+00> : vector<32xf32>
    %109 = vector.multi_reduction <add>, %108, %cst_53 [1] : vector<32x32xf32> to vector<32xf32>
    %110 = vector.shape_cast %109 : vector<32xf32> to vector<32x1xf32>
    %111 = tpu.reciprocal %110 {approx = true} : vector<32x1xf32> -> vector<32x1xf32>
    %112 = vector.broadcast %111 : vector<32x1xf32> to vector<32x32xf32>
    %113 = arith.mulf %108, %112 : vector<32x32xf32>
    %cst_54 = arith.constant dense<0.000000e+00> : vector<32x32xf32>
    %114 = tpu.matmul %113, %100, %cst_54 {dimension_numbers = #tpu.dot_dimension_numbers<[1], [0], [0], [1], [0, 0, 1, 1], [], []>} : vector<32x32xf32>, vector<32x32xf32>, vector<32x32xf32> -> vector<32x32xf32>
    %115 = arith.addf %98, %114 : vector<32x32xf32>
    %116 = vector.extract_strided_slice %60 {offsets = [0, 96], sizes = [32, 32], strides = [1, 1]} : vector<32x128xf32> to vector<32x32xf32>
    %117 = vector.extract_strided_slice %63 {offsets = [0, 96], sizes = [32, 32], strides = [1, 1]} : vector<32x128xf32> to vector<32x32xf32>
    %cst_55 = arith.constant dense<0.000000e+00> : vector<32x32xf32>
    %118 = tpu.matmul %116, %57, %cst_55 {dimension_numbers = #tpu.dot_dimension_numbers<[1], [1], [0], [0], [0, 0, 1, 0], [], []>} : vector<32x32xf32>, vector<32x32xf32>, vector<32x32xf32> -> vector<32x32xf32>
    %c0_56 = arith.constant 0 : index
    %c0_57 = arith.constant 0 : index
    %119 = vector.load %arg14[%c0_56, %c0_57] : memref<32x32xf32, #tpu.memory_space<vmem>>, vector<32x32xf32>
    %120 = arith.addf %118, %119 : vector<32x32xf32>
    %cst_58 = arith.constant dense<0xFF800000> : vector<32xf32>
    %121 = vector.multi_reduction <maximumf>, %120, %cst_58 [1] : vector<32x32xf32> to vector<32xf32>
    %122 = vector.shape_cast %121 : vector<32xf32> to vector<32x1xf32>
    %123 = vector.broadcast %122 : vector<32x1xf32> to vector<32x32xf32>
    %124 = arith.subf %120, %123 : vector<32x32xf32>
    %125 = math.exp %124 : vector<32x32xf32>
    %cst_59 = arith.constant dense<0.000000e+00> : vector<32xf32>
    %126 = vector.multi_reduction <add>, %125, %cst_59 [1] : vector<32x32xf32> to vector<32xf32>
    %127 = vector.shape_cast %126 : vector<32xf32> to vector<32x1xf32>
    %128 = tpu.reciprocal %127 {approx = true} : vector<32x1xf32> -> vector<32x1xf32>
    %129 = vector.broadcast %128 : vector<32x1xf32> to vector<32x32xf32>
    %130 = arith.mulf %125, %129 : vector<32x32xf32>
    %cst_60 = arith.constant dense<0.000000e+00> : vector<32x32xf32>
    %131 = tpu.matmul %130, %117, %cst_60 {dimension_numbers = #tpu.dot_dimension_numbers<[1], [0], [0], [1], [0, 0, 1, 1], [], []>} : vector<32x32xf32>, vector<32x32xf32>, vector<32x32xf32> -> vector<32x32xf32>
    %132 = arith.addf %115, %131 : vector<32x32xf32>
    %133 = arith.addf %19, %132 : vector<32x32xf32>
    %134 = vector.shape_cast %25 : vector<32xf32> to vector<1x32xf32>
    %135 = vector.broadcast %134 : vector<1x32xf32> to vector<32x32xf32>
    %136 = arith.addf %133, %135 : vector<32x32xf32>
    %cst_61 = arith.constant dense<0.000000e+00> : vector<32xf32>
    %137 = vector.multi_reduction <add>, %136, %cst_61 [1] : vector<32x32xf32> to vector<32xf32>
    %138 = vector.shape_cast %137 : vector<32xf32> to vector<32x1xf32>
    %cst_62 = arith.constant 3.200000e+01 : f32
    %139 = vector.broadcast %cst_62 : f32 to vector<32x1xf32>
    %140 = arith.divf %138, %139 : vector<32x1xf32>
    %141 = vector.broadcast %140 : vector<32x1xf32> to vector<32x32xf32>
    %142 = arith.subf %136, %141 : vector<32x32xf32>
    %143 = arith.mulf %142, %142 : vector<32x32xf32>
    %cst_63 = arith.constant dense<0.000000e+00> : vector<32xf32>
    %144 = vector.multi_reduction <add>, %143, %cst_63 [1] : vector<32x32xf32> to vector<32xf32>
    %145 = vector.shape_cast %144 : vector<32xf32> to vector<32x1xf32>
    %cst_64 = arith.constant 3.200000e+01 : f32
    %146 = vector.broadcast %cst_64 : f32 to vector<32x1xf32>
    %147 = arith.divf %145, %146 : vector<32x1xf32>
    %148 = vector.broadcast %140 : vector<32x1xf32> to vector<32x32xf32>
    %149 = arith.subf %136, %148 : vector<32x32xf32>
    %cst_65 = arith.constant 9.99999974E-6 : f32
    %150 = vector.broadcast %cst_65 : f32 to vector<32x1xf32>
    %151 = arith.addf %147, %150 : vector<32x1xf32>
    %152 = math.rsqrt %151 : vector<32x1xf32>
    %153 = vector.broadcast %152 : vector<32x1xf32> to vector<32x32xf32>
    %154 = arith.mulf %149, %153 : vector<32x32xf32>
    %155 = vector.shape_cast %27 : vector<32xf32> to vector<1x32xf32>
    %156 = vector.broadcast %155 : vector<1x32xf32> to vector<32x32xf32>
    %157 = arith.mulf %154, %156 : vector<32x32xf32>
    %158 = vector.shape_cast %29 : vector<32xf32> to vector<1x32xf32>
    %159 = vector.broadcast %158 : vector<1x32xf32> to vector<32x32xf32>
    %160 = arith.addf %157, %159 : vector<32x32xf32>
    %c0_66 = arith.constant 0 : index
    %c0_67 = arith.constant 0 : index
    %c0_68 = arith.constant 0 : index
    %161 = vector.load %arg6[%c0_66, %c0_67, %c0_68] : memref<2x32x64xf32, #tpu.memory_space<vmem>>, vector<1x32x64xf32>
    %162 = vector.shape_cast %161 : vector<1x32x64xf32> to vector<32x64xf32>
    %cst_69 = arith.constant dense<0.000000e+00> : vector<32x64xf32>
    %163 = tpu.matmul %160, %162, %cst_69 {dimension_numbers = #tpu.dot_dimension_numbers<[1], [0], [0], [1], [0, 0, 1, 1], [], []>} : vector<32x32xf32>, vector<32x64xf32>, vector<32x64xf32> -> vector<32x64xf32>
    %164 = vector.shape_cast %33 : vector<64xf32> to vector<1x64xf32>
    %165 = vector.broadcast %164 : vector<1x64xf32> to vector<32x64xf32>
    %166 = arith.addf %163, %165 : vector<32x64xf32>
    %cst_70 = arith.constant 5.000000e-01 : f32
    %167 = vector.broadcast %cst_70 : f32 to vector<32x64xf32>
    %168 = arith.mulf %167, %166 : vector<32x64xf32>
    %cst_71 = arith.constant 0.707106769 : f32
    %169 = vector.broadcast %cst_71 : f32 to vector<32x64xf32>
    %170 = arith.mulf %166, %169 : vector<32x64xf32>
    %171 = math.erf %170 : vector<32x64xf32>
    %cst_72 = arith.constant 1.000000e+00 : f32
    %172 = vector.broadcast %cst_72 : f32 to vector<32x64xf32>
    %173 = arith.addf %172, %171 : vector<32x64xf32>
    %174 = arith.mulf %168, %173 : vector<32x64xf32>
    %c0_73 = arith.constant 0 : index
    %c0_74 = arith.constant 0 : index
    %c0_75 = arith.constant 0 : index
    %175 = vector.load %arg7[%c0_73, %c0_74, %c0_75] : memref<2x64x32xf32, #tpu.memory_space<vmem>>, vector<1x64x32xf32>
    %176 = vector.shape_cast %175 : vector<1x64x32xf32> to vector<64x32xf32>
    %cst_76 = arith.constant dense<0.000000e+00> : vector<32x32xf32>
    %177 = tpu.matmul %174, %176, %cst_76 {dimension_numbers = #tpu.dot_dimension_numbers<[1], [0], [0], [1], [0, 0, 1, 1], [], []>} : vector<32x64xf32>, vector<64x32xf32>, vector<32x32xf32> -> vector<32x32xf32>
    %178 = arith.addf %136, %177 : vector<32x32xf32>
    %179 = vector.shape_cast %31 : vector<32xf32> to vector<1x32xf32>
    %180 = vector.broadcast %179 : vector<1x32xf32> to vector<32x32xf32>
    %181 = arith.addf %178, %180 : vector<32x32xf32>
    %c9 = arith.constant 9 : index
    %c0_77 = arith.constant 0 : index
    %182 = vector.load %arg10[%c9, %c0_77] : memref<15x32xf32, #tpu.memory_space<vmem>>, vector<1x32xf32>
    %183 = vector.shape_cast %182 : vector<1x32xf32> to vector<32xf32>
    %c10 = arith.constant 10 : index
    %c0_78 = arith.constant 0 : index
    %184 = vector.load %arg10[%c10, %c0_78] : memref<15x32xf32, #tpu.memory_space<vmem>>, vector<1x32xf32>
    %185 = vector.shape_cast %184 : vector<1x32xf32> to vector<32xf32>
    %c11 = arith.constant 11 : index
    %c0_79 = arith.constant 0 : index
    %186 = vector.load %arg10[%c11, %c0_79] : memref<15x32xf32, #tpu.memory_space<vmem>>, vector<1x32xf32>
    %187 = vector.shape_cast %186 : vector<1x32xf32> to vector<32xf32>
    %c12 = arith.constant 12 : index
    %c0_80 = arith.constant 0 : index
    %188 = vector.load %arg10[%c12, %c0_80] : memref<15x32xf32, #tpu.memory_space<vmem>>, vector<1x32xf32>
    %189 = vector.shape_cast %188 : vector<1x32xf32> to vector<32xf32>
    %c13 = arith.constant 13 : index
    %c0_81 = arith.constant 0 : index
    %190 = vector.load %arg10[%c13, %c0_81] : memref<15x32xf32, #tpu.memory_space<vmem>>, vector<1x32xf32>
    %191 = vector.shape_cast %190 : vector<1x32xf32> to vector<32xf32>
    %c14 = arith.constant 14 : index
    %c0_82 = arith.constant 0 : index
    %192 = vector.load %arg10[%c14, %c0_82] : memref<15x32xf32, #tpu.memory_space<vmem>>, vector<1x32xf32>
    %193 = vector.shape_cast %192 : vector<1x32xf32> to vector<32xf32>
    %c2 = arith.constant 2 : index
    %c0_83 = arith.constant 0 : index
    %194 = vector.load %arg11[%c2, %c0_83] : memref<3x64xf32, #tpu.memory_space<vmem>>, vector<1x64xf32>
    %195 = vector.shape_cast %194 : vector<1x64xf32> to vector<64xf32>
    %cst_84 = arith.constant dense<0.000000e+00> : vector<32xf32>
    %196 = vector.multi_reduction <add>, %181, %cst_84 [1] : vector<32x32xf32> to vector<32xf32>
    %197 = vector.shape_cast %196 : vector<32xf32> to vector<32x1xf32>
    %cst_85 = arith.constant 3.200000e+01 : f32
    %198 = vector.broadcast %cst_85 : f32 to vector<32x1xf32>
    %199 = arith.divf %197, %198 : vector<32x1xf32>
    %200 = vector.broadcast %199 : vector<32x1xf32> to vector<32x32xf32>
    %201 = arith.subf %181, %200 : vector<32x32xf32>
    %202 = arith.mulf %201, %201 : vector<32x32xf32>
    %cst_86 = arith.constant dense<0.000000e+00> : vector<32xf32>
    %203 = vector.multi_reduction <add>, %202, %cst_86 [1] : vector<32x32xf32> to vector<32xf32>
    %204 = vector.shape_cast %203 : vector<32xf32> to vector<32x1xf32>
    %cst_87 = arith.constant 3.200000e+01 : f32
    %205 = vector.broadcast %cst_87 : f32 to vector<32x1xf32>
    %206 = arith.divf %204, %205 : vector<32x1xf32>
    %207 = vector.broadcast %199 : vector<32x1xf32> to vector<32x32xf32>
    %208 = arith.subf %181, %207 : vector<32x32xf32>
    %cst_88 = arith.constant 9.99999974E-6 : f32
    %209 = vector.broadcast %cst_88 : f32 to vector<32x1xf32>
    %210 = arith.addf %206, %209 : vector<32x1xf32>
    %211 = math.rsqrt %210 : vector<32x1xf32>
    %212 = vector.broadcast %211 : vector<32x1xf32> to vector<32x32xf32>
    %213 = arith.mulf %208, %212 : vector<32x32xf32>
    %214 = vector.shape_cast %183 : vector<32xf32> to vector<1x32xf32>
    %215 = vector.broadcast %214 : vector<1x32xf32> to vector<32x32xf32>
    %216 = arith.mulf %213, %215 : vector<32x32xf32>
    %217 = vector.shape_cast %185 : vector<32xf32> to vector<1x32xf32>
    %218 = vector.broadcast %217 : vector<1x32xf32> to vector<32x32xf32>
    %219 = arith.addf %216, %218 : vector<32x32xf32>
    %c1_89 = arith.constant 1 : index
    %c0_90 = arith.constant 0 : index
    %c0_91 = arith.constant 0 : index
    %220 = vector.load %arg4[%c1_89, %c0_90, %c0_91] : memref<2x32x128xf32, #tpu.memory_space<vmem>>, vector<1x32x128xf32>
    %221 = vector.shape_cast %220 : vector<1x32x128xf32> to vector<32x128xf32>
    %cst_92 = arith.constant dense<0.000000e+00> : vector<32x128xf32>
    %222 = tpu.matmul %219, %221, %cst_92 {dimension_numbers = #tpu.dot_dimension_numbers<[1], [0], [0], [1], [0, 0, 1, 1], [], []>} : vector<32x32xf32>, vector<32x128xf32>, vector<32x128xf32> -> vector<32x128xf32>
    %c1_93 = arith.constant 1 : index
    %c0_94 = arith.constant 0 : index
    %c0_95 = arith.constant 0 : index
    %223 = vector.load %arg5[%c1_93, %c0_94, %c0_95] : memref<2x32x128xf32, #tpu.memory_space<vmem>>, vector<1x32x128xf32>
    %224 = vector.shape_cast %223 : vector<1x32x128xf32> to vector<32x128xf32>
    %cst_96 = arith.constant dense<0.000000e+00> : vector<32x128xf32>
    %225 = tpu.matmul %219, %224, %cst_96 {dimension_numbers = #tpu.dot_dimension_numbers<[1], [0], [0], [1], [0, 0, 1, 1], [], []>} : vector<32x32xf32>, vector<32x128xf32>, vector<32x128xf32> -> vector<32x128xf32>
    %cst_97 = arith.constant 0.000000e+00 : f32
    %226 = vector.broadcast %cst_97 : f32 to vector<32x32xf32>
    %227 = vector.extract_strided_slice %222 {offsets = [0, 0], sizes = [32, 32], strides = [1, 1]} : vector<32x128xf32> to vector<32x32xf32>
    %228 = vector.extract_strided_slice %225 {offsets = [0, 0], sizes = [32, 32], strides = [1, 1]} : vector<32x128xf32> to vector<32x32xf32>
    %cst_98 = arith.constant dense<0.000000e+00> : vector<32x32xf32>
    %229 = tpu.matmul %227, %219, %cst_98 {dimension_numbers = #tpu.dot_dimension_numbers<[1], [1], [0], [0], [0, 0, 1, 0], [], []>} : vector<32x32xf32>, vector<32x32xf32>, vector<32x32xf32> -> vector<32x32xf32>
    %c0_99 = arith.constant 0 : index
    %c0_100 = arith.constant 0 : index
    %230 = vector.load %arg14[%c0_99, %c0_100] : memref<32x32xf32, #tpu.memory_space<vmem>>, vector<32x32xf32>
    %231 = arith.addf %229, %230 : vector<32x32xf32>
    %cst_101 = arith.constant dense<0xFF800000> : vector<32xf32>
    %232 = vector.multi_reduction <maximumf>, %231, %cst_101 [1] : vector<32x32xf32> to vector<32xf32>
    %233 = vector.shape_cast %232 : vector<32xf32> to vector<32x1xf32>
    %234 = vector.broadcast %233 : vector<32x1xf32> to vector<32x32xf32>
    %235 = arith.subf %231, %234 : vector<32x32xf32>
    %236 = math.exp %235 : vector<32x32xf32>
    %cst_102 = arith.constant dense<0.000000e+00> : vector<32xf32>
    %237 = vector.multi_reduction <add>, %236, %cst_102 [1] : vector<32x32xf32> to vector<32xf32>
    %238 = vector.shape_cast %237 : vector<32xf32> to vector<32x1xf32>
    %239 = tpu.reciprocal %238 {approx = true} : vector<32x1xf32> -> vector<32x1xf32>
    %240 = vector.broadcast %239 : vector<32x1xf32> to vector<32x32xf32>
    %241 = arith.mulf %236, %240 : vector<32x32xf32>
    %cst_103 = arith.constant dense<0.000000e+00> : vector<32x32xf32>
    %242 = tpu.matmul %241, %228, %cst_103 {dimension_numbers = #tpu.dot_dimension_numbers<[1], [0], [0], [1], [0, 0, 1, 1], [], []>} : vector<32x32xf32>, vector<32x32xf32>, vector<32x32xf32> -> vector<32x32xf32>
    %243 = arith.addf %226, %242 : vector<32x32xf32>
    %244 = vector.extract_strided_slice %222 {offsets = [0, 32], sizes = [32, 32], strides = [1, 1]} : vector<32x128xf32> to vector<32x32xf32>
    %245 = vector.extract_strided_slice %225 {offsets = [0, 32], sizes = [32, 32], strides = [1, 1]} : vector<32x128xf32> to vector<32x32xf32>
    %cst_104 = arith.constant dense<0.000000e+00> : vector<32x32xf32>
    %246 = tpu.matmul %244, %219, %cst_104 {dimension_numbers = #tpu.dot_dimension_numbers<[1], [1], [0], [0], [0, 0, 1, 0], [], []>} : vector<32x32xf32>, vector<32x32xf32>, vector<32x32xf32> -> vector<32x32xf32>
    %c0_105 = arith.constant 0 : index
    %c0_106 = arith.constant 0 : index
    %247 = vector.load %arg14[%c0_105, %c0_106] : memref<32x32xf32, #tpu.memory_space<vmem>>, vector<32x32xf32>
    %248 = arith.addf %246, %247 : vector<32x32xf32>
    %cst_107 = arith.constant dense<0xFF800000> : vector<32xf32>
    %249 = vector.multi_reduction <maximumf>, %248, %cst_107 [1] : vector<32x32xf32> to vector<32xf32>
    %250 = vector.shape_cast %249 : vector<32xf32> to vector<32x1xf32>
    %251 = vector.broadcast %250 : vector<32x1xf32> to vector<32x32xf32>
    %252 = arith.subf %248, %251 : vector<32x32xf32>
    %253 = math.exp %252 : vector<32x32xf32>
    %cst_108 = arith.constant dense<0.000000e+00> : vector<32xf32>
    %254 = vector.multi_reduction <add>, %253, %cst_108 [1] : vector<32x32xf32> to vector<32xf32>
    %255 = vector.shape_cast %254 : vector<32xf32> to vector<32x1xf32>
    %256 = tpu.reciprocal %255 {approx = true} : vector<32x1xf32> -> vector<32x1xf32>
    %257 = vector.broadcast %256 : vector<32x1xf32> to vector<32x32xf32>
    %258 = arith.mulf %253, %257 : vector<32x32xf32>
    %cst_109 = arith.constant dense<0.000000e+00> : vector<32x32xf32>
    %259 = tpu.matmul %258, %245, %cst_109 {dimension_numbers = #tpu.dot_dimension_numbers<[1], [0], [0], [1], [0, 0, 1, 1], [], []>} : vector<32x32xf32>, vector<32x32xf32>, vector<32x32xf32> -> vector<32x32xf32>
    %260 = arith.addf %243, %259 : vector<32x32xf32>
    %261 = vector.extract_strided_slice %222 {offsets = [0, 64], sizes = [32, 32], strides = [1, 1]} : vector<32x128xf32> to vector<32x32xf32>
    %262 = vector.extract_strided_slice %225 {offsets = [0, 64], sizes = [32, 32], strides = [1, 1]} : vector<32x128xf32> to vector<32x32xf32>
    %cst_110 = arith.constant dense<0.000000e+00> : vector<32x32xf32>
    %263 = tpu.matmul %261, %219, %cst_110 {dimension_numbers = #tpu.dot_dimension_numbers<[1], [1], [0], [0], [0, 0, 1, 0], [], []>} : vector<32x32xf32>, vector<32x32xf32>, vector<32x32xf32> -> vector<32x32xf32>
    %c0_111 = arith.constant 0 : index
    %c0_112 = arith.constant 0 : index
    %264 = vector.load %arg14[%c0_111, %c0_112] : memref<32x32xf32, #tpu.memory_space<vmem>>, vector<32x32xf32>
    %265 = arith.addf %263, %264 : vector<32x32xf32>
    %cst_113 = arith.constant dense<0xFF800000> : vector<32xf32>
    %266 = vector.multi_reduction <maximumf>, %265, %cst_113 [1] : vector<32x32xf32> to vector<32xf32>
    %267 = vector.shape_cast %266 : vector<32xf32> to vector<32x1xf32>
    %268 = vector.broadcast %267 : vector<32x1xf32> to vector<32x32xf32>
    %269 = arith.subf %265, %268 : vector<32x32xf32>
    %270 = math.exp %269 : vector<32x32xf32>
    %cst_114 = arith.constant dense<0.000000e+00> : vector<32xf32>
    %271 = vector.multi_reduction <add>, %270, %cst_114 [1] : vector<32x32xf32> to vector<32xf32>
    %272 = vector.shape_cast %271 : vector<32xf32> to vector<32x1xf32>
    %273 = tpu.reciprocal %272 {approx = true} : vector<32x1xf32> -> vector<32x1xf32>
    %274 = vector.broadcast %273 : vector<32x1xf32> to vector<32x32xf32>
    %275 = arith.mulf %270, %274 : vector<32x32xf32>
    %cst_115 = arith.constant dense<0.000000e+00> : vector<32x32xf32>
    %276 = tpu.matmul %275, %262, %cst_115 {dimension_numbers = #tpu.dot_dimension_numbers<[1], [0], [0], [1], [0, 0, 1, 1], [], []>} : vector<32x32xf32>, vector<32x32xf32>, vector<32x32xf32> -> vector<32x32xf32>
    %277 = arith.addf %260, %276 : vector<32x32xf32>
    %278 = vector.extract_strided_slice %222 {offsets = [0, 96], sizes = [32, 32], strides = [1, 1]} : vector<32x128xf32> to vector<32x32xf32>
    %279 = vector.extract_strided_slice %225 {offsets = [0, 96], sizes = [32, 32], strides = [1, 1]} : vector<32x128xf32> to vector<32x32xf32>
    %cst_116 = arith.constant dense<0.000000e+00> : vector<32x32xf32>
    %280 = tpu.matmul %278, %219, %cst_116 {dimension_numbers = #tpu.dot_dimension_numbers<[1], [1], [0], [0], [0, 0, 1, 0], [], []>} : vector<32x32xf32>, vector<32x32xf32>, vector<32x32xf32> -> vector<32x32xf32>
    %c0_117 = arith.constant 0 : index
    %c0_118 = arith.constant 0 : index
    %281 = vector.load %arg14[%c0_117, %c0_118] : memref<32x32xf32, #tpu.memory_space<vmem>>, vector<32x32xf32>
    %282 = arith.addf %280, %281 : vector<32x32xf32>
    %cst_119 = arith.constant dense<0xFF800000> : vector<32xf32>
    %283 = vector.multi_reduction <maximumf>, %282, %cst_119 [1] : vector<32x32xf32> to vector<32xf32>
    %284 = vector.shape_cast %283 : vector<32xf32> to vector<32x1xf32>
    %285 = vector.broadcast %284 : vector<32x1xf32> to vector<32x32xf32>
    %286 = arith.subf %282, %285 : vector<32x32xf32>
    %287 = math.exp %286 : vector<32x32xf32>
    %cst_120 = arith.constant dense<0.000000e+00> : vector<32xf32>
    %288 = vector.multi_reduction <add>, %287, %cst_120 [1] : vector<32x32xf32> to vector<32xf32>
    %289 = vector.shape_cast %288 : vector<32xf32> to vector<32x1xf32>
    %290 = tpu.reciprocal %289 {approx = true} : vector<32x1xf32> -> vector<32x1xf32>
    %291 = vector.broadcast %290 : vector<32x1xf32> to vector<32x32xf32>
    %292 = arith.mulf %287, %291 : vector<32x32xf32>
    %cst_121 = arith.constant dense<0.000000e+00> : vector<32x32xf32>
    %293 = tpu.matmul %292, %279, %cst_121 {dimension_numbers = #tpu.dot_dimension_numbers<[1], [0], [0], [1], [0, 0, 1, 1], [], []>} : vector<32x32xf32>, vector<32x32xf32>, vector<32x32xf32> -> vector<32x32xf32>
    %294 = arith.addf %277, %293 : vector<32x32xf32>
    %295 = arith.addf %181, %294 : vector<32x32xf32>
    %296 = vector.shape_cast %187 : vector<32xf32> to vector<1x32xf32>
    %297 = vector.broadcast %296 : vector<1x32xf32> to vector<32x32xf32>
    %298 = arith.addf %295, %297 : vector<32x32xf32>
    %cst_122 = arith.constant dense<0.000000e+00> : vector<32xf32>
    %299 = vector.multi_reduction <add>, %298, %cst_122 [1] : vector<32x32xf32> to vector<32xf32>
    %300 = vector.shape_cast %299 : vector<32xf32> to vector<32x1xf32>
    %cst_123 = arith.constant 3.200000e+01 : f32
    %301 = vector.broadcast %cst_123 : f32 to vector<32x1xf32>
    %302 = arith.divf %300, %301 : vector<32x1xf32>
    %303 = vector.broadcast %302 : vector<32x1xf32> to vector<32x32xf32>
    %304 = arith.subf %298, %303 : vector<32x32xf32>
    %305 = arith.mulf %304, %304 : vector<32x32xf32>
    %cst_124 = arith.constant dense<0.000000e+00> : vector<32xf32>
    %306 = vector.multi_reduction <add>, %305, %cst_124 [1] : vector<32x32xf32> to vector<32xf32>
    %307 = vector.shape_cast %306 : vector<32xf32> to vector<32x1xf32>
    %cst_125 = arith.constant 3.200000e+01 : f32
    %308 = vector.broadcast %cst_125 : f32 to vector<32x1xf32>
    %309 = arith.divf %307, %308 : vector<32x1xf32>
    %310 = vector.broadcast %302 : vector<32x1xf32> to vector<32x32xf32>
    %311 = arith.subf %298, %310 : vector<32x32xf32>
    %cst_126 = arith.constant 9.99999974E-6 : f32
    %312 = vector.broadcast %cst_126 : f32 to vector<32x1xf32>
    %313 = arith.addf %309, %312 : vector<32x1xf32>
    %314 = math.rsqrt %313 : vector<32x1xf32>
    %315 = vector.broadcast %314 : vector<32x1xf32> to vector<32x32xf32>
    %316 = arith.mulf %311, %315 : vector<32x32xf32>
    %317 = vector.shape_cast %189 : vector<32xf32> to vector<1x32xf32>
    %318 = vector.broadcast %317 : vector<1x32xf32> to vector<32x32xf32>
    %319 = arith.mulf %316, %318 : vector<32x32xf32>
    %320 = vector.shape_cast %191 : vector<32xf32> to vector<1x32xf32>
    %321 = vector.broadcast %320 : vector<1x32xf32> to vector<32x32xf32>
    %322 = arith.addf %319, %321 : vector<32x32xf32>
    %c1_127 = arith.constant 1 : index
    %c0_128 = arith.constant 0 : index
    %c0_129 = arith.constant 0 : index
    %323 = vector.load %arg6[%c1_127, %c0_128, %c0_129] : memref<2x32x64xf32, #tpu.memory_space<vmem>>, vector<1x32x64xf32>
    %324 = vector.shape_cast %323 : vector<1x32x64xf32> to vector<32x64xf32>
    %cst_130 = arith.constant dense<0.000000e+00> : vector<32x64xf32>
    %325 = tpu.matmul %322, %324, %cst_130 {dimension_numbers = #tpu.dot_dimension_numbers<[1], [0], [0], [1], [0, 0, 1, 1], [], []>} : vector<32x32xf32>, vector<32x64xf32>, vector<32x64xf32> -> vector<32x64xf32>
    %326 = vector.shape_cast %195 : vector<64xf32> to vector<1x64xf32>
    %327 = vector.broadcast %326 : vector<1x64xf32> to vector<32x64xf32>
    %328 = arith.addf %325, %327 : vector<32x64xf32>
    %cst_131 = arith.constant 5.000000e-01 : f32
    %329 = vector.broadcast %cst_131 : f32 to vector<32x64xf32>
    %330 = arith.mulf %329, %328 : vector<32x64xf32>
    %cst_132 = arith.constant 0.707106769 : f32
    %331 = vector.broadcast %cst_132 : f32 to vector<32x64xf32>
    %332 = arith.mulf %328, %331 : vector<32x64xf32>
    %333 = math.erf %332 : vector<32x64xf32>
    %cst_133 = arith.constant 1.000000e+00 : f32
    %334 = vector.broadcast %cst_133 : f32 to vector<32x64xf32>
    %335 = arith.addf %334, %333 : vector<32x64xf32>
    %336 = arith.mulf %330, %335 : vector<32x64xf32>
    %c1_134 = arith.constant 1 : index
    %c0_135 = arith.constant 0 : index
    %c0_136 = arith.constant 0 : index
    %337 = vector.load %arg7[%c1_134, %c0_135, %c0_136] : memref<2x64x32xf32, #tpu.memory_space<vmem>>, vector<1x64x32xf32>
    %338 = vector.shape_cast %337 : vector<1x64x32xf32> to vector<64x32xf32>
    %cst_137 = arith.constant dense<0.000000e+00> : vector<32x32xf32>
    %339 = tpu.matmul %336, %338, %cst_137 {dimension_numbers = #tpu.dot_dimension_numbers<[1], [0], [0], [1], [0, 0, 1, 1], [], []>} : vector<32x64xf32>, vector<64x32xf32>, vector<32x32xf32> -> vector<32x32xf32>
    %340 = arith.addf %298, %339 : vector<32x32xf32>
    %341 = vector.shape_cast %193 : vector<32xf32> to vector<1x32xf32>
    %342 = vector.broadcast %341 : vector<1x32xf32> to vector<32x32xf32>
    %343 = arith.addf %340, %342 : vector<32x32xf32>
    %c0_138 = arith.constant 0 : index
    %c0_139 = arith.constant 0 : index
    %344 = vector.load %arg15[%c0_138, %c0_139] : memref<2x32xf32, #tpu.memory_space<vmem>>, vector<2x32xf32>
    %cst_140 = arith.constant dense<0.000000e+00> : vector<2x32xf32>
    %345 = tpu.matmul %344, %343, %cst_140 {dimension_numbers = #tpu.dot_dimension_numbers<[1], [0], [0], [1], [0, 0, 1, 1], [], []>} : vector<2x32xf32>, vector<32x32xf32>, vector<2x32xf32> -> vector<2x32xf32>
    %c1_141 = arith.constant 1 : index
    %c0_142 = arith.constant 0 : index
    %346 = vector.load %arg10[%c1_141, %c0_142] : memref<15x32xf32, #tpu.memory_space<vmem>>, vector<1x32xf32>
    %347 = vector.shape_cast %346 : vector<1x32xf32> to vector<32xf32>
    %c2_143 = arith.constant 2 : index
    %c0_144 = arith.constant 0 : index
    %348 = vector.load %arg10[%c2_143, %c0_144] : memref<15x32xf32, #tpu.memory_space<vmem>>, vector<1x32xf32>
    %349 = vector.shape_cast %348 : vector<1x32xf32> to vector<32xf32>
    %cst_145 = arith.constant dense<0.000000e+00> : vector<2xf32>
    %350 = vector.multi_reduction <add>, %345, %cst_145 [1] : vector<2x32xf32> to vector<2xf32>
    %351 = vector.shape_cast %350 : vector<2xf32> to vector<2x1xf32>
    %cst_146 = arith.constant 3.200000e+01 : f32
    %352 = vector.broadcast %cst_146 : f32 to vector<2x1xf32>
    %353 = arith.divf %351, %352 : vector<2x1xf32>
    %354 = vector.broadcast %353 : vector<2x1xf32> to vector<2x32xf32>
    %355 = arith.subf %345, %354 : vector<2x32xf32>
    %356 = arith.mulf %355, %355 : vector<2x32xf32>
    %cst_147 = arith.constant dense<0.000000e+00> : vector<2xf32>
    %357 = vector.multi_reduction <add>, %356, %cst_147 [1] : vector<2x32xf32> to vector<2xf32>
    %358 = vector.shape_cast %357 : vector<2xf32> to vector<2x1xf32>
    %cst_148 = arith.constant 3.200000e+01 : f32
    %359 = vector.broadcast %cst_148 : f32 to vector<2x1xf32>
    %360 = arith.divf %358, %359 : vector<2x1xf32>
    %361 = vector.broadcast %353 : vector<2x1xf32> to vector<2x32xf32>
    %362 = arith.subf %345, %361 : vector<2x32xf32>
    %cst_149 = arith.constant 9.99999974E-6 : f32
    %363 = vector.broadcast %cst_149 : f32 to vector<2x1xf32>
    %364 = arith.addf %360, %363 : vector<2x1xf32>
    %365 = math.rsqrt %364 : vector<2x1xf32>
    %366 = vector.broadcast %365 : vector<2x1xf32> to vector<2x32xf32>
    %367 = arith.mulf %362, %366 : vector<2x32xf32>
    %368 = vector.shape_cast %347 : vector<32xf32> to vector<1x32xf32>
    %369 = vector.broadcast %368 : vector<1x32xf32> to vector<2x32xf32>
    %370 = arith.mulf %367, %369 : vector<2x32xf32>
    %371 = vector.shape_cast %349 : vector<32xf32> to vector<1x32xf32>
    %372 = vector.broadcast %371 : vector<1x32xf32> to vector<2x32xf32>
    %373 = arith.addf %370, %372 : vector<2x32xf32>
    %c0_150 = arith.constant 0 : index
    %c0_151 = arith.constant 0 : index
    %374 = vector.load %arg8[%c0_150, %c0_151] : memref<32x128xf32, #tpu.memory_space<vmem>>, vector<32x128xf32>
    %cst_152 = arith.constant dense<0.000000e+00> : vector<2x128xf32>
    %375 = tpu.matmul %373, %374, %cst_152 {dimension_numbers = #tpu.dot_dimension_numbers<[1], [0], [0], [1], [0, 0, 1, 1], [], []>} : vector<2x32xf32>, vector<32x128xf32>, vector<2x128xf32> -> vector<2x128xf32>
    %c0_153 = arith.constant 0 : index
    %c0_154 = arith.constant 0 : index
    %376 = vector.load %arg9[%c0_153, %c0_154] : memref<1x128xf32, #tpu.memory_space<vmem>>, vector<1x128xf32>
    %377 = vector.broadcast %376 : vector<1x128xf32> to vector<2x128xf32>
    %378 = arith.addf %375, %377 : vector<2x128xf32>
    %c0_155 = arith.constant 0 : index
    %c0_156 = arith.constant 0 : index
    %379 = vector.load %arg16[%c0_155, %c0_156] : memref<2x128xf32, #tpu.memory_space<vmem>>, vector<2x128xf32>
    tpu.vector_store %arg16[%c0_155, %c0_156], %378 {strides = array<i32>} : memref<2x128xf32, #tpu.memory_space<vmem>>, vector<2x128xf32>,
    return
  }
  func.func @transform_0(%arg0: i32) -> (i32, i32) {
    %c0_i32 = arith.constant 0 : i32
    %c0_i32_0 = arith.constant 0 : i32
    return %arg0, %c0_i32 : i32, i32
  }
  func.func @transform_1(%arg0: i32) -> (i32, i32, i32) {
    %c0_i32 = arith.constant 0 : i32
    %c0_i32_0 = arith.constant 0 : i32
    %c0_i32_1 = arith.constant 0 : i32
    %c0_i32_2 = arith.constant 0 : i32
    return %c0_i32, %c0_i32_0, %c0_i32_1 : i32, i32, i32
  }
  func.func @transform_2(%arg0: i32) -> (i32, i32) {
    %c0_i32 = arith.constant 0 : i32
    %c0_i32_0 = arith.constant 0 : i32
    %c0_i32_1 = arith.constant 0 : i32
    return %c0_i32, %c0_i32_0 : i32, i32
  }
  func.func @transform_3(%arg0: i32) -> (i32, i32, i32) {
    %c0_i32 = arith.constant 0 : i32
    %c0_i32_0 = arith.constant 0 : i32
    %c0_i32_1 = arith.constant 0 : i32
    %c0_i32_2 = arith.constant 0 : i32
    return %c0_i32, %c0_i32_0, %c0_i32_1 : i32, i32, i32
  }
  func.func @transform_4(%arg0: i32) -> (i32, i32, i32) {
    %c0_i32 = arith.constant 0 : i32
    %c0_i32_0 = arith.constant 0 : i32
    %c0_i32_1 = arith.constant 0 : i32
    %c0_i32_2 = arith.constant 0 : i32
    return %c0_i32, %c0_i32_0, %c0_i32_1 : i32, i32, i32
  }
  func.func @transform_5(%arg0: i32) -> (i32, i32, i32) {
    %c0_i32 = arith.constant 0 : i32
    %c0_i32_0 = arith.constant 0 : i32
    %c0_i32_1 = arith.constant 0 : i32
    %c0_i32_2 = arith.constant 0 : i32
    return %c0_i32, %c0_i32_0, %c0_i32_1 : i32, i32, i32
  }
  func.func @transform_6(%arg0: i32) -> (i32, i32, i32) {
    %c0_i32 = arith.constant 0 : i32
    %c0_i32_0 = arith.constant 0 : i32
    %c0_i32_1 = arith.constant 0 : i32
    %c0_i32_2 = arith.constant 0 : i32
    return %c0_i32, %c0_i32_0, %c0_i32_1 : i32, i32, i32
  }
  func.func @transform_7(%arg0: i32) -> (i32, i32) {
    %c0_i32 = arith.constant 0 : i32
    %c0_i32_0 = arith.constant 0 : i32
    %c0_i32_1 = arith.constant 0 : i32
    return %c0_i32, %c0_i32_0 : i32, i32
  }
  func.func @transform_8(%arg0: i32) -> (i32, i32) {
    %c0_i32 = arith.constant 0 : i32
    %c0_i32_0 = arith.constant 0 : i32
    %c0_i32_1 = arith.constant 0 : i32
    return %c0_i32, %c0_i32_0 : i32, i32
  }
  func.func @transform_9(%arg0: i32) -> (i32, i32) {
    %c0_i32 = arith.constant 0 : i32
    %c0_i32_0 = arith.constant 0 : i32
    %c0_i32_1 = arith.constant 0 : i32
    return %c0_i32, %c0_i32_0 : i32, i32
  }
  func.func @transform_10(%arg0: i32) -> (i32, i32) {
    %c0_i32 = arith.constant 0 : i32
    %c0_i32_0 = arith.constant 0 : i32
    %c0_i32_1 = arith.constant 0 : i32
    return %c0_i32, %c0_i32_0 : i32, i32
  }
  func.func @transform_11(%arg0: i32) -> (i32, i32) {
    %c0_i32 = arith.constant 0 : i32
    %c0_i32_0 = arith.constant 0 : i32
    %c0_i32_1 = arith.constant 0 : i32
    return %c0_i32, %c0_i32_0 : i32, i32
  }
  func.func @transform_12(%arg0: i32) -> (i32, i32) {
    %c0_i32 = arith.constant 0 : i32
    %c0_i32_0 = arith.constant 0 : i32
    %c0_i32_1 = arith.constant 0 : i32
    return %c0_i32, %c0_i32_0 : i32, i32
  }
  func.func @transform_13(%arg0: i32) -> (i32, i32) {
    %c0_i32 = arith.constant 0 : i32
    %c0_i32_0 = arith.constant 0 : i32
    %c0_i32_1 = arith.constant 0 : i32
    return %c0_i32, %c0_i32_0 : i32, i32
  }
  func.func @transform_14(%arg0: i32) -> (i32, i32) {
    %c0_i32 = arith.constant 0 : i32
    %c0_i32_0 = arith.constant 0 : i32
    %c0_i32_1 = arith.constant 0 : i32
    return %c0_i32, %c0_i32_0 : i32, i32
  }
  func.func @transform_15(%arg0: i32) -> (i32, i32) {
    %c0_i32 = arith.constant 0 : i32
    %c0_i32_0 = arith.constant 0 : i32
    return %arg0, %c0_i32 : i32, i32
  }
}

</mosaic_0001>

<llo_original>
// kernel: speckk_forward.1
$region0: #{speckk_forward.1}
  #allocation0 [shape = 'u32[]', space=smem, size = 0x4, offset = 0x4, fixed_abs, tag = 'smem constant byte address 0x4 - core index']
  #allocation1 [shape = 'u32[144,128]{1,0:T(1,128)}', space=vmem, size = 0x12000, scoped, tag = 'internal scratch']
  %s0 = inlined_call_operand.vmem [shape: f32[16,64], index: 0, kind: input, shape index: {}]
  %s1 = inlined_call_operand.vmem [shape: f32[1,64,64], index: 1, kind: input, shape index: {}]
  %s2 = inlined_call_operand.vmem [shape: f32[64,32], index: 2, kind: input, shape index: {}]
  %s3 = inlined_call_operand.vmem [shape: f32[2,32,128], index: 3, kind: input, shape index: {}]
  %s4 = inlined_call_operand.vmem [shape: f32[2,32,128], index: 4, kind: input, shape index: {}]
  %s5 = inlined_call_operand.vmem [shape: f32[2,32,64], index: 5, kind: input, shape index: {}]
  %s6 = inlined_call_operand.vmem [shape: f32[2,64,32], index: 6, kind: input, shape index: {}]
  %s7 = inlined_call_operand.vmem [shape: f32[32,128], index: 7, kind: input, shape index: {}]
  %s8 = inlined_call_operand.vmem [shape: f32[1,128], index: 8, kind: input, shape index: {}]
  %s9 = inlined_call_operand.vmem [shape: f32[15,32], index: 9, kind: input, shape index: {}]
  %s10 = inlined_call_operand.vmem [shape: f32[3,64], index: 10, kind: input, shape index: {}]
  %s11 = inlined_call_operand.vmem [shape: f32[32,16], index: 11, kind: input, shape index: {}]
  %s12 = inlined_call_operand.vmem [shape: f32[32,32], index: 12, kind: input, shape index: {}]
  %s13 = inlined_call_operand.vmem [shape: f32[32,32], index: 13, kind: input, shape index: {}]
  %s14 = inlined_call_operand.vmem [shape: f32[2,32], index: 14, kind: input, shape index: {}]
  %s15 = inlined_call_operand.hbm [shape: f32[2,128], index: 15, kind: output, shape index: {}]
  %s16 = sld [smem:[#allocation0]]
  $region70: #{speckk_forward.1} parent=0
    _
  %s18 = ssub.s32 1, %s16
  %s19 = scalar_select 0, %s18, %s16
  $region1: #{speckk_forward.1} parent=0
    #allocation2 [shape = 'u8[1024]{0}', space=vmem, size = 0x400, scoped, tag = 'output window, operand 0, single buffered']
    #allocation3 [shape = 's32[1]{0}', space=sflag, size = 0x4, scoped, tag = 'scoped memory for speckk_forward.1']
    %20 = vsyncpa [#allocation3], 0
    // Predicated region
    $region2: #{speckk_forward.1} parent=1 // pred_check
      _
    $region3: #{speckk_forward.1} parent=1 // pred_check_branch
      %22 = sbr.rel (0) target = $region5
    $region4: #{speckk_forward.1} parent=1 // pred_region
      _
    $region5: #{speckk_forward.1} parent=1 // pred_fallthru
      _
    // Predicated region
    $region6: #{speckk_forward.1} parent=1 // pred_check
      _
    $region7: #{speckk_forward.1} parent=1 // pred_check_branch
      %24 = sbr.rel (0) target = $region9
    $region8: #{speckk_forward.1} parent=1 // pred_region
      _
    $region9: #{speckk_forward.1} parent=1 // pred_fallthru
      _
    // Predicated region
    $region10: #{speckk_forward.1} parent=1 // pred_check
      _
    $region11: #{speckk_forward.1} parent=1 // pred_check_branch
      %26 = sbr.rel (0) target = $region13
    $region12: #{speckk_forward.1} parent=1 // pred_region
      _
    $region13: #{speckk_forward.1} parent=1 // pred_fallthru
      _
    // Predicated region
    $region14: #{speckk_forward.1} parent=1 // pred_check
      _
    $region15: #{speckk_forward.1} parent=1 // pred_check_branch
      %28 = sbr.rel (0) target = $region17
    $region16: #{speckk_forward.1} parent=1 // pred_region
      _
    $region17: #{speckk_forward.1} parent=1 // pred_fallthru
      _
    // Predicated region
    $region18: #{speckk_forward.1} parent=1 // pred_check
      _
    $region19: #{speckk_forward.1} parent=1 // pred_check_branch
      %30 = sbr.rel (0) target = $region21
    $region20: #{speckk_forward.1} parent=1 // pred_region
      _
    $region21: #{speckk_forward.1} parent=1 // pred_fallthru
      _
    // Predicated region
    $region22: #{speckk_forward.1} parent=1 // pred_check
      _
    $region23: #{speckk_forward.1} parent=1 // pred_check_branch
      %32 = sbr.rel (0) target = $region25
    $region24: #{speckk_forward.1} parent=1 // pred_region
      _
    $region25: #{speckk_forward.1} parent=1 // pred_fallthru
      _
    // Predicated region
    $region26: #{speckk_forward.1} parent=1 // pred_check
      _
    $region27: #{speckk_forward.1} parent=1 // pred_check_branch
      %34 = sbr.rel (0) target = $region29
    $region28: #{speckk_forward.1} parent=1 // pred_region
      _
    $region29: #{speckk_forward.1} parent=1 // pred_fallthru
      _
    // Predicated region
    $region30: #{speckk_forward.1} parent=1 // pred_check
      _
    $region31: #{speckk_forward.1} parent=1 // pred_check_branch
      %36 = sbr.rel (0) target = $region33
    $region32: #{speckk_forward.1} parent=1 // pred_region
      _
    $region33: #{speckk_forward.1} parent=1 // pred_fallthru
      _
    // Predicated region
    $region34: #{speckk_forward.1} parent=1 // pred_check
      _
    $region35: #{speckk_forward.1} parent=1 // pred_check_branch
      %38 = sbr.rel (0) target = $region37
    $region36: #{speckk_forward.1} parent=1 // pred_region
      _
    $region37: #{speckk_forward.1} parent=1 // pred_fallthru
      _
    // Predicated region
    $region38: #{speckk_forward.1} parent=1 // pred_check
      _
    $region39: #{speckk_forward.1} parent=1 // pred_check_branch
      %40 = sbr.rel (0) target = $region41
    $region40: #{speckk_forward.1} parent=1 // pred_region
      _
    $region41: #{speckk_forward.1} parent=1 // pred_fallthru
      _
    // Predicated region
    $region42: #{speckk_forward.1} parent=1 // pred_check
      _
    $region43: #{speckk_forward.1} parent=1 // pred_check_branch
      %42 = sbr.rel (0) target = $region45
    $region44: #{speckk_forward.1} parent=1 // pred_region
      _
    $region45: #{speckk_forward.1} parent=1 // pred_fallthru
      _
    // Predicated region
    $region46: #{speckk_forward.1} parent=1 // pred_check
      _
    $region47: #{speckk_forward.1} parent=1 // pred_check_branch
      %44 = sbr.rel (0) target = $region49
    $region48: #{speckk_forward.1} parent=1 // pred_region
      _
    $region49: #{speckk_forward.1} parent=1 // pred_fallthru
      _
    // Predicated region
    $region50: #{speckk_forward.1} parent=1 // pred_check
      _
    $region51: #{speckk_forward.1} parent=1 // pred_check_branch
      %46 = sbr.rel (0) target = $region53
    $region52: #{speckk_forward.1} parent=1 // pred_region
      _
    $region53: #{speckk_forward.1} parent=1 // pred_fallthru
      _
    // Predicated region
    $region54: #{speckk_forward.1} parent=1 // pred_check
      _
    $region55: #{speckk_forward.1} parent=1 // pred_check_branch
      %48 = sbr.rel (0) target = $region57
    $region56: #{speckk_forward.1} parent=1 // pred_region
      _
    $region57: #{speckk_forward.1} parent=1 // pred_fallthru
      _
    // Predicated region
    $region58: #{speckk_forward.1} parent=1 // pred_check
      _
    $region59: #{speckk_forward.1} parent=1 // pred_check_branch
      %50 = sbr.rel (0) target = $region61
    $region60: #{speckk_forward.1} parent=1 // pred_region
      _
    $region61: #{speckk_forward.1} parent=1 // pred_fallthru
      _
    %v51 = vld [vmem:[%s0] sm:$0xff]
    %v52 = vld [vmem:[%s0 + $0x8] sm:$0xff]
    %v53 = vld [vmem:[%s1] sm:$0xff]
    %v54 = vld [vmem:[%s1 + $0x8] sm:$0xff]
    %v55 = vld [vmem:[%s1 + $0x10] sm:$0xff]
    %v56 = vld [vmem:[%s1 + $0x18] sm:$0xff]
    %v57 = vld [vmem:[%s1 + $0x20] sm:$0xff]
    %v58 = vld [vmem:[%s1 + $0x28] sm:$0xff]
    %v59 = vld [vmem:[%s1 + $0x30] sm:$0xff]
    %v60 = vld [vmem:[%s1 + $0x38] sm:$0xff]
    %v61 = vld [vmem:[%s10] sm:$0x1]
    %v62 = vlaneseq
    %v63 = vshrl.u32 %v62, 7
    %v64 = vsub.s32 0, %v63
    %v65 = vrot.slane %v61, %v64
    %vm66 = vcmask 523264
    %v68 = vsel %vm66, %v51, 0
    %v71 = vsel %vm66, %v52, 0
    %73 = vmatprep.subr.mxu0 0.0
    %74 = vmatpush1.msra.mxu0 0.0
    %75 = vmatprep.subr.mxu0 0.0
    %76 = vmatpush1.msra.mxu0 0.0
    %77 = vmatprep.subr.mxu0 0.0
    %78 = vmatpush1.msra.mxu0 0.0
    %79 = vmatprep.subr.mxu0 0.0
    %80 = vmatpush1.msra.mxu0 0.0
    %81 = vmatprep.subr.mxu0 0.0
    %82 = vmatpush1.msra.mxu0 0.0
    %83 = vmatprep.subr.mxu0 0.0
    %84 = vmatpush1.msra.mxu0 0.0
    %85 = vmatprep.subr.mxu0 0.0
    %86 = vmatpush1.msra.mxu0 0.0
    %87 = vmatprep.subr.mxu0 0.0
    %88 = vmatpush1.msra.mxu0 0.0
    %89 = vmatprep.subr.mxu0 0.0
    %90 = vmatpush1.msra.mxu0 %v60
    %91 = vmatprep.subr.mxu0 0.0
    %92 = vmatpush1.msra.mxu0 %v59
    %93 = vmatprep.subr.mxu0 0.0
    %94 = vmatpush1.msra.mxu0 %v58
    %95 = vmatprep.subr.mxu0 0.0
    %96 = vmatpush1.msra.mxu0 %v57
    %97 = vmatprep.subr.mxu0 0.0
    %98 = vmatpush1.msra.mxu0 %v56
    %99 = vmatprep.subr.mxu0 0.0
    %100 = vmatpush1.msra.mxu0 %v55
    %101 = vmatprep.subr.mxu0 0.0
    %102 = vmatpush1.msra.mxu0 %v54
    %103 = vmatprep.subr.mxu0 0.0
    %104 = vmatpush1.msra.mxu0 %v53
    %105 = vmatprep.subr.mxu0 0.0
    %106 = vmatpush2.msra.mxu0 0.0
    %107 = vmatprep.subr.mxu0 0.0
    %108 = vmatpush2.msra.mxu0 0.0
    %109 = vmatprep.subr.mxu0 0.0
    %110 = vmatpush2.msra.mxu0 0.0
    %111 = vmatprep.subr.mxu0 0.0
    %112 = vmatpush2.msra.mxu0 0.0
    %113 = vmatprep.subr.mxu0 0.0
    %114 = vmatpush2.msra.mxu0 0.0
    %115 = vmatprep.subr.mxu0 0.0
    %116 = vmatpush2.msra.mxu0 0.0
    %117 = vmatprep.subr.mxu0 0.0
    %118 = vmatpush2.msra.mxu0 0.0
    %119 = vmatprep.subr.mxu0 0.0
    %120 = vmatpush2.msra.mxu0 0.0
    %121 = vmatprep.subr.mxu0 0.0
    %122 = vmatpush2.msra.mxu0 0.0
    %123 = vmatprep.subr.mxu0 0.0
    %124 = vmatpush2.msra.mxu0 0.0
    %125 = vmatprep.subr.mxu0 0.0
    %126 = vmatpush2.msra.mxu0 0.0
    %127 = vmatprep.subr.mxu0 0.0
    %128 = vmatpush2.msra.mxu0 0.0
    %129 = vmatprep.subr.mxu0 0.0
    %130 = vmatpush2.msra.mxu0 0.0
    %131 = vmatprep.subr.mxu0 0.0
    %132 = vmatpush2.msra.mxu0 0.0
    %133 = vmatprep.subr.mxu0 0.0
    %134 = vmatpush2.msra.mxu0 0.0
    %135 = vmatprep.subr.mxu0 0.0
    %136 = vmatpush2.msra.mxu0 0.0
    %137 = vmatprep.mubr.f32.mxu0 0.0
    %138 = vmatmul.mubr.f32.gmra.mxu0 %v68
    %v139 = vpop.f32.mrf.mxu0
    %v140 = vadd.f32 %v65, %v139
    %v141 = vpop.f32.mrf.mxu0
    %142 = vmatprep.mubr.f32.mxu0 0.0
    %143 = vmatmul.mubr.f32.gmra.mxu0 %v71
    %v144 = vpop.f32.mrf.mxu0
    %v145 = vadd.f32 %v65, %v144
    %v146 = vpop.f32.mrf.mxu0
    %147 = vdwg.mxu0
    %v148 = vld [vmem:[%s2] sm:$0xff]
    %v149 = vld [vmem:[%s2 + $0x8] sm:$0xff]
    %v150 = vld [vmem:[%s2 + $0x10] sm:$0xff]
    %v151 = vld [vmem:[%s2 + $0x18] sm:$0xff]
    %v152 = vld [vmem:[%s2 + $0x20] sm:$0xff]
    %v153 = vld [vmem:[%s2 + $0x28] sm:$0xff]
    %v154 = vld [vmem:[%s2 + $0x30] sm:$0xff]
    %v155 = vld [vmem:[%s2 + $0x38] sm:$0xff]
    %v156 = vld [vmem:[%s9] sm:$0x1]
    %v157 = vlaneseq
    %v158 = vshrl.u32 %v157, 7
    %v159 = vsub.s32 0, %v158
    %v160 = vrot.slane %v156, %v159
    %v162 = vsel %vm66, %v140, 0
    %v165 = vsel %vm66, %v145, 0
    %167 = vmatprep.subr.mxu0 0.0
    %168 = vmatpush1.msra.mxu0 0.0
    %169 = vmatprep.subr.mxu0 0.0
    %170 = vmatpush1.msra.mxu0 0.0
    %171 = vmatprep.subr.mxu0 0.0
    %172 = vmatpush1.msra.mxu0 0.0
    %173 = vmatprep.subr.mxu0 0.0
    %174 = vmatpush1.msra.mxu0 0.0
    %175 = vmatprep.subr.mxu0 0.0
    %176 = vmatpush1.msra.mxu0 0.0
    %177 = vmatprep.subr.mxu0 0.0
    %178 = vmatpush1.msra.mxu0 0.0
    %179 = vmatprep.subr.mxu0 0.0
    %180 = vmatpush1.msra.mxu0 0.0
    %181 = vmatprep.subr.mxu0 0.0
    %182 = vmatpush1.msra.mxu0 0.0
    %183 = vmatprep.subr.mxu0 0.0
    %184 = vmatpush1.msra.mxu0 %v155
    %185 = vmatprep.subr.mxu0 0.0
    %186 = vmatpush1.msra.mxu0 %v154
    %187 = vmatprep.subr.mxu0 0.0
    %188 = vmatpush1.msra.mxu0 %v153
    %189 = vmatprep.subr.mxu0 0.0
    %190 = vmatpush1.msra.mxu0 %v152
    %191 = vmatprep.subr.mxu0 0.0
    %192 = vmatpush1.msra.mxu0 %v151
    %193 = vmatprep.subr.mxu0 0.0
    %194 = vmatpush1.msra.mxu0 %v150
    %195 = vmatprep.subr.mxu0 0.0
    %196 = vmatpush1.msra.mxu0 %v149
    %197 = vmatprep.subr.mxu0 0.0
    %198 = vmatpush1.msra.mxu0 %v148
    %199 = vmatprep.subr.mxu0 0.0
    %200 = vmatpush2.msra.mxu0 0.0
    %201 = vmatprep.subr.mxu0 0.0
    %202 = vmatpush2.msra.mxu0 0.0
    %203 = vmatprep.subr.mxu0 0.0
    %204 = vmatpush2.msra.mxu0 0.0
    %205 = vmatprep.subr.mxu0 0.0
    %206 = vmatpush2.msra.mxu0 0.0
    %207 = vmatprep.subr.mxu0 0.0
    %208 = vmatpush2.msra.mxu0 0.0
    %209 = vmatprep.subr.mxu0 0.0
    %210 = vmatpush2.msra.mxu0 0.0
    %211 = vmatprep.subr.mxu0 0.0
    %212 = vmatpush2.msra.mxu0 0.0
    %213 = vmatprep.subr.mxu0 0.0
    %214 = vmatpush2.msra.mxu0 0.0
    %215 = vmatprep.subr.mxu0 0.0
    %216 = vmatpush2.msra.mxu0 0.0
    %217 = vmatprep.subr.mxu0 0.0
    %218 = vmatpush2.msra.mxu0 0.0
    %219 = vmatprep.subr.mxu0 0.0
    %220 = vmatpush2.msra.mxu0 0.0
    %221 = vmatprep.subr.mxu0 0.0
    %222 = vmatpush2.msra.mxu0 0.0
    %223 = vmatprep.subr.mxu0 0.0
    %224 = vmatpush2.msra.mxu0 0.0
    %225 = vmatprep.subr.mxu0 0.0
    %226 = vmatpush2.msra.mxu0 0.0
    %227 = vmatprep.subr.mxu0 0.0
    %228 = vmatpush2.msra.mxu0 0.0
    %229 = vmatprep.subr.mxu0 0.0
    %230 = vmatpush2.msra.mxu0 0.0
    %231 = vmatprep.mubr.f32.mxu0 0.0
    %232 = vmatmul.mubr.f32.gmra.mxu0 %v162
    %v233 = vpop.f32.mrf.mxu0
    %v234 = vadd.f32 %v160, %v233
    %v235 = vpop.f32.mrf.mxu0
    %236 = vmatprep.mubr.f32.mxu0 0.0
    %237 = vmatmul.mubr.f32.gmra.mxu0 %v165
    %v238 = vpop.f32.mrf.mxu0
    %v239 = vadd.f32 %v160, %v238
    %v240 = vpop.f32.mrf.mxu0
    %241 = vdwg.mxu0
    %v242 = vld [vmem:[%s11] sm:$0xff]
    %v243 = vld [vmem:[%s11 + $0x8] sm:$0xff]
    %v244 = vld [vmem:[%s11 + $0x10] sm:$0xff]
    %v245 = vld [vmem:[%s11 + $0x18] sm:$0xff]
    %v246 = vld [vmem:[%s12] sm:$0xff]
    %v247 = vld [vmem:[%s12 + $0x8] sm:$0xff]
    %v248 = vld [vmem:[%s12 + $0x10] sm:$0xff]
    %v249 = vld [vmem:[%s12 + $0x18] sm:$0xff]
    %vm250 = vcmask 130048
    %v252 = vsel %vm250, %v242, 0
    %v255 = vsel %vm250, %v243, 0
    %v258 = vsel %vm250, %v244, 0
    %v261 = vsel %vm250, %v245, 0
    %263 = vmatprep.subr.mxu0 0.0
    %264 = vmatpush1.msra.mxu0 0.0
    %265 = vmatprep.subr.mxu0 0.0
    %266 = vmatpush1.msra.mxu0 0.0
    %267 = vmatprep.subr.mxu0 0.0
    %268 = vmatpush1.msra.mxu0 0.0
    %269 = vmatprep.subr.mxu0 0.0
    %270 = vmatpush1.msra.mxu0 0.0
    %271 = vmatprep.subr.mxu0 0.0
    %272 = vmatpush1.msra.mxu0 0.0
    %273 = vmatprep.subr.mxu0 0.0
    %274 = vmatpush1.msra.mxu0 0.0
    %275 = vmatprep.subr.mxu0 0.0
    %276 = vmatpush1.msra.mxu0 0.0
    %277 = vmatprep.subr.mxu0 0.0
    %278 = vmatpush1.msra.mxu0 0.0
    %279 = vmatprep.subr.mxu0 0.0
    %280 = vmatpush1.msra.mxu0 0.0
    %281 = vmatprep.subr.mxu0 0.0
    %282 = vmatpush1.msra.mxu0 0.0
    %283 = vmatprep.subr.mxu0 0.0
    %284 = vmatpush1.msra.mxu0 0.0
    %285 = vmatprep.subr.mxu0 0.0
    %286 = vmatpush1.msra.mxu0 0.0
    %287 = vmatprep.subr.mxu0 0.0
    %288 = vmatpush1.msra.mxu0 0.0
    %289 = vmatprep.subr.mxu0 0.0
    %290 = vmatpush1.msra.mxu0 0.0
    %291 = vmatprep.subr.mxu0 0.0
    %292 = vmatpush1.msra.mxu0 %v239
    %293 = vmatprep.subr.mxu0 0.0
    %294 = vmatpush1.msra.mxu0 %v234
    %295 = vmatprep.subr.mxu0 0.0
    %296 = vmatpush2.msra.mxu0 0.0
    %297 = vmatprep.subr.mxu0 0.0
    %298 = vmatpush2.msra.mxu0 0.0
    %299 = vmatprep.subr.mxu0 0.0
    %300 = vmatpush2.msra.mxu0 0.0
    %301 = vmatprep.subr.mxu0 0.0
    %302 = vmatpush2.msra.mxu0 0.0
    %303 = vmatprep.subr.mxu0 0.0
    %304 = vmatpush2.msra.mxu0 0.0
    %305 = vmatprep.subr.mxu0 0.0
    %306 = vmatpush2.msra.mxu0 0.0
    %307 = vmatprep.subr.mxu0 0.0
    %308 = vmatpush2.msra.mxu0 0.0
    %309 = vmatprep.subr.mxu0 0.0
    %310 = vmatpush2.msra.mxu0 0.0
    %311 = vmatprep.subr.mxu0 0.0
    %312 = vmatpush2.msra.mxu0 0.0
    %313 = vmatprep.subr.mxu0 0.0
    %314 = vmatpush2.msra.mxu0 0.0
    %315 = vmatprep.subr.mxu0 0.0
    %316 = vmatpush2.msra.mxu0 0.0
    %317 = vmatprep.subr.mxu0 0.0
    %318 = vmatpush2.msra.mxu0 0.0
    %319 = vmatprep.subr.mxu0 0.0
    %320 = vmatpush2.msra.mxu0 0.0
    %321 = vmatprep.subr.mxu0 0.0
    %322 = vmatpush2.msra.mxu0 0.0
    %323 = vmatprep.subr.mxu0 0.0
    %324 = vmatpush2.msra.mxu0 0.0
    %325 = vmatprep.subr.mxu0 0.0
    %326 = vmatpush2.msra.mxu0 0.0
    %327 = vmatprep.mubr.f32.mxu0 0.0
    %328 = vmatmul.mubr.f32.gmra.mxu0 %v252
    %v329 = vpop.f32.mrf.mxu0
    %v330 = vadd.f32 %v246, %v329
    %v331 = vpop.f32.mrf.mxu0
    %332 = vmatprep.mubr.f32.mxu0 0.0
    %333 = vmatmul.mubr.f32.gmra.mxu0 %v255
    %v334 = vpop.f32.mrf.mxu0
    %v335 = vadd.f32 %v247, %v334
    %v336 = vpop.f32.mrf.mxu0
    %337 = vmatprep.mubr.f32.mxu0 0.0
    %338 = vmatmul.mubr.f32.gmra.mxu0 %v258
    %v339 = vpop.f32.mrf.mxu0
    %v340 = vadd.f32 %v248, %v339
    %v341 = vpop.f32.mrf.mxu0
    %342 = vmatprep.mubr.f32.mxu0 0.0
    %343 = vmatmul.mubr.f32.gmra.mxu0 %v261
    %v344 = vpop.f32.mrf.mxu0
    %v345 = vadd.f32 %v249, %v344
    %v346 = vpop.f32.mrf.mxu0
    %347 = vdwg.mxu0
    %v348 = vld [vmem:[%s9 + $0x3] sm:$0x1]
    %v349 = vld [vmem:[%s9 + $0x4] sm:$0x1]
    %v350 = vld [vmem:[%s9 + $0x5] sm:$0x1]
    %v351 = vld [vmem:[%s9 + $0x6] sm:$0x1]
    %v352 = vld [vmem:[%s9 + $0x7] sm:$0x1]
    %v353 = vld [vmem:[%s9 + $0x8] sm:$0x1]
    %v354 = vld [vmem:[%s10 + $0x1] sm:$0x1]
    %vm355 = vcmask 261120
    %v356 = vsel %vm355, %v330, 0.0
    %357 = vadd.xlane.f32.xlu0 %v356
    %v358 = vpop.xlane.xlu0 %357
    %v359 = vsel %vm355, %v335, 0.0
    %360 = vadd.xlane.f32.xlu0 %v359
    %v361 = vpop.xlane.xlu0 %360
    %v362 = vsel %vm355, %v340, 0.0
    %363 = vadd.xlane.f32.xlu0 %v362
    %v364 = vpop.xlane.xlu0 %363
    %v365 = vsel %vm355, %v345, 0.0
    %366 = vadd.xlane.f32.xlu0 %v365
    %v367 = vpop.xlane.xlu0 %366
    %v368 = vrcp.pop 32.0
    %v369 = vmul.f32 %v358, %v368
    %v370 = vmul.f32 %v361, %v368
    %v371 = vmul.f32 %v364, %v368
    %v372 = vmul.f32 %v367, %v368
    %v373 = vsub.f32 %v330, %v369
    %v374 = vsub.f32 %v335, %v370
    %v375 = vsub.f32 %v340, %v371
    %v376 = vsub.f32 %v345, %v372
    %v377 = vmul.f32 %v373, %v373
    %v378 = vmul.f32 %v374, %v374
    %v379 = vmul.f32 %v375, %v375
    %v380 = vmul.f32 %v376, %v376
    %v381 = vsel %vm355, %v377, 0.0
    %382 = vadd.xlane.f32.xlu0 %v381
    %v383 = vpop.xlane.xlu0 %382
    %v384 = vsel %vm355, %v378, 0.0
    %385 = vadd.xlane.f32.xlu0 %v384
    %v386 = vpop.xlane.xlu0 %385
    %v387 = vsel %vm355, %v379, 0.0
    %388 = vadd.xlane.f32.xlu0 %v387
    %v389 = vpop.xlane.xlu0 %388
    %v390 = vsel %vm355, %v380, 0.0
    %391 = vadd.xlane.f32.xlu0 %v390
    %v392 = vpop.xlane.xlu0 %391
    %v393 = vmul.f32 %v383, %v368
    %v394 = vmul.f32 %v386, %v368
    %v395 = vmul.f32 %v389, %v368
    %v396 = vmul.f32 %v392, %v368
    %v397 = vadd.f32 %v393, 1e-05
    %v398 = vadd.f32 %v394, 1e-05
    %v399 = vadd.f32 %v395, 1e-05
    %v400 = vadd.f32 %v396, 1e-05
    %v401 = vrsqrt.pop %v397
    %v402 = vrsqrt.pop %v398
    %v403 = vrsqrt.pop %v399
    %v404 = vrsqrt.pop %v400
    %v405 = vmul.f32 %v373, %v401
    %v406 = vmul.f32 %v374, %v402
    %v407 = vmul.f32 %v375, %v403
    %v408 = vmul.f32 %v376, %v404
    %v409 = vlaneseq
    %v410 = vshrl.u32 %v409, 7
    %v411 = vsub.s32 0, %v410
    %v412 = vrot.slane %v348, %v411
    %v413 = vmul.f32 %v405, %v412
    %v414 = vmul.f32 %v406, %v412
    %v415 = vmul.f32 %v407, %v412
    %v416 = vmul.f32 %v408, %v412
    %v417 = vlaneseq
    %v418 = vshrl.u32 %v417, 7
    %v419 = vsub.s32 0, %v418
    %v420 = vrot.slane %v349, %v419
    %v421 = vadd.f32 %v413, %v420
    %v422 = vadd.f32 %v414, %v420
    %v423 = vadd.f32 %v415, %v420
    %v424 = vadd.f32 %v416, %v420
    %v425 = vld [vmem:[%s3] sm:$0xff]
    %v426 = vld [vmem:[%s3 + $0x8] sm:$0xff]
    %v427 = vld [vmem:[%s3 + $0x10] sm:$0xff]
    %v428 = vld [vmem:[%s3 + $0x18] sm:$0xff]
    %v430 = vsel %vm355, %v421, 0
    %v433 = vsel %vm355, %v422, 0
    %v436 = vsel %vm355, %v423, 0
    %v439 = vsel %vm355, %v424, 0
    %441 = vmatprep.subr.mxu0 0.0
    %442 = vmatpush1.msra.mxu0 0.0
    %443 = vmatprep.subr.mxu0 0.0
    %444 = vmatpush1.msra.mxu0 0.0
    %445 = vmatprep.subr.mxu0 0.0
    %446 = vmatpush1.msra.mxu0 0.0
    %447 = vmatprep.subr.mxu0 0.0
    %448 = vmatpush1.msra.mxu0 0.0
    %449 = vmatprep.subr.mxu0 0.0
    %450 = vmatpush1.msra.mxu0 0.0
    %451 = vmatprep.subr.mxu0 0.0
    %452 = vmatpush1.msra.mxu0 0.0
    %453 = vmatprep.subr.mxu0 0.0
    %454 = vmatpush1.msra.mxu0 0.0
    %455 = vmatprep.subr.mxu0 0.0
    %456 = vmatpush1.msra.mxu0 0.0
    %457 = vmatprep.subr.mxu0 0.0
    %458 = vmatpush1.msra.mxu0 0.0
    %459 = vmatprep.subr.mxu0 0.0
    %460 = vmatpush1.msra.mxu0 0.0
    %461 = vmatprep.subr.mxu0 0.0
    %462 = vmatpush1.msra.mxu0 0.0
    %463 = vmatprep.subr.mxu0 0.0
    %464 = vmatpush1.msra.mxu0 0.0
    %465 = vmatprep.subr.mxu0 0.0
    %466 = vmatpush1.msra.mxu0 %v428
    %467 = vmatprep.subr.mxu0 0.0
    %468 = vmatpush1.msra.mxu0 %v427
    %469 = vmatprep.subr.mxu0 0.0
    %470 = vmatpush1.msra.mxu0 %v426
    %471 = vmatprep.subr.mxu0 0.0
    %472 = vmatpush1.msra.mxu0 %v425
    %473 = vmatprep.subr.mxu0 0.0
    %474 = vmatpush2.msra.mxu0 0.0
    %475 = vmatprep.subr.mxu0 0.0
    %476 = vmatpush2.msra.mxu0 0.0
    %477 = vmatprep.subr.mxu0 0.0
    %478 = vmatpush2.msra.mxu0 0.0
    %479 = vmatprep.subr.mxu0 0.0
    %480 = vmatpush2.msra.mxu0 0.0
    %481 = vmatprep.subr.mxu0 0.0
    %482 = vmatpush2.msra.mxu0 0.0
    %483 = vmatprep.subr.mxu0 0.0
    %484 = vmatpush2.msra.mxu0 0.0
    %485 = vmatprep.subr.mxu0 0.0
    %486 = vmatpush2.msra.mxu0 0.0
    %487 = vmatprep.subr.mxu0 0.0
    %488 = vmatpush2.msra.mxu0 0.0
    %489 = vmatprep.subr.mxu0 0.0
    %490 = vmatpush2.msra.mxu0 0.0
    %491 = vmatprep.subr.mxu0 0.0
    %492 = vmatpush2.msra.mxu0 0.0
    %493 = vmatprep.subr.mxu0 0.0
    %494 = vmatpush2.msra.mxu0 0.0
    %495 = vmatprep.subr.mxu0 0.0
    %496 = vmatpush2.msra.mxu0 0.0
    %497 = vmatprep.subr.mxu0 0.0
    %498 = vmatpush2.msra.mxu0 0.0
    %499 = vmatprep.subr.mxu0 0.0
    %500 = vmatpush2.msra.mxu0 0.0
    %501 = vmatprep.subr.mxu0 0.0
    %502 = vmatpush2.msra.mxu0 0.0
    %503 = vmatprep.subr.mxu0 0.0
    %504 = vmatpush2.msra.mxu0 0.0
    %505 = vmatprep.mubr.f32.mxu0 0.0
    %506 = vmatmul.mubr.f32.gmra.mxu0 %v430
    %v507 = vpop.f32.mrf.mxu0
    %v508 = vadd.f32 0.0, %v507
    %v509 = vpop.f32.mrf.mxu0
    %510 = vmatprep.mubr.f32.mxu0 0.0
    %511 = vmatmul.mubr.f32.gmra.mxu0 %v433
    %v512 = vpop.f32.mrf.mxu0
    %v513 = vadd.f32 0.0, %v512
    %v514 = vpop.f32.mrf.mxu0
    %515 = vmatprep.mubr.f32.mxu0 0.0
    %516 = vmatmul.mubr.f32.gmra.mxu0 %v436
    %v517 = vpop.f32.mrf.mxu0
    %v518 = vadd.f32 0.0, %v517
    %v519 = vpop.f32.mrf.mxu0
    %520 = vmatprep.mubr.f32.mxu0 0.0
    %521 = vmatmul.mubr.f32.gmra.mxu0 %v439
    %v522 = vpop.f32.mrf.mxu0
    %v523 = vadd.f32 0.0, %v522
    %v524 = vpop.f32.mrf.mxu0
    %525 = vdwg.mxu0
    %v526 = vld [vmem:[%s4] sm:$0xff]
    %v527 = vld [vmem:[%s4 + $0x8] sm:$0xff]
    %v528 = vld [vmem:[%s4 + $0x10] sm:$0xff]
    %v529 = vld [vmem:[%s4 + $0x18] sm:$0xff]
    %530 = vmatprep.subr.mxu0 0.0
    %531 = vmatpush1.msra.mxu0 0.0
    %532 = vmatprep.subr.mxu0 0.0
    %533 = vmatpush1.msra.mxu0 0.0
    %534 = vmatprep.subr.mxu0 0.0
    %535 = vmatpush1.msra.mxu0 0.0
    %536 = vmatprep.subr.mxu0 0.0
    %537 = vmatpush1.msra.mxu0 0.0
    %538 = vmatprep.subr.mxu0 0.0
    %539 = vmatpush1.msra.mxu0 0.0
    %540 = vmatprep.subr.mxu0 0.0
    %541 = vmatpush1.msra.mxu0 0.0
    %542 = vmatprep.subr.mxu0 0.0
    %543 = vmatpush1.msra.mxu0 0.0
    %544 = vmatprep.subr.mxu0 0.0
    %545 = vmatpush1.msra.mxu0 0.0
    %546 = vmatprep.subr.mxu0 0.0
    %547 = vmatpush1.msra.mxu0 0.0
    %548 = vmatprep.subr.mxu0 0.0
    %549 = vmatpush1.msra.mxu0 0.0
    %550 = vmatprep.subr.mxu0 0.0
    %551 = vmatpush1.msra.mxu0 0.0
    %552 = vmatprep.subr.mxu0 0.0
    %553 = vmatpush1.msra.mxu0 0.0
    %554 = vmatprep.subr.mxu0 0.0
    %555 = vmatpush1.msra.mxu0 %v529
    %556 = vmatprep.subr.mxu0 0.0
    %557 = vmatpush1.msra.mxu0 %v528
    %558 = vmatprep.subr.mxu0 0.0
    %559 = vmatpush1.msra.mxu0 %v527
    %560 = vmatprep.subr.mxu0 0.0
    %561 = vmatpush1.msra.mxu0 %v526
    %562 = vmatprep.subr.mxu0 0.0
    %563 = vmatpush2.msra.mxu0 0.0
    %564 = vmatprep.subr.mxu0 0.0
    %565 = vmatpush2.msra.mxu0 0.0
    %566 = vmatprep.subr.mxu0 0.0
    %567 = vmatpush2.msra.mxu0 0.0
    %568 = vmatprep.subr.mxu0 0.0
    %569 = vmatpush2.msra.mxu0 0.0
    %570 = vmatprep.subr.mxu0 0.0
    %571 = vmatpush2.msra.mxu0 0.0
    %572 = vmatprep.subr.mxu0 0.0
    %573 = vmatpush2.msra.mxu0 0.0
    %574 = vmatprep.subr.mxu0 0.0
    %575 = vmatpush2.msra.mxu0 0.0
    %576 = vmatprep.subr.mxu0 0.0
    %577 = vmatpush2.msra.mxu0 0.0
    %578 = vmatprep.subr.mxu0 0.0
    %579 = vmatpush2.msra.mxu0 0.0
    %580 = vmatprep.subr.mxu0 0.0
    %581 = vmatpush2.msra.mxu0 0.0
    %582 = vmatprep.subr.mxu0 0.0
    %583 = vmatpush2.msra.mxu0 0.0
    %584 = vmatprep.subr.mxu0 0.0
    %585 = vmatpush2.msra.mxu0 0.0
    %586 = vmatprep.subr.mxu0 0.0
    %587 = vmatpush2.msra.mxu0 0.0
    %588 = vmatprep.subr.mxu0 0.0
    %589 = vmatpush2.msra.mxu0 0.0
    %590 = vmatprep.subr.mxu0 0.0
    %591 = vmatpush2.msra.mxu0 0.0
    %592 = vmatprep.subr.mxu0 0.0
    %593 = vmatpush2.msra.mxu0 0.0
    %594 = vmatprep.mubr.f32.mxu0 0.0
    %595 = vmatmul.mubr.f32.gmra.mxu0 %v430
    %v596 = vpop.f32.mrf.mxu0
    %v597 = vadd.f32 0.0, %v596
    %v598 = vpop.f32.mrf.mxu0
    %599 = vmatprep.mubr.f32.mxu0 0.0
    %600 = vmatmul.mubr.f32.gmra.mxu0 %v433
    %v601 = vpop.f32.mrf.mxu0
    %v602 = vadd.f32 0.0, %v601
    %v603 = vpop.f32.mrf.mxu0
    %604 = vmatprep.mubr.f32.mxu0 0.0
    %605 = vmatmul.mubr.f32.gmra.mxu0 %v436
    %v606 = vpop.f32.mrf.mxu0
    %v607 = vadd.f32 0.0, %v606
    %v608 = vpop.f32.mrf.mxu0
    %609 = vmatprep.mubr.f32.mxu0 0.0
    %610 = vmatmul.mubr.f32.gmra.mxu0 %v439
    %v611 = vpop.f32.mrf.mxu0
    %v612 = vadd.f32 0.0, %v611
    %v613 = vpop.f32.mrf.mxu0
    %614 = vdwg.mxu0
    %v615 = vld [vmem:[%s13] sm:$0xff]
    %v616 = vld [vmem:[%s13 + $0x8] sm:$0xff]
    %v617 = vld [vmem:[%s13 + $0x10] sm:$0xff]
    %v618 = vld [vmem:[%s13 + $0x18] sm:$0xff]
    %v620 = vsel %vm355, %v508, 0
    %v623 = vsel %vm355, %v513, 0
    %v626 = vsel %vm355, %v518, 0
    %v629 = vsel %vm355, %v523, 0
    %631 = vmatprep.subr.mxu0 0.0
    %632 = vmatpush1.xpose.msra.mxu0 0.0
    %633 = vmatprep.subr.mxu0 0.0
    %634 = vmatpush1.xpose.msra.mxu0 0.0
    %635 = vmatprep.subr.mxu0 0.0
    %636 = vmatpush1.xpose.msra.mxu0 0.0
    %637 = vmatprep.subr.mxu0 0.0
    %638 = vmatpush1.xpose.msra.mxu0 0.0
    %639 = vmatprep.subr.mxu0 0.0
    %640 = vmatpush1.xpose.msra.mxu0 0.0
    %641 = vmatprep.subr.mxu0 0.0
    %642 = vmatpush1.xpose.msra.mxu0 0.0
    %643 = vmatprep.subr.mxu0 0.0
    %644 = vmatpush1.xpose.msra.mxu0 0.0
    %645 = vmatprep.subr.mxu0 0.0
    %646 = vmatpush1.xpose.msra.mxu0 0.0
    %647 = vmatprep.subr.mxu0 0.0
    %648 = vmatpush1.xpose.msra.mxu0 0.0
    %649 = vmatprep.subr.mxu0 0.0
    %650 = vmatpush1.xpose.msra.mxu0 0.0
    %651 = vmatprep.subr.mxu0 0.0
    %652 = vmatpush1.xpose.msra.mxu0 0.0
    %653 = vmatprep.subr.mxu0 0.0
    %654 = vmatpush1.xpose.msra.mxu0 0.0
    %655 = vmatprep.subr.mxu0 0.0
    %656 = vmatpush1.xpose.msra.mxu0 %v439
    %657 = vmatprep.subr.mxu0 0.0
    %658 = vmatpush1.xpose.msra.mxu0 %v436
    %659 = vmatprep.subr.mxu0 0.0
    %660 = vmatpush1.xpose.msra.mxu0 %v433
    %661 = vmatprep.subr.mxu0 0.0
    %662 = vmatpush1.xpose.msra.mxu0 %v430
    %663 = vmatprep.subr.mxu0 0.0
    %664 = vmatpush2.xpose.msra.mxu0 0.0
    %665 = vmatprep.subr.mxu0 0.0
    %666 = vmatpush2.xpose.msra.mxu0 0.0
    %667 = vmatprep.subr.mxu0 0.0
    %668 = vmatpush2.xpose.msra.mxu0 0.0
    %669 = vmatprep.subr.mxu0 0.0
    %670 = vmatpush2.xpose.msra.mxu0 0.0
    %671 = vmatprep.subr.mxu0 0.0
    %672 = vmatpush2.xpose.msra.mxu0 0.0
    %673 = vmatprep.subr.mxu0 0.0
    %674 = vmatpush2.xpose.msra.mxu0 0.0
    %675 = vmatprep.subr.mxu0 0.0
    %676 = vmatpush2.xpose.msra.mxu0 0.0
    %677 = vmatprep.subr.mxu0 0.0
    %678 = vmatpush2.xpose.msra.mxu0 0.0
    %679 = vmatprep.subr.mxu0 0.0
    %680 = vmatpush2.xpose.msra.mxu0 0.0
    %681 = vmatprep.subr.mxu0 0.0
    %682 = vmatpush2.xpose.msra.mxu0 0.0
    %683 = vmatprep.subr.mxu0 0.0
    %684 = vmatpush2.xpose.msra.mxu0 0.0
    %685 = vmatprep.subr.mxu0 0.0
    %686 = vmatpush2.xpose.msra.mxu0 0.0
    %687 = vmatprep.subr.mxu0 0.0
    %688 = vmatpush2.xpose.msra.mxu0 0.0
    %689 = vmatprep.subr.mxu0 0.0
    %690 = vmatpush2.xpose.msra.mxu0 0.0
    %691 = vmatprep.subr.mxu0 0.0
    %692 = vmatpush2.xpose.msra.mxu0 0.0
    %693 = vmatprep.subr.mxu0 0.0
    %694 = vmatpush2.xpose.msra.mxu0 0.0
    %695 = vmatprep.mubr.f32.mxu0 0.0
    %696 = vmatmul.mubr.f32.gmra.mxu0 %v620
    %v697 = vpop.f32.mrf.mxu0
    %v698 = vadd.f32 %v615, %v697
    %v699 = vpop.f32.mrf.mxu0
    %700 = vmatprep.mubr.f32.mxu0 0.0
    %701 = vmatmul.mubr.f32.gmra.mxu0 %v623
    %v702 = vpop.f32.mrf.mxu0
    %v703 = vadd.f32 %v616, %v702
    %v704 = vpop.f32.mrf.mxu0
    %705 = vmatprep.mubr.f32.mxu0 0.0
    %706 = vmatmul.mubr.f32.gmra.mxu0 %v626
    %v707 = vpop.f32.mrf.mxu0
    %v708 = vadd.f32 %v617, %v707
    %v709 = vpop.f32.mrf.mxu0
    %710 = vmatprep.mubr.f32.mxu0 0.0
    %711 = vmatmul.mubr.f32.gmra.mxu0 %v629
    %v712 = vpop.f32.mrf.mxu0
    %v713 = vadd.f32 %v618, %v712
    %v714 = vpop.f32.mrf.mxu0
    %715 = vdwg.mxu0
    %v716 = vsel %vm355, %v698, -inf
    %717 = vmax.xlane.f32.xlu0 %v716
    %v718 = vpop.xlane.xlu0 %717
    %v719 = vsel %vm355, %v703, -inf
    %720 = vmax.xlane.f32.xlu0 %v719
    %v721 = vpop.xlane.xlu0 %720
    %v722 = vsel %vm355, %v708, -inf
    %723 = vmax.xlane.f32.xlu0 %v722
    %v724 = vpop.xlane.xlu0 %723
    %v725 = vsel %vm355, %v713, -inf
    %726 = vmax.xlane.f32.xlu0 %v725
    %v727 = vpop.xlane.xlu0 %726
    %v728 = vsub.f32 %v698, %v718
    %v729 = vsub.f32 %v703, %v721
    %v730 = vsub.f32 %v708, %v724
    %v731 = vsub.f32 %v713, %v727
    %v732 = vmul.f32 %v728, 1.442695
    %v733 = vpow.pop %v732
    %v734 = vmul.f32 %v729, 1.442695
    %v735 = vpow.pop %v734
    %v736 = vmul.f32 %v730, 1.442695
    %v737 = vpow.pop %v736
    %v738 = vmul.f32 %v731, 1.442695
    %v739 = vpow.pop %v738
    %v740 = vsel %vm355, %v733, 0.0
    %741 = vadd.xlane.f32.xlu0 %v740
    %v742 = vpop.xlane.xlu0 %741
    %v743 = vsel %vm355, %v735, 0.0
    %744 = vadd.xlane.f32.xlu0 %v743
    %v745 = vpop.xlane.xlu0 %744
    %v746 = vsel %vm355, %v737, 0.0
    %747 = vadd.xlane.f32.xlu0 %v746
    %v748 = vpop.xlane.xlu0 %747
    %v749 = vsel %vm355, %v739, 0.0
    %750 = vadd.xlane.f32.xlu0 %v749
    %v751 = vpop.xlane.xlu0 %750
    %v752 = vrcp.pop %v742
    %v753 = vrcp.pop %v745
    %v754 = vrcp.pop %v748
    %v755 = vrcp.pop %v751
    %v756 = vmul.f32 %v733, %v752
    %v757 = vmul.f32 %v735, %v753
    %v758 = vmul.f32 %v737, %v754
    %v759 = vmul.f32 %v739, %v755
    %760 = vrot.lane.b32.xlu0 %v508, 96
    %v761 = vpop.permute.xlu0 %760
    %762 = vrot.lane.b32.xlu0 %v513, 96
    %v763 = vpop.permute.xlu0 %762
    %764 = vrot.lane.b32.xlu0 %v518, 96
    %v765 = vpop.permute.xlu0 %764
    %766 = vrot.lane.b32.xlu0 %v523, 96
    %v767 = vpop.permute.xlu0 %766
    %v768 = vsel %vm355, %v761, 0
    %v770 = vsel %vm355, %v763, 0
    %v772 = vsel %vm355, %v765, 0
    %v774 = vsel %vm355, %v767, 0
    %776 = vmatprep.subr.mxu0 0.0
    %777 = vmatpush1.xpose.msra.mxu0 0.0
    %778 = vmatprep.subr.mxu0 0.0
    %779 = vmatpush1.xpose.msra.mxu0 0.0
    %780 = vmatprep.subr.mxu0 0.0
    %781 = vmatpush1.xpose.msra.mxu0 0.0
    %782 = vmatprep.subr.mxu0 0.0
    %783 = vmatpush1.xpose.msra.mxu0 0.0
    %784 = vmatprep.subr.mxu0 0.0
    %785 = vmatpush1.xpose.msra.mxu0 0.0
    %786 = vmatprep.subr.mxu0 0.0
    %787 = vmatpush1.xpose.msra.mxu0 0.0
    %788 = vmatprep.subr.mxu0 0.0
    %789 = vmatpush1.xpose.msra.mxu0 0.0
    %790 = vmatprep.subr.mxu0 0.0
    %791 = vmatpush1.xpose.msra.mxu0 0.0
    %792 = vmatprep.subr.mxu0 0.0
    %793 = vmatpush1.xpose.msra.mxu0 0.0
    %794 = vmatprep.subr.mxu0 0.0
    %795 = vmatpush1.xpose.msra.mxu0 0.0
    %796 = vmatprep.subr.mxu0 0.0
    %797 = vmatpush1.xpose.msra.mxu0 0.0
    %798 = vmatprep.subr.mxu0 0.0
    %799 = vmatpush1.xpose.msra.mxu0 0.0
    %800 = vmatprep.subr.mxu0 0.0
    %801 = vmatpush1.xpose.msra.mxu0 %v439
    %802 = vmatprep.subr.mxu0 0.0
    %803 = vmatpush1.xpose.msra.mxu0 %v436
    %804 = vmatprep.subr.mxu0 0.0
    %805 = vmatpush1.xpose.msra.mxu0 %v433
    %806 = vmatprep.subr.mxu0 0.0
    %807 = vmatpush1.xpose.msra.mxu0 %v430
    %808 = vmatprep.subr.mxu0 0.0
    %809 = vmatpush2.xpose.msra.mxu0 0.0
    %810 = vmatprep.subr.mxu0 0.0
    %811 = vmatpush2.xpose.msra.mxu0 0.0
    %812 = vmatprep.subr.mxu0 0.0
    %813 = vmatpush2.xpose.msra.mxu0 0.0
    %814 = vmatprep.subr.mxu0 0.0
    %815 = vmatpush2.xpose.msra.mxu0 0.0
    %816 = vmatprep.subr.mxu0 0.0
    %817 = vmatpush2.xpose.msra.mxu0 0.0
    %818 = vmatprep.subr.mxu0 0.0
    %819 = vmatpush2.xpose.msra.mxu0 0.0
    %820 = vmatprep.subr.mxu0 0.0
    %821 = vmatpush2.xpose.msra.mxu0 0.0
    %822 = vmatprep.subr.mxu0 0.0
    %823 = vmatpush2.xpose.msra.mxu0 0.0
    %824 = vmatprep.subr.mxu0 0.0
    %825 = vmatpush2.xpose.msra.mxu0 0.0
    %826 = vmatprep.subr.mxu0 0.0
    %827 = vmatpush2.xpose.msra.mxu0 0.0
    %828 = vmatprep.subr.mxu0 0.0
    %829 = vmatpush2.xpose.msra.mxu0 0.0
    %830 = vmatprep.subr.mxu0 0.0
    %831 = vmatpush2.xpose.msra.mxu0 0.0
    %832 = vmatprep.subr.mxu0 0.0
    %833 = vmatpush2.xpose.msra.mxu0 0.0
    %834 = vmatprep.subr.mxu0 0.0
    %835 = vmatpush2.xpose.msra.mxu0 0.0
    %836 = vmatprep.subr.mxu0 0.0
    %837 = vmatpush2.xpose.msra.mxu0 0.0
    %838 = vmatprep.subr.mxu0 0.0
    %839 = vmatpush2.xpose.msra.mxu0 0.0
    %840 = vmatprep.mubr.f32.mxu0 0.0
    %841 = vmatmul.mubr.f32.gmra.mxu0 %v768
    %v842 = vpop.f32.mrf.mxu0
    %v843 = vadd.f32 %v615, %v842
    %v844 = vpop.f32.mrf.mxu0
    %845 = vmatprep.mubr.f32.mxu0 0.0
    %846 = vmatmul.mubr.f32.gmra.mxu0 %v770
    %v847 = vpop.f32.mrf.mxu0
    %v848 = vadd.f32 %v616, %v847
    %v849 = vpop.f32.mrf.mxu0
    %850 = vmatprep.mubr.f32.mxu0 0.0
    %851 = vmatmul.mubr.f32.gmra.mxu0 %v772
    %v852 = vpop.f32.mrf.mxu0
    %v853 = vadd.f32 %v617, %v852
    %v854 = vpop.f32.mrf.mxu0
    %855 = vmatprep.mubr.f32.mxu0 0.0
    %856 = vmatmul.mubr.f32.gmra.mxu0 %v774
    %v857 = vpop.f32.mrf.mxu0
    %v858 = vadd.f32 %v618, %v857
    %v859 = vpop.f32.mrf.mxu0
    %860 = vdwg.mxu0
    %v861 = vsel %vm355, %v843, -inf
    %862 = vmax.xlane.f32.xlu0 %v861
    %v863 = vpop.xlane.xlu0 %862
    %v864 = vsel %vm355, %v848, -inf
    %865 = vmax.xlane.f32.xlu0 %v864
    %v866 = vpop.xlane.xlu0 %865
    %v867 = vsel %vm355, %v853, -inf
    %868 = vmax.xlane.f32.xlu0 %v867
    %v869 = vpop.xlane.xlu0 %868
    %v870 = vsel %vm355, %v858, -inf
    %871 = vmax.xlane.f32.xlu0 %v870
    %v872 = vpop.xlane.xlu0 %871
    %v873 = vsub.f32 %v843, %v863
    %v874 = vsub.f32 %v848, %v866
    %v875 = vsub.f32 %v853, %v869
    %v876 = vsub.f32 %v858, %v872
    %v877 = vmul.f32 %v873, 1.442695
    %v878 = vpow.pop %v877
    %v879 = vmul.f32 %v874, 1.442695
    %v880 = vpow.pop %v879
    %v881 = vmul.f32 %v875, 1.442695
    %v882 = vpow.pop %v881
    %v883 = vmul.f32 %v876, 1.442695
    %v884 = vpow.pop %v883
    %v885 = vsel %vm355, %v878, 0.0
    %886 = vadd.xlane.f32.xlu0 %v885
    %v887 = vpop.xlane.xlu0 %886
    %v888 = vsel %vm355, %v880, 0.0
    %889 = vadd.xlane.f32.xlu0 %v888
    %v890 = vpop.xlane.xlu0 %889
    %v891 = vsel %vm355, %v882, 0.0
    %892 = vadd.xlane.f32.xlu0 %v891
    %v893 = vpop.xlane.xlu0 %892
    %v894 = vsel %vm355, %v884, 0.0
    %895 = vadd.xlane.f32.xlu0 %v894
    %v896 = vpop.xlane.xlu0 %895
    %v897 = vrcp.pop %v887
    %v898 = vrcp.pop %v890
    %v899 = vrcp.pop %v893
    %v900 = vrcp.pop %v896
    %v901 = vmul.f32 %v878, %v897
    %v902 = vmul.f32 %v880, %v898
    %v903 = vmul.f32 %v882, %v899
    %v904 = vmul.f32 %v884, %v900
    %909 = vrot.lane.b32.xlu0 %v597, 96
    %v910 = vpop.permute.xlu0 %909
    %911 = vrot.lane.b32.xlu0 %v602, 96
    %v912 = vpop.permute.xlu0 %911
    %913 = vrot.lane.b32.xlu0 %v607, 96
    %v914 = vpop.permute.xlu0 %913
    %915 = vrot.lane.b32.xlu0 %v612, 96
    %v916 = vpop.permute.xlu0 %915
    %v922 = vsel %vm355, %v901, 0
    %v925 = vsel %vm355, %v902, 0
    %v928 = vsel %vm355, %v903, 0
    %v931 = vsel %vm355, %v904, 0
    %933 = vmatprep.subr.mxu0 0.0
    %934 = vmatpush1.msra.mxu0 0.0
    %935 = vmatprep.subr.mxu0 0.0
    %936 = vmatpush1.msra.mxu0 0.0
    %937 = vmatprep.subr.mxu0 0.0
    %938 = vmatpush1.msra.mxu0 0.0
    %939 = vmatprep.subr.mxu0 0.0
    %940 = vmatpush1.msra.mxu0 0.0
    %941 = vmatprep.subr.mxu0 0.0
    %942 = vmatpush1.msra.mxu0 0.0
    %943 = vmatprep.subr.mxu0 0.0
    %944 = vmatpush1.msra.mxu0 0.0
    %945 = vmatprep.subr.mxu0 0.0
    %946 = vmatpush1.msra.mxu0 0.0
    %947 = vmatprep.subr.mxu0 0.0
    %948 = vmatpush1.msra.mxu0 0.0
    %949 = vmatprep.subr.mxu0 0.0
    %950 = vmatpush1.msra.mxu0 0.0
    %951 = vmatprep.subr.mxu0 0.0
    %952 = vmatpush1.msra.mxu0 0.0
    %953 = vmatprep.subr.mxu0 0.0
    %954 = vmatpush1.msra.mxu0 0.0
    %955 = vmatprep.subr.mxu0 0.0
    %956 = vmatpush1.msra.mxu0 0.0
    %957 = vmatprep.subr.mxu0 0.0
    %958 = vmatpush1.msra.mxu0 %v916
    %959 = vmatprep.subr.mxu0 0.0
    %960 = vmatpush1.msra.mxu0 %v914
    %961 = vmatprep.subr.mxu0 0.0
    %962 = vmatpush1.msra.mxu0 %v912
    %963 = vmatprep.subr.mxu0 0.0
    %964 = vmatpush1.msra.mxu0 %v910
    %965 = vmatprep.subr.mxu0 0.0
    %966 = vmatpush2.msra.mxu0 0.0
    %967 = vmatprep.subr.mxu0 0.0
    %968 = vmatpush2.msra.mxu0 0.0
    %969 = vmatprep.subr.mxu0 0.0
    %970 = vmatpush2.msra.mxu0 0.0
    %971 = vmatprep.subr.mxu0 0.0
    %972 = vmatpush2.msra.mxu0 0.0
    %973 = vmatprep.subr.mxu0 0.0
    %974 = vmatpush2.msra.mxu0 0.0
    %975 = vmatprep.subr.mxu0 0.0
    %976 = vmatpush2.msra.mxu0 0.0
    %977 = vmatprep.subr.mxu0 0.0
    %978 = vmatpush2.msra.mxu0 0.0
    %979 = vmatprep.subr.mxu0 0.0
    %980 = vmatpush2.msra.mxu0 0.0
    %981 = vmatprep.subr.mxu0 0.0
    %982 = vmatpush2.msra.mxu0 0.0
    %983 = vmatprep.subr.mxu0 0.0
    %984 = vmatpush2.msra.mxu0 0.0
    %985 = vmatprep.subr.mxu0 0.0
    %986 = vmatpush2.msra.mxu0 0.0
    %987 = vmatprep.subr.mxu0 0.0
    %988 = vmatpush2.msra.mxu0 0.0
    %989 = vmatprep.subr.mxu0 0.0
    %990 = vmatpush2.msra.mxu0 0.0
    %991 = vmatprep.subr.mxu0 0.0
    %992 = vmatpush2.msra.mxu0 0.0
    %993 = vmatprep.subr.mxu0 0.0
    %994 = vmatpush2.msra.mxu0 0.0
    %995 = vmatprep.subr.mxu0 0.0
    %996 = vmatpush2.msra.mxu0 0.0
    %997 = vmatprep.mubr.f32.mxu0 0.0
    %998 = vmatmul.mubr.f32.gmra.mxu0 %v922
    %v999 = vpop.f32.mrf.mxu0
    %v1000 = vadd.f32 0.0, %v999
    %v1001 = vpop.f32.mrf.mxu0
    %1002 = vmatprep.mubr.f32.mxu0 0.0
    %1003 = vmatmul.mubr.f32.gmra.mxu0 %v925
    %v1004 = vpop.f32.mrf.mxu0
    %v1005 = vadd.f32 0.0, %v1004
    %v1006 = vpop.f32.mrf.mxu0
    %1007 = vmatprep.mubr.f32.mxu0 0.0
    %1008 = vmatmul.mubr.f32.gmra.mxu0 %v928
    %v1009 = vpop.f32.mrf.mxu0
    %v1010 = vadd.f32 0.0, %v1009
    %v1011 = vpop.f32.mrf.mxu0
    %1012 = vmatprep.mubr.f32.mxu0 0.0
    %1013 = vmatmul.mubr.f32.gmra.mxu0 %v931
    %v1014 = vpop.f32.mrf.mxu0
    %v1015 = vadd.f32 0.0, %v1014
    %v1016 = vpop.f32.mrf.mxu0
    %1017 = vdwg.mxu0
    %v1019 = vsel %vm355, %v756, 0
    %v1022 = vsel %vm355, %v757, 0
    %v1025 = vsel %vm355, %v758, 0
    %v1028 = vsel %vm355, %v759, 0
    %1030 = vmatprep.subr.mxu0 0.0
    %1031 = vmatpush1.msra.mxu0 0.0
    %1032 = vmatprep.subr.mxu0 0.0
    %1033 = vmatpush1.msra.mxu0 0.0
    %1034 = vmatprep.subr.mxu0 0.0
    %1035 = vmatpush1.msra.mxu0 0.0
    %1036 = vmatprep.subr.mxu0 0.0
    %1037 = vmatpush1.msra.mxu0 0.0
    %1038 = vmatprep.subr.mxu0 0.0
    %1039 = vmatpush1.msra.mxu0 0.0
    %1040 = vmatprep.subr.mxu0 0.0
    %1041 = vmatpush1.msra.mxu0 0.0
    %1042 = vmatprep.subr.mxu0 0.0
    %1043 = vmatpush1.msra.mxu0 0.0
    %1044 = vmatprep.subr.mxu0 0.0
    %1045 = vmatpush1.msra.mxu0 0.0
    %1046 = vmatprep.subr.mxu0 0.0
    %1047 = vmatpush1.msra.mxu0 0.0
    %1048 = vmatprep.subr.mxu0 0.0
    %1049 = vmatpush1.msra.mxu0 0.0
    %1050 = vmatprep.subr.mxu0 0.0
    %1051 = vmatpush1.msra.mxu0 0.0
    %1052 = vmatprep.subr.mxu0 0.0
    %1053 = vmatpush1.msra.mxu0 0.0
    %1054 = vmatprep.subr.mxu0 0.0
    %1055 = vmatpush1.msra.mxu0 %v612
    %1056 = vmatprep.subr.mxu0 0.0
    %1057 = vmatpush1.msra.mxu0 %v607
    %1058 = vmatprep.subr.mxu0 0.0
    %1059 = vmatpush1.msra.mxu0 %v602
    %1060 = vmatprep.subr.mxu0 0.0
    %1061 = vmatpush1.msra.mxu0 %v597
    %1062 = vmatprep.subr.mxu0 0.0
    %1063 = vmatpush2.msra.mxu0 0.0
    %1064 = vmatprep.subr.mxu0 0.0
    %1065 = vmatpush2.msra.mxu0 0.0
    %1066 = vmatprep.subr.mxu0 0.0
    %1067 = vmatpush2.msra.mxu0 0.0
    %1068 = vmatprep.subr.mxu0 0.0
    %1069 = vmatpush2.msra.mxu0 0.0
    %1070 = vmatprep.subr.mxu0 0.0
    %1071 = vmatpush2.msra.mxu0 0.0
    %1072 = vmatprep.subr.mxu0 0.0
    %1073 = vmatpush2.msra.mxu0 0.0
    %1074 = vmatprep.subr.mxu0 0.0
    %1075 = vmatpush2.msra.mxu0 0.0
    %1076 = vmatprep.subr.mxu0 0.0
    %1077 = vmatpush2.msra.mxu0 0.0
    %1078 = vmatprep.subr.mxu0 0.0
    %1079 = vmatpush2.msra.mxu0 0.0
    %1080 = vmatprep.subr.mxu0 0.0
    %1081 = vmatpush2.msra.mxu0 0.0
    %1082 = vmatprep.subr.mxu0 0.0
    %1083 = vmatpush2.msra.mxu0 0.0
    %1084 = vmatprep.subr.mxu0 0.0
    %1085 = vmatpush2.msra.mxu0 0.0
    %1086 = vmatprep.subr.mxu0 0.0
    %1087 = vmatpush2.msra.mxu0 0.0
    %1088 = vmatprep.subr.mxu0 0.0
    %1089 = vmatpush2.msra.mxu0 0.0
    %1090 = vmatprep.subr.mxu0 0.0
    %1091 = vmatpush2.msra.mxu0 0.0
    %1092 = vmatprep.subr.mxu0 0.0
    %1093 = vmatpush2.msra.mxu0 0.0
    %1094 = vmatprep.mubr.f32.mxu0 0.0
    %1095 = vmatmul.mubr.f32.gmra.mxu0 %v1019
    %v1096 = vpop.f32.mrf.mxu0
    %v1097 = vadd.f32 %v1000, %v1096
    %v1098 = vpop.f32.mrf.mxu0
    %1099 = vmatprep.mubr.f32.mxu0 0.0
    %1100 = vmatmul.mubr.f32.gmra.mxu0 %v1022
    %v1101 = vpop.f32.mrf.mxu0
    %v1102 = vadd.f32 %v1005, %v1101
    %v1103 = vpop.f32.mrf.mxu0
    %1104 = vmatprep.mubr.f32.mxu0 0.0
    %1105 = vmatmul.mubr.f32.gmra.mxu0 %v1025
    %v1106 = vpop.f32.mrf.mxu0
    %v1107 = vadd.f32 %v1010, %v1106
    %v1108 = vpop.f32.mrf.mxu0
    %1109 = vmatprep.mubr.f32.mxu0 0.0
    %1110 = vmatmul.mubr.f32.gmra.mxu0 %v1028
    %v1111 = vpop.f32.mrf.mxu0
    %v1112 = vadd.f32 %v1015, %v1111
    %v1113 = vpop.f32.mrf.mxu0
    %1114 = vdwg.mxu0
    %1115 = vrot.lane.b32.xlu0 %v508, 64
    %v1116 = vpop.permute.xlu0 %1115
    %1117 = vrot.lane.b32.xlu0 %v513, 64
    %v1118 = vpop.permute.xlu0 %1117
    %1119 = vrot.lane.b32.xlu0 %v518, 64
    %v1120 = vpop.permute.xlu0 %1119
    %1121 = vrot.lane.b32.xlu0 %v523, 64
    %v1122 = vpop.permute.xlu0 %1121
    %v1123 = vsel %vm355, %v1116, 0
    %v1125 = vsel %vm355, %v1118, 0
    %v1127 = vsel %vm355, %v1120, 0
    %v1129 = vsel %vm355, %v1122, 0
    %1131 = vmatprep.subr.mxu0 0.0
    %1132 = vmatpush1.xpose.msra.mxu0 0.0
    %1133 = vmatprep.subr.mxu0 0.0
    %1134 = vmatpush1.xpose.msra.mxu0 0.0
    %1135 = vmatprep.subr.mxu0 0.0
    %1136 = vmatpush1.xpose.msra.mxu0 0.0
    %1137 = vmatprep.subr.mxu0 0.0
    %1138 = vmatpush1.xpose.msra.mxu0 0.0
    %1139 = vmatprep.subr.mxu0 0.0
    %1140 = vmatpush1.xpose.msra.mxu0 0.0
    %1141 = vmatprep.subr.mxu0 0.0
    %1142 = vmatpush1.xpose.msra.mxu0 0.0
    %1143 = vmatprep.subr.mxu0 0.0
    %1144 = vmatpush1.xpose.msra.mxu0 0.0
    %1145 = vmatprep.subr.mxu0 0.0
    %1146 = vmatpush1.xpose.msra.mxu0 0.0
    %1147 = vmatprep.subr.mxu0 0.0
    %1148 = vmatpush1.xpose.msra.mxu0 0.0
    %1149 = vmatprep.subr.mxu0 0.0
    %1150 = vmatpush1.xpose.msra.mxu0 0.0
    %1151 = vmatprep.subr.mxu0 0.0
    %1152 = vmatpush1.xpose.msra.mxu0 0.0
    %1153 = vmatprep.subr.mxu0 0.0
    %1154 = vmatpush1.xpose.msra.mxu0 0.0
    %1155 = vmatprep.subr.mxu0 0.0
    %1156 = vmatpush1.xpose.msra.mxu0 %v439
    %1157 = vmatprep.subr.mxu0 0.0
    %1158 = vmatpush1.xpose.msra.mxu0 %v436
    %1159 = vmatprep.subr.mxu0 0.0
    %1160 = vmatpush1.xpose.msra.mxu0 %v433
    %1161 = vmatprep.subr.mxu0 0.0
    %1162 = vmatpush1.xpose.msra.mxu0 %v430
    %1163 = vmatprep.subr.mxu0 0.0
    %1164 = vmatpush2.xpose.msra.mxu0 0.0
    %1165 = vmatprep.subr.mxu0 0.0
    %1166 = vmatpush2.xpose.msra.mxu0 0.0
    %1167 = vmatprep.subr.mxu0 0.0
    %1168 = vmatpush2.xpose.msra.mxu0 0.0
    %1169 = vmatprep.subr.mxu0 0.0
    %1170 = vmatpush2.xpose.msra.mxu0 0.0
    %1171 = vmatprep.subr.mxu0 0.0
    %1172 = vmatpush2.xpose.msra.mxu0 0.0
    %1173 = vmatprep.subr.mxu0 0.0
    %1174 = vmatpush2.xpose.msra.mxu0 0.0
    %1175 = vmatprep.subr.mxu0 0.0
    %1176 = vmatpush2.xpose.msra.mxu0 0.0
    %1177 = vmatprep.subr.mxu0 0.0
    %1178 = vmatpush2.xpose.msra.mxu0 0.0
    %1179 = vmatprep.subr.mxu0 0.0
    %1180 = vmatpush2.xpose.msra.mxu0 0.0
    %1181 = vmatprep.subr.mxu0 0.0
    %1182 = vmatpush2.xpose.msra.mxu0 0.0
    %1183 = vmatprep.subr.mxu0 0.0
    %1184 = vmatpush2.xpose.msra.mxu0 0.0
    %1185 = vmatprep.subr.mxu0 0.0
    %1186 = vmatpush2.xpose.msra.mxu0 0.0
    %1187 = vmatprep.subr.mxu0 0.0
    %1188 = vmatpush2.xpose.msra.mxu0 0.0
    %1189 = vmatprep.subr.mxu0 0.0
    %1190 = vmatpush2.xpose.msra.mxu0 0.0
    %1191 = vmatprep.subr.mxu0 0.0
    %1192 = vmatpush2.xpose.msra.mxu0 0.0
    %1193 = vmatprep.subr.mxu0 0.0
    %1194 = vmatpush2.xpose.msra.mxu0 0.0
    %1195 = vmatprep.mubr.f32.mxu0 0.0
    %1196 = vmatmul.mubr.f32.gmra.mxu0 %v1123
    %v1197 = vpop.f32.mrf.mxu0
    %v1198 = vadd.f32 %v615, %v1197
    %v1199 = vpop.f32.mrf.mxu0
    %1200 = vmatprep.mubr.f32.mxu0 0.0
    %1201 = vmatmul.mubr.f32.gmra.mxu0 %v1125
    %v1202 = vpop.f32.mrf.mxu0
    %v1203 = vadd.f32 %v616, %v1202
    %v1204 = vpop.f32.mrf.mxu0
    %1205 = vmatprep.mubr.f32.mxu0 0.0
    %1206 = vmatmul.mubr.f32.gmra.mxu0 %v1127
    %v1207 = vpop.f32.mrf.mxu0
    %v1208 = vadd.f32 %v617, %v1207
    %v1209 = vpop.f32.mrf.mxu0
    %1210 = vmatprep.mubr.f32.mxu0 0.0
    %1211 = vmatmul.mubr.f32.gmra.mxu0 %v1129
    %v1212 = vpop.f32.mrf.mxu0
    %v1213 = vadd.f32 %v618, %v1212
    %v1214 = vpop.f32.mrf.mxu0
    %1215 = vdwg.mxu0
    %v1216 = vsel %vm355, %v1198, -inf
    %1217 = vmax.xlane.f32.xlu0 %v1216
    %v1218 = vpop.xlane.xlu0 %1217
    %v1219 = vsel %vm355, %v1203, -inf
    %1220 = vmax.xlane.f32.xlu0 %v1219
    %v1221 = vpop.xlane.xlu0 %1220
    %v1222 = vsel %vm355, %v1208, -inf
    %1223 = vmax.xlane.f32.xlu0 %v1222
    %v1224 = vpop.xlane.xlu0 %1223
    %v1225 = vsel %vm355, %v1213, -inf
    %1226 = vmax.xlane.f32.xlu0 %v1225
    %v1227 = vpop.xlane.xlu0 %1226
    %v1228 = vsub.f32 %v1198, %v1218
    %v1229 = vsub.f32 %v1203, %v1221
    %v1230 = vsub.f32 %v1208, %v1224
    %v1231 = vsub.f32 %v1213, %v1227
    %v1232 = vmul.f32 %v1228, 1.442695
    %v1233 = vpow.pop %v1232
    %v1234 = vmul.f32 %v1229, 1.442695
    %v1235 = vpow.pop %v1234
    %v1236 = vmul.f32 %v1230, 1.442695
    %v1237 = vpow.pop %v1236
    %v1238 = vmul.f32 %v1231, 1.442695
    %v1239 = vpow.pop %v1238
    %v1240 = vsel %vm355, %v1233, 0.0
    %1241 = vadd.xlane.f32.xlu0 %v1240
    %v1242 = vpop.xlane.xlu0 %1241
    %v1243 = vsel %vm355, %v1235, 0.0
    %1244 = vadd.xlane.f32.xlu0 %v1243
    %v1245 = vpop.xlane.xlu0 %1244
    %v1246 = vsel %vm355, %v1237, 0.0
    %1247 = vadd.xlane.f32.xlu0 %v1246
    %v1248 = vpop.xlane.xlu0 %1247
    %v1249 = vsel %vm355, %v1239, 0.0
    %1250 = vadd.xlane.f32.xlu0 %v1249
    %v1251 = vpop.xlane.xlu0 %1250
    %v1252 = vrcp.pop %v1242
    %v1253 = vrcp.pop %v1245
    %v1254 = vrcp.pop %v1248
    %v1255 = vrcp.pop %v1251
    %v1256 = vmul.f32 %v1233, %v1252
    %v1257 = vmul.f32 %v1235, %v1253
    %v1258 = vmul.f32 %v1237, %v1254
    %v1259 = vmul.f32 %v1239, %v1255
    %1260 = vrot.lane.b32.xlu0 %v597, 64
    %v1261 = vpop.permute.xlu0 %1260
    %1262 = vrot.lane.b32.xlu0 %v602, 64
    %v1263 = vpop.permute.xlu0 %1262
    %1264 = vrot.lane.b32.xlu0 %v607, 64
    %v1265 = vpop.permute.xlu0 %1264
    %1266 = vrot.lane.b32.xlu0 %v612, 64
    %v1267 = vpop.permute.xlu0 %1266
    %v1273 = vsel %vm355, %v1256, 0
    %v1276 = vsel %vm355, %v1257, 0
    %v1279 = vsel %vm355, %v1258, 0
    %v1282 = vsel %vm355, %v1259, 0
    %1284 = vmatprep.subr.mxu0 0.0
    %1285 = vmatpush1.msra.mxu0 0.0
    %1286 = vmatprep.subr.mxu0 0.0
    %1287 = vmatpush1.msra.mxu0 0.0
    %1288 = vmatprep.subr.mxu0 0.0
    %1289 = vmatpush1.msra.mxu0 0.0
    %1290 = vmatprep.subr.mxu0 0.0
    %1291 = vmatpush1.msra.mxu0 0.0
    %1292 = vmatprep.subr.mxu0 0.0
    %1293 = vmatpush1.msra.mxu0 0.0
    %1294 = vmatprep.subr.mxu0 0.0
    %1295 = vmatpush1.msra.mxu0 0.0
    %1296 = vmatprep.subr.mxu0 0.0
    %1297 = vmatpush1.msra.mxu0 0.0
    %1298 = vmatprep.subr.mxu0 0.0
    %1299 = vmatpush1.msra.mxu0 0.0
    %1300 = vmatprep.subr.mxu0 0.0
    %1301 = vmatpush1.msra.mxu0 0.0
    %1302 = vmatprep.subr.mxu0 0.0
    %1303 = vmatpush1.msra.mxu0 0.0
    %1304 = vmatprep.subr.mxu0 0.0
    %1305 = vmatpush1.msra.mxu0 0.0
    %1306 = vmatprep.subr.mxu0 0.0
    %1307 = vmatpush1.msra.mxu0 0.0
    %1308 = vmatprep.subr.mxu0 0.0
    %1309 = vmatpush1.msra.mxu0 %v1267
    %1310 = vmatprep.subr.mxu0 0.0
    %1311 = vmatpush1.msra.mxu0 %v1265
    %1312 = vmatprep.subr.mxu0 0.0
    %1313 = vmatpush1.msra.mxu0 %v1263
    %1314 = vmatprep.subr.mxu0 0.0
    %1315 = vmatpush1.msra.mxu0 %v1261
    %1316 = vmatprep.subr.mxu0 0.0
    %1317 = vmatpush2.msra.mxu0 0.0
    %1318 = vmatprep.subr.mxu0 0.0
    %1319 = vmatpush2.msra.mxu0 0.0
    %1320 = vmatprep.subr.mxu0 0.0
    %1321 = vmatpush2.msra.mxu0 0.0
    %1322 = vmatprep.subr.mxu0 0.0
    %1323 = vmatpush2.msra.mxu0 0.0
    %1324 = vmatprep.subr.mxu0 0.0
    %1325 = vmatpush2.msra.mxu0 0.0
    %1326 = vmatprep.subr.mxu0 0.0
    %1327 = vmatpush2.msra.mxu0 0.0
    %1328 = vmatprep.subr.mxu0 0.0
    %1329 = vmatpush2.msra.mxu0 0.0
    %1330 = vmatprep.subr.mxu0 0.0
    %1331 = vmatpush2.msra.mxu0 0.0
    %1332 = vmatprep.subr.mxu0 0.0
    %1333 = vmatpush2.msra.mxu0 0.0
    %1334 = vmatprep.subr.mxu0 0.0
    %1335 = vmatpush2.msra.mxu0 0.0
    %1336 = vmatprep.subr.mxu0 0.0
    %1337 = vmatpush2.msra.mxu0 0.0
    %1338 = vmatprep.subr.mxu0 0.0
    %1339 = vmatpush2.msra.mxu0 0.0
    %1340 = vmatprep.subr.mxu0 0.0
    %1341 = vmatpush2.msra.mxu0 0.0
    %1342 = vmatprep.subr.mxu0 0.0
    %1343 = vmatpush2.msra.mxu0 0.0
    %1344 = vmatprep.subr.mxu0 0.0
    %1345 = vmatpush2.msra.mxu0 0.0
    %1346 = vmatprep.subr.mxu0 0.0
    %1347 = vmatpush2.msra.mxu0 0.0
    %1348 = vmatprep.mubr.f32.mxu0 0.0
    %1349 = vmatmul.mubr.f32.gmra.mxu0 %v1273
    %v1350 = vpop.f32.mrf.mxu0
    %v1351 = vadd.f32 0.0, %v1350
    %v1352 = vpop.f32.mrf.mxu0
    %1353 = vmatprep.mubr.f32.mxu0 0.0
    %1354 = vmatmul.mubr.f32.gmra.mxu0 %v1276
    %v1355 = vpop.f32.mrf.mxu0
    %v1356 = vadd.f32 0.0, %v1355
    %v1357 = vpop.f32.mrf.mxu0
    %1358 = vmatprep.mubr.f32.mxu0 0.0
    %1359 = vmatmul.mubr.f32.gmra.mxu0 %v1279
    %v1360 = vpop.f32.mrf.mxu0
    %v1361 = vadd.f32 0.0, %v1360
    %v1362 = vpop.f32.mrf.mxu0
    %1363 = vmatprep.mubr.f32.mxu0 0.0
    %1364 = vmatmul.mubr.f32.gmra.mxu0 %v1282
    %v1365 = vpop.f32.mrf.mxu0
    %v1366 = vadd.f32 0.0, %v1365
    %v1367 = vpop.f32.mrf.mxu0
    %1368 = vdwg.mxu0
    %v1369 = vadd.f32 %v1097, %v1351
    %v1370 = vadd.f32 %v1102, %v1356
    %v1371 = vadd.f32 %v1107, %v1361
    %v1372 = vadd.f32 %v1112, %v1366
    %1373 = vrot.lane.b32.xlu0 %v508, 32
    %v1374 = vpop.permute.xlu0 %1373
    %1375 = vrot.lane.b32.xlu0 %v513, 32
    %v1376 = vpop.permute.xlu0 %1375
    %1377 = vrot.lane.b32.xlu0 %v518, 32
    %v1378 = vpop.permute.xlu0 %1377
    %1379 = vrot.lane.b32.xlu0 %v523, 32
    %v1380 = vpop.permute.xlu0 %1379
    %v1381 = vsel %vm355, %v1374, 0
    %v1383 = vsel %vm355, %v1376, 0
    %v1385 = vsel %vm355, %v1378, 0
    %v1387 = vsel %vm355, %v1380, 0
    %1389 = vmatprep.subr.mxu0 0.0
    %1390 = vmatpush1.xpose.msra.mxu0 0.0
    %1391 = vmatprep.subr.mxu0 0.0
    %1392 = vmatpush1.xpose.msra.mxu0 0.0
    %1393 = vmatprep.subr.mxu0 0.0
    %1394 = vmatpush1.xpose.msra.mxu0 0.0
    %1395 = vmatprep.subr.mxu0 0.0
    %1396 = vmatpush1.xpose.msra.mxu0 0.0
    %1397 = vmatprep.subr.mxu0 0.0
    %1398 = vmatpush1.xpose.msra.mxu0 0.0
    %1399 = vmatprep.subr.mxu0 0.0
    %1400 = vmatpush1.xpose.msra.mxu0 0.0
    %1401 = vmatprep.subr.mxu0 0.0
    %1402 = vmatpush1.xpose.msra.mxu0 0.0
    %1403 = vmatprep.subr.mxu0 0.0
    %1404 = vmatpush1.xpose.msra.mxu0 0.0
    %1405 = vmatprep.subr.mxu0 0.0
    %1406 = vmatpush1.xpose.msra.mxu0 0.0
    %1407 = vmatprep.subr.mxu0 0.0
    %1408 = vmatpush1.xpose.msra.mxu0 0.0
    %1409 = vmatprep.subr.mxu0 0.0
    %1410 = vmatpush1.xpose.msra.mxu0 0.0
    %1411 = vmatprep.subr.mxu0 0.0
    %1412 = vmatpush1.xpose.msra.mxu0 0.0
    %1413 = vmatprep.subr.mxu0 0.0
    %1414 = vmatpush1.xpose.msra.mxu0 %v439
    %1415 = vmatprep.subr.mxu0 0.0
    %1416 = vmatpush1.xpose.msra.mxu0 %v436
    %1417 = vmatprep.subr.mxu0 0.0
    %1418 = vmatpush1.xpose.msra.mxu0 %v433
    %1419 = vmatprep.subr.mxu0 0.0
    %1420 = vmatpush1.xpose.msra.mxu0 %v430
    %1421 = vmatprep.subr.mxu0 0.0
    %1422 = vmatpush2.xpose.msra.mxu0 0.0
    %1423 = vmatprep.subr.mxu0 0.0
    %1424 = vmatpush2.xpose.msra.mxu0 0.0
    %1425 = vmatprep.subr.mxu0 0.0
    %1426 = vmatpush2.xpose.msra.mxu0 0.0
    %1427 = vmatprep.subr.mxu0 0.0
    %1428 = vmatpush2.xpose.msra.mxu0 0.0
    %1429 = vmatprep.subr.mxu0 0.0
    %1430 = vmatpush2.xpose.msra.mxu0 0.0
    %1431 = vmatprep.subr.mxu0 0.0
    %1432 = vmatpush2.xpose.msra.mxu0 0.0
    %1433 = vmatprep.subr.mxu0 0.0
    %1434 = vmatpush2.xpose.msra.mxu0 0.0
    %1435 = vmatprep.subr.mxu0 0.0
    %1436 = vmatpush2.xpose.msra.mxu0 0.0
    %1437 = vmatprep.subr.mxu0 0.0
    %1438 = vmatpush2.xpose.msra.mxu0 0.0
    %1439 = vmatprep.subr.mxu0 0.0
    %1440 = vmatpush2.xpose.msra.mxu0 0.0
    %1441 = vmatprep.subr.mxu0 0.0
    %1442 = vmatpush2.xpose.msra.mxu0 0.0
    %1443 = vmatprep.subr.mxu0 0.0
    %1444 = vmatpush2.xpose.msra.mxu0 0.0
    %1445 = vmatprep.subr.mxu0 0.0
    %1446 = vmatpush2.xpose.msra.mxu0 0.0
    %1447 = vmatprep.subr.mxu0 0.0
    %1448 = vmatpush2.xpose.msra.mxu0 0.0
    %1449 = vmatprep.subr.mxu0 0.0
    %1450 = vmatpush2.xpose.msra.mxu0 0.0
    %1451 = vmatprep.subr.mxu0 0.0
    %1452 = vmatpush2.xpose.msra.mxu0 0.0
    %1453 = vmatprep.mubr.f32.mxu0 0.0
    %1454 = vmatmul.mubr.f32.gmra.mxu0 %v1381
    %v1455 = vpop.f32.mrf.mxu0
    %v1456 = vadd.f32 %v615, %v1455
    %v1457 = vpop.f32.mrf.mxu0
    %1458 = vmatprep.mubr.f32.mxu0 0.0
    %1459 = vmatmul.mubr.f32.gmra.mxu0 %v1383
    %v1460 = vpop.f32.mrf.mxu0
    %v1461 = vadd.f32 %v616, %v1460
    %v1462 = vpop.f32.mrf.mxu0
    %1463 = vmatprep.mubr.f32.mxu0 0.0
    %1464 = vmatmul.mubr.f32.gmra.mxu0 %v1385
    %v1465 = vpop.f32.mrf.mxu0
    %v1466 = vadd.f32 %v617, %v1465
    %v1467 = vpop.f32.mrf.mxu0
    %1468 = vmatprep.mubr.f32.mxu0 0.0
    %1469 = vmatmul.mubr.f32.gmra.mxu0 %v1387
    %v1470 = vpop.f32.mrf.mxu0
    %v1471 = vadd.f32 %v618, %v1470
    %v1472 = vpop.f32.mrf.mxu0
    %1473 = vdwg.mxu0
    %v1474 = vsel %vm355, %v1456, -inf
    %1475 = vmax.xlane.f32.xlu0 %v1474
    %v1476 = vpop.xlane.xlu0 %1475
    %v1477 = vsel %vm355, %v1461, -inf
    %1478 = vmax.xlane.f32.xlu0 %v1477
    %v1479 = vpop.xlane.xlu0 %1478
    %v1480 = vsel %vm355, %v1466, -inf
    %1481 = vmax.xlane.f32.xlu0 %v1480
    %v1482 = vpop.xlane.xlu0 %1481
    %v1483 = vsel %vm355, %v1471, -inf
    %1484 = vmax.xlane.f32.xlu0 %v1483
    %v1485 = vpop.xlane.xlu0 %1484
    %v1486 = vsub.f32 %v1456, %v1476
    %v1487 = vsub.f32 %v1461, %v1479
    %v1488 = vsub.f32 %v1466, %v1482
    %v1489 = vsub.f32 %v1471, %v1485
    %v1490 = vmul.f32 %v1486, 1.442695
    %v1491 = vpow.pop %v1490
    %v1492 = vmul.f32 %v1487, 1.442695
    %v1493 = vpow.pop %v1492
    %v1494 = vmul.f32 %v1488, 1.442695
    %v1495 = vpow.pop %v1494
    %v1496 = vmul.f32 %v1489, 1.442695
    %v1497 = vpow.pop %v1496
    %v1498 = vsel %vm355, %v1491, 0.0
    %1499 = vadd.xlane.f32.xlu0 %v1498
    %v1500 = vpop.xlane.xlu0 %1499
    %v1501 = vsel %vm355, %v1493, 0.0
    %1502 = vadd.xlane.f32.xlu0 %v1501
    %v1503 = vpop.xlane.xlu0 %1502
    %v1504 = vsel %vm355, %v1495, 0.0
    %1505 = vadd.xlane.f32.xlu0 %v1504
    %v1506 = vpop.xlane.xlu0 %1505
    %v1507 = vsel %vm355, %v1497, 0.0
    %1508 = vadd.xlane.f32.xlu0 %v1507
    %v1509 = vpop.xlane.xlu0 %1508
    %v1510 = vrcp.pop %v1500
    %v1511 = vrcp.pop %v1503
    %v1512 = vrcp.pop %v1506
    %v1513 = vrcp.pop %v1509
    %v1514 = vmul.f32 %v1491, %v1510
    %v1515 = vmul.f32 %v1493, %v1511
    %v1516 = vmul.f32 %v1495, %v1512
    %v1517 = vmul.f32 %v1497, %v1513
    %1518 = vrot.lane.b32.xlu0 %v597, 32
    %v1519 = vpop.permute.xlu0 %1518
    %1520 = vrot.lane.b32.xlu0 %v602, 32
    %v1521 = vpop.permute.xlu0 %1520
    %1522 = vrot.lane.b32.xlu0 %v607, 32
    %v1523 = vpop.permute.xlu0 %1522
    %1524 = vrot.lane.b32.xlu0 %v612, 32
    %v1525 = vpop.permute.xlu0 %1524
    %v1531 = vsel %vm355, %v1514, 0
    %v1534 = vsel %vm355, %v1515, 0
    %v1537 = vsel %vm355, %v1516, 0
    %v1540 = vsel %vm355, %v1517, 0
    %1542 = vmatprep.subr.mxu0 0.0
    %1543 = vmatpush1.msra.mxu0 0.0
    %1544 = vmatprep.subr.mxu0 0.0
    %1545 = vmatpush1.msra.mxu0 0.0
    %1546 = vmatprep.subr.mxu0 0.0
    %1547 = vmatpush1.msra.mxu0 0.0
    %1548 = vmatprep.subr.mxu0 0.0
    %1549 = vmatpush1.msra.mxu0 0.0
    %1550 = vmatprep.subr.mxu0 0.0
    %1551 = vmatpush1.msra.mxu0 0.0
    %1552 = vmatprep.subr.mxu0 0.0
    %1553 = vmatpush1.msra.mxu0 0.0
    %1554 = vmatprep.subr.mxu0 0.0
    %1555 = vmatpush1.msra.mxu0 0.0
    %1556 = vmatprep.subr.mxu0 0.0
    %1557 = vmatpush1.msra.mxu0 0.0
    %1558 = vmatprep.subr.mxu0 0.0
    %1559 = vmatpush1.msra.mxu0 0.0
    %1560 = vmatprep.subr.mxu0 0.0
    %1561 = vmatpush1.msra.mxu0 0.0
    %1562 = vmatprep.subr.mxu0 0.0
    %1563 = vmatpush1.msra.mxu0 0.0
    %1564 = vmatprep.subr.mxu0 0.0
    %1565 = vmatpush1.msra.mxu0 0.0
    %1566 = vmatprep.subr.mxu0 0.0
    %1567 = vmatpush1.msra.mxu0 %v1525
    %1568 = vmatprep.subr.mxu0 0.0
    %1569 = vmatpush1.msra.mxu0 %v1523
    %1570 = vmatprep.subr.mxu0 0.0
    %1571 = vmatpush1.msra.mxu0 %v1521
    %1572 = vmatprep.subr.mxu0 0.0
    %1573 = vmatpush1.msra.mxu0 %v1519
    %1574 = vmatprep.subr.mxu0 0.0
    %1575 = vmatpush2.msra.mxu0 0.0
    %1576 = vmatprep.subr.mxu0 0.0
    %1577 = vmatpush2.msra.mxu0 0.0
    %1578 = vmatprep.subr.mxu0 0.0
    %1579 = vmatpush2.msra.mxu0 0.0
    %1580 = vmatprep.subr.mxu0 0.0
    %1581 = vmatpush2.msra.mxu0 0.0
    %1582 = vmatprep.subr.mxu0 0.0
    %1583 = vmatpush2.msra.mxu0 0.0
    %1584 = vmatprep.subr.mxu0 0.0
    %1585 = vmatpush2.msra.mxu0 0.0
    %1586 = vmatprep.subr.mxu0 0.0
    %1587 = vmatpush2.msra.mxu0 0.0
    %1588 = vmatprep.subr.mxu0 0.0
    %1589 = vmatpush2.msra.mxu0 0.0
    %1590 = vmatprep.subr.mxu0 0.0
    %1591 = vmatpush2.msra.mxu0 0.0
    %1592 = vmatprep.subr.mxu0 0.0
    %1593 = vmatpush2.msra.mxu0 0.0
    %1594 = vmatprep.subr.mxu0 0.0
    %1595 = vmatpush2.msra.mxu0 0.0
    %1596 = vmatprep.subr.mxu0 0.0
    %1597 = vmatpush2.msra.mxu0 0.0
    %1598 = vmatprep.subr.mxu0 0.0
    %1599 = vmatpush2.msra.mxu0 0.0
    %1600 = vmatprep.subr.mxu0 0.0
    %1601 = vmatpush2.msra.mxu0 0.0
    %1602 = vmatprep.subr.mxu0 0.0
    %1603 = vmatpush2.msra.mxu0 0.0
    %1604 = vmatprep.subr.mxu0 0.0
    %1605 = vmatpush2.msra.mxu0 0.0
    %1606 = vmatprep.mubr.f32.mxu0 0.0
    %1607 = vmatmul.mubr.f32.gmra.mxu0 %v1531
    %v1608 = vpop.f32.mrf.mxu0
    %v1609 = vadd.f32 0.0, %v1608
    %v1610 = vpop.f32.mrf.mxu0
    %1611 = vmatprep.mubr.f32.mxu0 0.0
    %1612 = vmatmul.mubr.f32.gmra.mxu0 %v1534
    %v1613 = vpop.f32.mrf.mxu0
    %v1614 = vadd.f32 0.0, %v1613
    %v1615 = vpop.f32.mrf.mxu0
    %1616 = vmatprep.mubr.f32.mxu0 0.0
    %1617 = vmatmul.mubr.f32.gmra.mxu0 %v1537
    %v1618 = vpop.f32.mrf.mxu0
    %v1619 = vadd.f32 0.0, %v1618
    %v1620 = vpop.f32.mrf.mxu0
    %1621 = vmatprep.mubr.f32.mxu0 0.0
    %1622 = vmatmul.mubr.f32.gmra.mxu0 %v1540
    %v1623 = vpop.f32.mrf.mxu0
    %v1624 = vadd.f32 0.0, %v1623
    %v1625 = vpop.f32.mrf.mxu0
    %1626 = vdwg.mxu0
    %v1627 = vadd.f32 %v1369, %v1609
    %v1628 = vadd.f32 %v1370, %v1614
    %v1629 = vadd.f32 %v1371, %v1619
    %v1630 = vadd.f32 %v1372, %v1624
    %v1631 = vadd.f32 %v330, %v1627
    %v1632 = vadd.f32 %v335, %v1628
    %v1633 = vadd.f32 %v340, %v1629
    %v1634 = vadd.f32 %v345, %v1630
    %v1635 = vlaneseq
    %v1636 = vshrl.u32 %v1635, 7
    %v1637 = vsub.s32 0, %v1636
    %v1638 = vrot.slane %v350, %v1637
    %v1639 = vadd.f32 %v1631, %v1638
    %v1640 = vadd.f32 %v1632, %v1638
    %v1641 = vadd.f32 %v1633, %v1638
    %v1642 = vadd.f32 %v1634, %v1638
    %v1643 = vsel %vm355, %v1639, 0.0
    %1644 = vadd.xlane.f32.xlu0 %v1643
    %v1645 = vpop.xlane.xlu0 %1644
    %v1646 = vsel %vm355, %v1640, 0.0
    %1647 = vadd.xlane.f32.xlu0 %v1646
    %v1648 = vpop.xlane.xlu0 %1647
    %v1649 = vsel %vm355, %v1641, 0.0
    %1650 = vadd.xlane.f32.xlu0 %v1649
    %v1651 = vpop.xlane.xlu0 %1650
    %v1652 = vsel %vm355, %v1642, 0.0
    %1653 = vadd.xlane.f32.xlu0 %v1652
    %v1654 = vpop.xlane.xlu0 %1653
    %v1655 = vmul.f32 %v1645, %v368
    %v1656 = vmul.f32 %v1648, %v368
    %v1657 = vmul.f32 %v1651, %v368
    %v1658 = vmul.f32 %v1654, %v368
    %v1659 = vsub.f32 %v1639, %v1655
    %v1660 = vsub.f32 %v1640, %v1656
    %v1661 = vsub.f32 %v1641, %v1657
    %v1662 = vsub.f32 %v1642, %v1658
    %v1663 = vmul.f32 %v1659, %v1659
    %v1664 = vmul.f32 %v1660, %v1660
    %v1665 = vmul.f32 %v1661, %v1661
    %v1666 = vmul.f32 %v1662, %v1662
    %v1667 = vsel %vm355, %v1663, 0.0
    %1668 = vadd.xlane.f32.xlu0 %v1667
    %v1669 = vpop.xlane.xlu0 %1668
    %v1670 = vsel %vm355, %v1664, 0.0
    %1671 = vadd.xlane.f32.xlu0 %v1670
    %v1672 = vpop.xlane.xlu0 %1671
    %v1673 = vsel %vm355, %v1665, 0.0
    %1674 = vadd.xlane.f32.xlu0 %v1673
    %v1675 = vpop.xlane.xlu0 %1674
    %v1676 = vsel %vm355, %v1666, 0.0
    %1677 = vadd.xlane.f32.xlu0 %v1676
    %v1678 = vpop.xlane.xlu0 %1677
    %v1679 = vmul.f32 %v1669, %v368
    %v1680 = vmul.f32 %v1672, %v368
    %v1681 = vmul.f32 %v1675, %v368
    %v1682 = vmul.f32 %v1678, %v368
    %v1683 = vadd.f32 %v1679, 1e-05
    %v1684 = vadd.f32 %v1680, 1e-05
    %v1685 = vadd.f32 %v1681, 1e-05
    %v1686 = vadd.f32 %v1682, 1e-05
    %v1687 = vrsqrt.pop %v1683
    %v1688 = vrsqrt.pop %v1684
    %v1689 = vrsqrt.pop %v1685
    %v1690 = vrsqrt.pop %v1686
    %v1691 = vmul.f32 %v1659, %v1687
    %v1692 = vmul.f32 %v1660, %v1688
    %v1693 = vmul.f32 %v1661, %v1689
    %v1694 = vmul.f32 %v1662, %v1690
    %v1695 = vlaneseq
    %v1696 = vshrl.u32 %v1695, 7
    %v1697 = vsub.s32 0, %v1696
    %v1698 = vrot.slane %v351, %v1697
    %v1699 = vmul.f32 %v1691, %v1698
    %v1700 = vmul.f32 %v1692, %v1698
    %v1701 = vmul.f32 %v1693, %v1698
    %v1702 = vmul.f32 %v1694, %v1698
    %v1703 = vlaneseq
    %v1704 = vshrl.u32 %v1703, 7
    %v1705 = vsub.s32 0, %v1704
    %v1706 = vrot.slane %v352, %v1705
    %v1707 = vadd.f32 %v1699, %v1706
    %v1708 = vadd.f32 %v1700, %v1706
    %v1709 = vadd.f32 %v1701, %v1706
    %v1710 = vadd.f32 %v1702, %v1706
    %v1711 = vld [vmem:[%s5] sm:$0xff]
    %v1712 = vld [vmem:[%s5 + $0x8] sm:$0xff]
    %v1713 = vld [vmem:[%s5 + $0x10] sm:$0xff]
    %v1714 = vld [vmem:[%s5 + $0x18] sm:$0xff]
    %v1715 = vlaneseq
    %v1716 = vshrl.u32 %v1715, 7
    %v1717 = vsub.s32 0, %v1716
    %v1718 = vrot.slane %v354, %v1717
    %v1720 = vsel %vm355, %v1707, 0
    %v1723 = vsel %vm355, %v1708, 0
    %v1726 = vsel %vm355, %v1709, 0
    %v1729 = vsel %vm355, %v1710, 0
    %1731 = vmatprep.subr.mxu0 0.0
    %1732 = vmatpush1.msra.mxu0 0.0
    %1733 = vmatprep.subr.mxu0 0.0
    %1734 = vmatpush1.msra.mxu0 0.0
    %1735 = vmatprep.subr.mxu0 0.0
    %1736 = vmatpush1.msra.mxu0 0.0
    %1737 = vmatprep.subr.mxu0 0.0
    %1738 = vmatpush1.msra.mxu0 0.0
    %1739 = vmatprep.subr.mxu0 0.0
    %1740 = vmatpush1.msra.mxu0 0.0
    %1741 = vmatprep.subr.mxu0 0.0
    %1742 = vmatpush1.msra.mxu0 0.0
    %1743 = vmatprep.subr.mxu0 0.0
    %1744 = vmatpush1.msra.mxu0 0.0
    %1745 = vmatprep.subr.mxu0 0.0
    %1746 = vmatpush1.msra.mxu0 0.0
    %1747 = vmatprep.subr.mxu0 0.0
    %1748 = vmatpush1.msra.mxu0 0.0
    %1749 = vmatprep.subr.mxu0 0.0
    %1750 = vmatpush1.msra.mxu0 0.0
    %1751 = vmatprep.subr.mxu0 0.0
    %1752 = vmatpush1.msra.mxu0 0.0
    %1753 = vmatprep.subr.mxu0 0.0
    %1754 = vmatpush1.msra.mxu0 0.0
    %1755 = vmatprep.subr.mxu0 0.0
    %1756 = vmatpush1.msra.mxu0 %v1714
    %1757 = vmatprep.subr.mxu0 0.0
    %1758 = vmatpush1.msra.mxu0 %v1713
    %1759 = vmatprep.subr.mxu0 0.0
    %1760 = vmatpush1.msra.mxu0 %v1712
    %1761 = vmatprep.subr.mxu0 0.0
    %1762 = vmatpush1.msra.mxu0 %v1711
    %1763 = vmatprep.subr.mxu0 0.0
    %1764 = vmatpush2.msra.mxu0 0.0
    %1765 = vmatprep.subr.mxu0 0.0
    %1766 = vmatpush2.msra.mxu0 0.0
    %1767 = vmatprep.subr.mxu0 0.0
    %1768 = vmatpush2.msra.mxu0 0.0
    %1769 = vmatprep.subr.mxu0 0.0
    %1770 = vmatpush2.msra.mxu0 0.0
    %1771 = vmatprep.subr.mxu0 0.0
    %1772 = vmatpush2.msra.mxu0 0.0
    %1773 = vmatprep.subr.mxu0 0.0
    %1774 = vmatpush2.msra.mxu0 0.0
    %1775 = vmatprep.subr.mxu0 0.0
    %1776 = vmatpush2.msra.mxu0 0.0
    %1777 = vmatprep.subr.mxu0 0.0
    %1778 = vmatpush2.msra.mxu0 0.0
    %1779 = vmatprep.subr.mxu0 0.0
    %1780 = vmatpush2.msra.mxu0 0.0
    %1781 = vmatprep.subr.mxu0 0.0
    %1782 = vmatpush2.msra.mxu0 0.0
    %1783 = vmatprep.subr.mxu0 0.0
    %1784 = vmatpush2.msra.mxu0 0.0
    %1785 = vmatprep.subr.mxu0 0.0
    %1786 = vmatpush2.msra.mxu0 0.0
    %1787 = vmatprep.subr.mxu0 0.0
    %1788 = vmatpush2.msra.mxu0 0.0
    %1789 = vmatprep.subr.mxu0 0.0
    %1790 = vmatpush2.msra.mxu0 0.0
    %1791 = vmatprep.subr.mxu0 0.0
    %1792 = vmatpush2.msra.mxu0 0.0
    %1793 = vmatprep.subr.mxu0 0.0
    %1794 = vmatpush2.msra.mxu0 0.0
    %1795 = vmatprep.mubr.f32.mxu0 0.0
    %1796 = vmatmul.mubr.f32.gmra.mxu0 %v1720
    %v1797 = vpop.f32.mrf.mxu0
    %v1798 = vadd.f32 %v1718, %v1797
    %v1799 = vpop.f32.mrf.mxu0
    %1800 = vmatprep.mubr.f32.mxu0 0.0
    %1801 = vmatmul.mubr.f32.gmra.mxu0 %v1723
    %v1802 = vpop.f32.mrf.mxu0
    %v1803 = vadd.f32 %v1718, %v1802
    %v1804 = vpop.f32.mrf.mxu0
    %1805 = vmatprep.mubr.f32.mxu0 0.0
    %1806 = vmatmul.mubr.f32.gmra.mxu0 %v1726
    %v1807 = vpop.f32.mrf.mxu0
    %v1808 = vadd.f32 %v1718, %v1807
    %v1809 = vpop.f32.mrf.mxu0
    %1810 = vmatprep.mubr.f32.mxu0 0.0
    %1811 = vmatmul.mubr.f32.gmra.mxu0 %v1729
    %v1812 = vpop.f32.mrf.mxu0
    %v1813 = vadd.f32 %v1718, %v1812
    %v1814 = vpop.f32.mrf.mxu0
    %1815 = vdwg.mxu0
    %v1816 = vmul.f32 %v1798, 0.5
    %v1817 = vmul.f32 %v1803, 0.5
    %v1818 = vmul.f32 %v1808, 0.5
    %v1819 = vmul.f32 %v1813, 0.5
    %v1820 = vmul.f32 %v1798, 0.70710677
    %v1821 = vmul.f32 %v1803, 0.70710677
    %v1822 = vmul.f32 %v1808, 0.70710677
    %v1823 = vmul.f32 %v1813, 0.70710677
    %v1824 = verf.f32.pop %v1820
    %v1825 = verf.f32.pop %v1821
    %v1826 = verf.f32.pop %v1822
    %v1827 = verf.f32.pop %v1823
    %v1828 = vadd.f32 %v1824, 1.0
    %v1829 = vadd.f32 %v1825, 1.0
    %v1830 = vadd.f32 %v1826, 1.0
    %v1831 = vadd.f32 %v1827, 1.0
    %v1832 = vmul.f32 %v1816, %v1828
    %v1833 = vmul.f32 %v1817, %v1829
    %v1834 = vmul.f32 %v1818, %v1830
    %v1835 = vmul.f32 %v1819, %v1831
    %v1836 = vld [vmem:[%s6] sm:$0xff]
    %v1837 = vld [vmem:[%s6 + $0x8] sm:$0xff]
    %v1838 = vld [vmem:[%s6 + $0x10] sm:$0xff]
    %v1839 = vld [vmem:[%s6 + $0x18] sm:$0xff]
    %v1840 = vld [vmem:[%s6 + $0x20] sm:$0xff]
    %v1841 = vld [vmem:[%s6 + $0x28] sm:$0xff]
    %v1842 = vld [vmem:[%s6 + $0x30] sm:$0xff]
    %v1843 = vld [vmem:[%s6 + $0x38] sm:$0xff]
    %v1845 = vsel %vm66, %v1832, 0
    %v1848 = vsel %vm66, %v1833, 0
    %v1851 = vsel %vm66, %v1834, 0
    %v1854 = vsel %vm66, %v1835, 0
    %1856 = vmatprep.subr.mxu0 0.0
    %1857 = vmatpush1.msra.mxu0 0.0
    %1858 = vmatprep.subr.mxu0 0.0
    %1859 = vmatpush1.msra.mxu0 0.0
    %1860 = vmatprep.subr.mxu0 0.0
    %1861 = vmatpush1.msra.mxu0 0.0
    %1862 = vmatprep.subr.mxu0 0.0
    %1863 = vmatpush1.msra.mxu0 0.0
    %1864 = vmatprep.subr.mxu0 0.0
    %1865 = vmatpush1.msra.mxu0 0.0
    %1866 = vmatprep.subr.mxu0 0.0
    %1867 = vmatpush1.msra.mxu0 0.0
    %1868 = vmatprep.subr.mxu0 0.0
    %1869 = vmatpush1.msra.mxu0 0.0
    %1870 = vmatprep.subr.mxu0 0.0
    %1871 = vmatpush1.msra.mxu0 0.0
    %1872 = vmatprep.subr.mxu0 0.0
    %1873 = vmatpush1.msra.mxu0 %v1843
    %1874 = vmatprep.subr.mxu0 0.0
    %1875 = vmatpush1.msra.mxu0 %v1842
    %1876 = vmatprep.subr.mxu0 0.0
    %1877 = vmatpush1.msra.mxu0 %v1841
    %1878 = vmatprep.subr.mxu0 0.0
    %1879 = vmatpush1.msra.mxu0 %v1840
    %1880 = vmatprep.subr.mxu0 0.0
    %1881 = vmatpush1.msra.mxu0 %v1839
    %1882 = vmatprep.subr.mxu0 0.0
    %1883 = vmatpush1.msra.mxu0 %v1838
    %1884 = vmatprep.subr.mxu0 0.0
    %1885 = vmatpush1.msra.mxu0 %v1837
    %1886 = vmatprep.subr.mxu0 0.0
    %1887 = vmatpush1.msra.mxu0 %v1836
    %1888 = vmatprep.subr.mxu0 0.0
    %1889 = vmatpush2.msra.mxu0 0.0
    %1890 = vmatprep.subr.mxu0 0.0
    %1891 = vmatpush2.msra.mxu0 0.0
    %1892 = vmatprep.subr.mxu0 0.0
    %1893 = vmatpush2.msra.mxu0 0.0
    %1894 = vmatprep.subr.mxu0 0.0
    %1895 = vmatpush2.msra.mxu0 0.0
    %1896 = vmatprep.subr.mxu0 0.0
    %1897 = vmatpush2.msra.mxu0 0.0
    %1898 = vmatprep.subr.mxu0 0.0
    %1899 = vmatpush2.msra.mxu0 0.0
    %1900 = vmatprep.subr.mxu0 0.0
    %1901 = vmatpush2.msra.mxu0 0.0
    %1902 = vmatprep.subr.mxu0 0.0
    %1903 = vmatpush2.msra.mxu0 0.0
    %1904 = vmatprep.subr.mxu0 0.0
    %1905 = vmatpush2.msra.mxu0 0.0
    %1906 = vmatprep.subr.mxu0 0.0
    %1907 = vmatpush2.msra.mxu0 0.0
    %1908 = vmatprep.subr.mxu0 0.0
    %1909 = vmatpush2.msra.mxu0 0.0
    %1910 = vmatprep.subr.mxu0 0.0
    %1911 = vmatpush2.msra.mxu0 0.0
    %1912 = vmatprep.subr.mxu0 0.0
    %1913 = vmatpush2.msra.mxu0 0.0
    %1914 = vmatprep.subr.mxu0 0.0
    %1915 = vmatpush2.msra.mxu0 0.0
    %1916 = vmatprep.subr.mxu0 0.0
    %1917 = vmatpush2.msra.mxu0 0.0
    %1918 = vmatprep.subr.mxu0 0.0
    %1919 = vmatpush2.msra.mxu0 0.0
    %1920 = vmatprep.mubr.f32.mxu0 0.0
    %1921 = vmatmul.mubr.f32.gmra.mxu0 %v1845
    %v1922 = vpop.f32.mrf.mxu0
    %v1923 = vadd.f32 0.0, %v1922
    %v1924 = vpop.f32.mrf.mxu0
    %1925 = vmatprep.mubr.f32.mxu0 0.0
    %1926 = vmatmul.mubr.f32.gmra.mxu0 %v1848
    %v1927 = vpop.f32.mrf.mxu0
    %v1928 = vadd.f32 0.0, %v1927
    %v1929 = vpop.f32.mrf.mxu0
    %1930 = vmatprep.mubr.f32.mxu0 0.0
    %1931 = vmatmul.mubr.f32.gmra.mxu0 %v1851
    %v1932 = vpop.f32.mrf.mxu0
    %v1933 = vadd.f32 0.0, %v1932
    %v1934 = vpop.f32.mrf.mxu0
    %1935 = vmatprep.mubr.f32.mxu0 0.0
    %1936 = vmatmul.mubr.f32.gmra.mxu0 %v1854
    %v1937 = vpop.f32.mrf.mxu0
    %v1938 = vadd.f32 0.0, %v1937
    %v1939 = vpop.f32.mrf.mxu0
    %1940 = vdwg.mxu0
    %v1941 = vadd.f32 %v1639, %v1923
    %v1942 = vadd.f32 %v1640, %v1928
    %v1943 = vadd.f32 %v1641, %v1933
    %v1944 = vadd.f32 %v1642, %v1938
    %v1945 = vlaneseq
    %v1946 = vshrl.u32 %v1945, 7
    %v1947 = vsub.s32 0, %v1946
    %v1948 = vrot.slane %v353, %v1947
    %v1949 = vadd.f32 %v1941, %v1948
    %v1950 = vadd.f32 %v1942, %v1948
    %v1951 = vadd.f32 %v1943, %v1948
    %v1952 = vadd.f32 %v1944, %v1948
    %v1953 = vld [vmem:[%s9 + $0x9] sm:$0x1]
    %v1954 = vld [vmem:[%s9 + $0xa] sm:$0x1]
    %v1955 = vld [vmem:[%s9 + $0xb] sm:$0x1]
    %v1956 = vld [vmem:[%s9 + $0xc] sm:$0x1]
    %v1957 = vld [vmem:[%s9 + $0xd] sm:$0x1]
    %v1958 = vld [vmem:[%s9 + $0xe] sm:$0x1]
    %v1959 = vld [vmem:[%s10 + $0x2] sm:$0x1]
    %v1960 = vsel %vm355, %v1949, 0.0
    %1961 = vadd.xlane.f32.xlu0 %v1960
    %v1962 = vpop.xlane.xlu0 %1961
    %v1963 = vsel %vm355, %v1950, 0.0
    %1964 = vadd.xlane.f32.xlu0 %v1963
    %v1965 = vpop.xlane.xlu0 %1964
    %v1966 = vsel %vm355, %v1951, 0.0
    %1967 = vadd.xlane.f32.xlu0 %v1966
    %v1968 = vpop.xlane.xlu0 %1967
    %v1969 = vsel %vm355, %v1952, 0.0
    %1970 = vadd.xlane.f32.xlu0 %v1969
    %v1971 = vpop.xlane.xlu0 %1970
    %v1972 = vmul.f32 %v1962, %v368
    %v1973 = vmul.f32 %v1965, %v368
    %v1974 = vmul.f32 %v1968, %v368
    %v1975 = vmul.f32 %v1971, %v368
    %v1976 = vsub.f32 %v1949, %v1972
    %v1977 = vsub.f32 %v1950, %v1973
    %v1978 = vsub.f32 %v1951, %v1974
    %v1979 = vsub.f32 %v1952, %v1975
    %v1980 = vmul.f32 %v1976, %v1976
    %v1981 = vmul.f32 %v1977, %v1977
    %v1982 = vmul.f32 %v1978, %v1978
    %v1983 = vmul.f32 %v1979, %v1979
    %v1984 = vsel %vm355, %v1980, 0.0
    %1985 = vadd.xlane.f32.xlu0 %v1984
    %v1986 = vpop.xlane.xlu0 %1985
    %v1987 = vsel %vm355, %v1981, 0.0
    %1988 = vadd.xlane.f32.xlu0 %v1987
    %v1989 = vpop.xlane.xlu0 %1988
    %v1990 = vsel %vm355, %v1982, 0.0
    %1991 = vadd.xlane.f32.xlu0 %v1990
    %v1992 = vpop.xlane.xlu0 %1991
    %v1993 = vsel %vm355, %v1983, 0.0
    %1994 = vadd.xlane.f32.xlu0 %v1993
    %v1995 = vpop.xlane.xlu0 %1994
    %v1996 = vmul.f32 %v1986, %v368
    %v1997 = vmul.f32 %v1989, %v368
    %v1998 = vmul.f32 %v1992, %v368
    %v1999 = vmul.f32 %v1995, %v368
    %v2000 = vadd.f32 %v1996, 1e-05
    %v2001 = vadd.f32 %v1997, 1e-05
    %v2002 = vadd.f32 %v1998, 1e-05
    %v2003 = vadd.f32 %v1999, 1e-05
    %v2004 = vrsqrt.pop %v2000
    %v2005 = vrsqrt.pop %v2001
    %v2006 = vrsqrt.pop %v2002
    %v2007 = vrsqrt.pop %v2003
    %v2008 = vmul.f32 %v1976, %v2004
    %v2009 = vmul.f32 %v1977, %v2005
    %v2010 = vmul.f32 %v1978, %v2006
    %v2011 = vmul.f32 %v1979, %v2007
    %v2012 = vlaneseq
    %v2013 = vshrl.u32 %v2012, 7
    %v2014 = vsub.s32 0, %v2013
    %v2015 = vrot.slane %v1953, %v2014
    %v2016 = vmul.f32 %v2008, %v2015
    %v2017 = vmul.f32 %v2009, %v2015
    %v2018 = vmul.f32 %v2010, %v2015
    %v2019 = vmul.f32 %v2011, %v2015
    %v2020 = vlaneseq
    %v2021 = vshrl.u32 %v2020, 7
    %v2022 = vsub.s32 0, %v2021
    %v2023 = vrot.slane %v1954, %v2022
    %v2024 = vadd.f32 %v2016, %v2023
    %v2025 = vadd.f32 %v2017, %v2023
    %v2026 = vadd.f32 %v2018, %v2023
    %v2027 = vadd.f32 %v2019, %v2023
    %s2028 = scalar_lea.vmem %s3, 32
    %v2029 = vld [vmem:[%s2028] sm:$0xff]
    %v2030 = vld [vmem:[%s2028 + $0x8] sm:$0xff]
    %v2031 = vld [vmem:[%s2028 + $0x10] sm:$0xff]
    %v2032 = vld [vmem:[%s2028 + $0x18] sm:$0xff]
    %v2034 = vsel %vm355, %v2024, 0
    %v2037 = vsel %vm355, %v2025, 0
    %v2040 = vsel %vm355, %v2026, 0
    %v2043 = vsel %vm355, %v2027, 0
    %2045 = vmatprep.subr.mxu0 0.0
    %2046 = vmatpush1.msra.mxu0 0.0
    %2047 = vmatprep.subr.mxu0 0.0
    %2048 = vmatpush1.msra.mxu0 0.0
    %2049 = vmatprep.subr.mxu0 0.0
    %2050 = vmatpush1.msra.mxu0 0.0
    %2051 = vmatprep.subr.mxu0 0.0
    %2052 = vmatpush1.msra.mxu0 0.0
    %2053 = vmatprep.subr.mxu0 0.0
    %2054 = vmatpush1.msra.mxu0 0.0
    %2055 = vmatprep.subr.mxu0 0.0
    %2056 = vmatpush1.msra.mxu0 0.0
    %2057 = vmatprep.subr.mxu0 0.0
    %2058 = vmatpush1.msra.mxu0 0.0
    %2059 = vmatprep.subr.mxu0 0.0
    %2060 = vmatpush1.msra.mxu0 0.0
    %2061 = vmatprep.subr.mxu0 0.0
    %2062 = vmatpush1.msra.mxu0 0.0
    %2063 = vmatprep.subr.mxu0 0.0
    %2064 = vmatpush1.msra.mxu0 0.0
    %2065 = vmatprep.subr.mxu0 0.0
    %2066 = vmatpush1.msra.mxu0 0.0
    %2067 = vmatprep.subr.mxu0 0.0
    %2068 = vmatpush1.msra.mxu0 0.0
    %2069 = vmatprep.subr.mxu0 0.0
    %2070 = vmatpush1.msra.mxu0 %v2032
    %2071 = vmatprep.subr.mxu0 0.0
    %2072 = vmatpush1.msra.mxu0 %v2031
    %2073 = vmatprep.subr.mxu0 0.0
    %2074 = vmatpush1.msra.mxu0 %v2030
    %2075 = vmatprep.subr.mxu0 0.0
    %2076 = vmatpush1.msra.mxu0 %v2029
    %2077 = vmatprep.subr.mxu0 0.0
    %2078 = vmatpush2.msra.mxu0 0.0
    %2079 = vmatprep.subr.mxu0 0.0
    %2080 = vmatpush2.msra.mxu0 0.0
    %2081 = vmatprep.subr.mxu0 0.0
    %2082 = vmatpush2.msra.mxu0 0.0
    %2083 = vmatprep.subr.mxu0 0.0
    %2084 = vmatpush2.msra.mxu0 0.0
    %2085 = vmatprep.subr.mxu0 0.0
    %2086 = vmatpush2.msra.mxu0 0.0
    %2087 = vmatprep.subr.mxu0 0.0
    %2088 = vmatpush2.msra.mxu0 0.0
    %2089 = vmatprep.subr.mxu0 0.0
    %2090 = vmatpush2.msra.mxu0 0.0
    %2091 = vmatprep.subr.mxu0 0.0
    %2092 = vmatpush2.msra.mxu0 0.0
    %2093 = vmatprep.subr.mxu0 0.0
    %2094 = vmatpush2.msra.mxu0 0.0
    %2095 = vmatprep.subr.mxu0 0.0
    %2096 = vmatpush2.msra.mxu0 0.0
    %2097 = vmatprep.subr.mxu0 0.0
    %2098 = vmatpush2.msra.mxu0 0.0
    %2099 = vmatprep.subr.mxu0 0.0
    %2100 = vmatpush2.msra.mxu0 0.0
    %2101 = vmatprep.subr.mxu0 0.0
    %2102 = vmatpush2.msra.mxu0 0.0
    %2103 = vmatprep.subr.mxu0 0.0
    %2104 = vmatpush2.msra.mxu0 0.0
    %2105 = vmatprep.subr.mxu0 0.0
    %2106 = vmatpush2.msra.mxu0 0.0
    %2107 = vmatprep.subr.mxu0 0.0
    %2108 = vmatpush2.msra.mxu0 0.0
    %2109 = vmatprep.mubr.f32.mxu0 0.0
    %2110 = vmatmul.mubr.f32.gmra.mxu0 %v2034
    %v2111 = vpop.f32.mrf.mxu0
    %v2112 = vadd.f32 0.0, %v2111
    %v2113 = vpop.f32.mrf.mxu0
    %2114 = vmatprep.mubr.f32.mxu0 0.0
    %2115 = vmatmul.mubr.f32.gmra.mxu0 %v2037
    %v2116 = vpop.f32.mrf.mxu0
    %v2117 = vadd.f32 0.0, %v2116
    %v2118 = vpop.f32.mrf.mxu0
    %2119 = vmatprep.mubr.f32.mxu0 0.0
    %2120 = vmatmul.mubr.f32.gmra.mxu0 %v2040
    %v2121 = vpop.f32.mrf.mxu0
    %v2122 = vadd.f32 0.0, %v2121
    %v2123 = vpop.f32.mrf.mxu0
    %2124 = vmatprep.mubr.f32.mxu0 0.0
    %2125 = vmatmul.mubr.f32.gmra.mxu0 %v2043
    %v2126 = vpop.f32.mrf.mxu0
    %v2127 = vadd.f32 0.0, %v2126
    %v2128 = vpop.f32.mrf.mxu0
    %2129 = vdwg.mxu0
    %s2130 = scalar_lea.vmem %s4, 32
    %v2131 = vld [vmem:[%s2130] sm:$0xff]
    %v2132 = vld [vmem:[%s2130 + $0x8] sm:$0xff]
    %v2133 = vld [vmem:[%s2130 + $0x10] sm:$0xff]
    %v2134 = vld [vmem:[%s2130 + $0x18] sm:$0xff]
    %2135 = vmatprep.subr.mxu0 0.0
    %2136 = vmatpush1.msra.mxu0 0.0
    %2137 = vmatprep.subr.mxu0 0.0
    %2138 = vmatpush1.msra.mxu0 0.0
    %2139 = vmatprep.subr.mxu0 0.0
    %2140 = vmatpush1.msra.mxu0 0.0
    %2141 = vmatprep.subr.mxu0 0.0
    %2142 = vmatpush1.msra.mxu0 0.0
    %2143 = vmatprep.subr.mxu0 0.0
    %2144 = vmatpush1.msra.mxu0 0.0
    %2145 = vmatprep.subr.mxu0 0.0
    %2146 = vmatpush1.msra.mxu0 0.0
    %2147 = vmatprep.subr.mxu0 0.0
    %2148 = vmatpush1.msra.mxu0 0.0
    %2149 = vmatprep.subr.mxu0 0.0
    %2150 = vmatpush1.msra.mxu0 0.0
    %2151 = vmatprep.subr.mxu0 0.0
    %2152 = vmatpush1.msra.mxu0 0.0
    %2153 = vmatprep.subr.mxu0 0.0
    %2154 = vmatpush1.msra.mxu0 0.0
    %2155 = vmatprep.subr.mxu0 0.0
    %2156 = vmatpush1.msra.mxu0 0.0
    %2157 = vmatprep.subr.mxu0 0.0
    %2158 = vmatpush1.msra.mxu0 0.0
    %2159 = vmatprep.subr.mxu0 0.0
    %2160 = vmatpush1.msra.mxu0 %v2134
    %2161 = vmatprep.subr.mxu0 0.0
    %2162 = vmatpush1.msra.mxu0 %v2133
    %2163 = vmatprep.subr.mxu0 0.0
    %2164 = vmatpush1.msra.mxu0 %v2132
    %2165 = vmatprep.subr.mxu0 0.0
    %2166 = vmatpush1.msra.mxu0 %v2131
    %2167 = vmatprep.subr.mxu0 0.0
    %2168 = vmatpush2.msra.mxu0 0.0
    %2169 = vmatprep.subr.mxu0 0.0
    %2170 = vmatpush2.msra.mxu0 0.0
    %2171 = vmatprep.subr.mxu0 0.0
    %2172 = vmatpush2.msra.mxu0 0.0
    %2173 = vmatprep.subr.mxu0 0.0
    %2174 = vmatpush2.msra.mxu0 0.0
    %2175 = vmatprep.subr.mxu0 0.0
    %2176 = vmatpush2.msra.mxu0 0.0
    %2177 = vmatprep.subr.mxu0 0.0
    %2178 = vmatpush2.msra.mxu0 0.0
    %2179 = vmatprep.subr.mxu0 0.0
    %2180 = vmatpush2.msra.mxu0 0.0
    %2181 = vmatprep.subr.mxu0 0.0
    %2182 = vmatpush2.msra.mxu0 0.0
    %2183 = vmatprep.subr.mxu0 0.0
    %2184 = vmatpush2.msra.mxu0 0.0
    %2185 = vmatprep.subr.mxu0 0.0
    %2186 = vmatpush2.msra.mxu0 0.0
    %2187 = vmatprep.subr.mxu0 0.0
    %2188 = vmatpush2.msra.mxu0 0.0
    %2189 = vmatprep.subr.mxu0 0.0
    %2190 = vmatpush2.msra.mxu0 0.0
    %2191 = vmatprep.subr.mxu0 0.0
    %2192 = vmatpush2.msra.mxu0 0.0
    %2193 = vmatprep.subr.mxu0 0.0
    %2194 = vmatpush2.msra.mxu0 0.0
    %2195 = vmatprep.subr.mxu0 0.0
    %2196 = vmatpush2.msra.mxu0 0.0
    %2197 = vmatprep.subr.mxu0 0.0
    %2198 = vmatpush2.msra.mxu0 0.0
    %2199 = vmatprep.mubr.f32.mxu0 0.0
    %2200 = vmatmul.mubr.f32.gmra.mxu0 %v2034
    %v2201 = vpop.f32.mrf.mxu0
    %v2202 = vadd.f32 0.0, %v2201
    %v2203 = vpop.f32.mrf.mxu0
    %2204 = vmatprep.mubr.f32.mxu0 0.0
    %2205 = vmatmul.mubr.f32.gmra.mxu0 %v2037
    %v2206 = vpop.f32.mrf.mxu0
    %v2207 = vadd.f32 0.0, %v2206
    %v2208 = vpop.f32.mrf.mxu0
    %2209 = vmatprep.mubr.f32.mxu0 0.0
    %2210 = vmatmul.mubr.f32.gmra.mxu0 %v2040
    %v2211 = vpop.f32.mrf.mxu0
    %v2212 = vadd.f32 0.0, %v2211
    %v2213 = vpop.f32.mrf.mxu0
    %2214 = vmatprep.mubr.f32.mxu0 0.0
    %2215 = vmatmul.mubr.f32.gmra.mxu0 %v2043
    %v2216 = vpop.f32.mrf.mxu0
    %v2217 = vadd.f32 0.0, %v2216
    %v2218 = vpop.f32.mrf.mxu0
    %2219 = vdwg.mxu0
    %v2221 = vsel %vm355, %v2112, 0
    %v2224 = vsel %vm355, %v2117, 0
    %v2227 = vsel %vm355, %v2122, 0
    %v2230 = vsel %vm355, %v2127, 0
    %2232 = vmatprep.subr.mxu0 0.0
    %2233 = vmatpush1.xpose.msra.mxu0 0.0
    %2234 = vmatprep.subr.mxu0 0.0
    %2235 = vmatpush1.xpose.msra.mxu0 0.0
    %2236 = vmatprep.subr.mxu0 0.0
    %2237 = vmatpush1.xpose.msra.mxu0 0.0
    %2238 = vmatprep.subr.mxu0 0.0
    %2239 = vmatpush1.xpose.msra.mxu0 0.0
    %2240 = vmatprep.subr.mxu0 0.0
    %2241 = vmatpush1.xpose.msra.mxu0 0.0
    %2242 = vmatprep.subr.mxu0 0.0
    %2243 = vmatpush1.xpose.msra.mxu0 0.0
    %2244 = vmatprep.subr.mxu0 0.0
    %2245 = vmatpush1.xpose.msra.mxu0 0.0
    %2246 = vmatprep.subr.mxu0 0.0
    %2247 = vmatpush1.xpose.msra.mxu0 0.0
    %2248 = vmatprep.subr.mxu0 0.0
    %2249 = vmatpush1.xpose.msra.mxu0 0.0
    %2250 = vmatprep.subr.mxu0 0.0
    %2251 = vmatpush1.xpose.msra.mxu0 0.0
    %2252 = vmatprep.subr.mxu0 0.0
    %2253 = vmatpush1.xpose.msra.mxu0 0.0
    %2254 = vmatprep.subr.mxu0 0.0
    %2255 = vmatpush1.xpose.msra.mxu0 0.0
    %2256 = vmatprep.subr.mxu0 0.0
    %2257 = vmatpush1.xpose.msra.mxu0 %v2043
    %2258 = vmatprep.subr.mxu0 0.0
    %2259 = vmatpush1.xpose.msra.mxu0 %v2040
    %2260 = vmatprep.subr.mxu0 0.0
    %2261 = vmatpush1.xpose.msra.mxu0 %v2037
    %2262 = vmatprep.subr.mxu0 0.0
    %2263 = vmatpush1.xpose.msra.mxu0 %v2034
    %2264 = vmatprep.subr.mxu0 0.0
    %2265 = vmatpush2.xpose.msra.mxu0 0.0
    %2266 = vmatprep.subr.mxu0 0.0
    %2267 = vmatpush2.xpose.msra.mxu0 0.0
    %2268 = vmatprep.subr.mxu0 0.0
    %2269 = vmatpush2.xpose.msra.mxu0 0.0
    %2270 = vmatprep.subr.mxu0 0.0
    %2271 = vmatpush2.xpose.msra.mxu0 0.0
    %2272 = vmatprep.subr.mxu0 0.0
    %2273 = vmatpush2.xpose.msra.mxu0 0.0
    %2274 = vmatprep.subr.mxu0 0.0
    %2275 = vmatpush2.xpose.msra.mxu0 0.0
    %2276 = vmatprep.subr.mxu0 0.0
    %2277 = vmatpush2.xpose.msra.mxu0 0.0
    %2278 = vmatprep.subr.mxu0 0.0
    %2279 = vmatpush2.xpose.msra.mxu0 0.0
    %2280 = vmatprep.subr.mxu0 0.0
    %2281 = vmatpush2.xpose.msra.mxu0 0.0
    %2282 = vmatprep.subr.mxu0 0.0
    %2283 = vmatpush2.xpose.msra.mxu0 0.0
    %2284 = vmatprep.subr.mxu0 0.0
    %2285 = vmatpush2.xpose.msra.mxu0 0.0
    %2286 = vmatprep.subr.mxu0 0.0
    %2287 = vmatpush2.xpose.msra.mxu0 0.0
    %2288 = vmatprep.subr.mxu0 0.0
    %2289 = vmatpush2.xpose.msra.mxu0 0.0
    %2290 = vmatprep.subr.mxu0 0.0
    %2291 = vmatpush2.xpose.msra.mxu0 0.0
    %2292 = vmatprep.subr.mxu0 0.0
    %2293 = vmatpush2.xpose.msra.mxu0 0.0
    %2294 = vmatprep.subr.mxu0 0.0
    %2295 = vmatpush2.xpose.msra.mxu0 0.0
    %2296 = vmatprep.mubr.f32.mxu0 0.0
    %2297 = vmatmul.mubr.f32.gmra.mxu0 %v2221
    %v2298 = vpop.f32.mrf.mxu0
    %v2299 = vadd.f32 %v615, %v2298
    %v2300 = vpop.f32.mrf.mxu0
    %2301 = vmatprep.mubr.f32.mxu0 0.0
    %2302 = vmatmul.mubr.f32.gmra.mxu0 %v2224
    %v2303 = vpop.f32.mrf.mxu0
    %v2304 = vadd.f32 %v616, %v2303
    %v2305 = vpop.f32.mrf.mxu0
    %2306 = vmatprep.mubr.f32.mxu0 0.0
    %2307 = vmatmul.mubr.f32.gmra.mxu0 %v2227
    %v2308 = vpop.f32.mrf.mxu0
    %v2309 = vadd.f32 %v617, %v2308
    %v2310 = vpop.f32.mrf.mxu0
    %2311 = vmatprep.mubr.f32.mxu0 0.0
    %2312 = vmatmul.mubr.f32.gmra.mxu0 %v2230
    %v2313 = vpop.f32.mrf.mxu0
    %v2314 = vadd.f32 %v618, %v2313
    %v2315 = vpop.f32.mrf.mxu0
    %2316 = vdwg.mxu0
    %v2317 = vsel %vm355, %v2299, -inf
    %2318 = vmax.xlane.f32.xlu0 %v2317
    %v2319 = vpop.xlane.xlu0 %2318
    %v2320 = vsel %vm355, %v2304, -inf
    %2321 = vmax.xlane.f32.xlu0 %v2320
    %v2322 = vpop.xlane.xlu0 %2321
    %v2323 = vsel %vm355, %v2309, -inf
    %2324 = vmax.xlane.f32.xlu0 %v2323
    %v2325 = vpop.xlane.xlu0 %2324
    %v2326 = vsel %vm355, %v2314, -inf
    %2327 = vmax.xlane.f32.xlu0 %v2326
    %v2328 = vpop.xlane.xlu0 %2327
    %v2329 = vsub.f32 %v2299, %v2319
    %v2330 = vsub.f32 %v2304, %v2322
    %v2331 = vsub.f32 %v2309, %v2325
    %v2332 = vsub.f32 %v2314, %v2328
    %v2333 = vmul.f32 %v2329, 1.442695
    %v2334 = vpow.pop %v2333
    %v2335 = vmul.f32 %v2330, 1.442695
    %v2336 = vpow.pop %v2335
    %v2337 = vmul.f32 %v2331, 1.442695
    %v2338 = vpow.pop %v2337
    %v2339 = vmul.f32 %v2332, 1.442695
    %v2340 = vpow.pop %v2339
    %v2341 = vsel %vm355, %v2334, 0.0
    %2342 = vadd.xlane.f32.xlu0 %v2341
    %v2343 = vpop.xlane.xlu0 %2342
    %v2344 = vsel %vm355, %v2336, 0.0
    %2345 = vadd.xlane.f32.xlu0 %v2344
    %v2346 = vpop.xlane.xlu0 %2345
    %v2347 = vsel %vm355, %v2338, 0.0
    %2348 = vadd.xlane.f32.xlu0 %v2347
    %v2349 = vpop.xlane.xlu0 %2348
    %v2350 = vsel %vm355, %v2340, 0.0
    %2351 = vadd.xlane.f32.xlu0 %v2350
    %v2352 = vpop.xlane.xlu0 %2351
    %v2353 = vrcp.pop %v2343
    %v2354 = vrcp.pop %v2346
    %v2355 = vrcp.pop %v2349
    %v2356 = vrcp.pop %v2352
    %v2357 = vmul.f32 %v2334, %v2353
    %v2358 = vmul.f32 %v2336, %v2354
    %v2359 = vmul.f32 %v2338, %v2355
    %v2360 = vmul.f32 %v2340, %v2356
    %2361 = vrot.lane.b32.xlu0 %v2112, 96
    %v2362 = vpop.permute.xlu0 %2361
    %2363 = vrot.lane.b32.xlu0 %v2117, 96
    %v2364 = vpop.permute.xlu0 %2363
    %2365 = vrot.lane.b32.xlu0 %v2122, 96
    %v2366 = vpop.permute.xlu0 %2365
    %2367 = vrot.lane.b32.xlu0 %v2127, 96
    %v2368 = vpop.permute.xlu0 %2367
    %v2369 = vsel %vm355, %v2362, 0
    %v2371 = vsel %vm355, %v2364, 0
    %v2373 = vsel %vm355, %v2366, 0
    %v2375 = vsel %vm355, %v2368, 0
    %2377 = vmatprep.subr.mxu0 0.0
    %2378 = vmatpush1.xpose.msra.mxu0 0.0
    %2379 = vmatprep.subr.mxu0 0.0
    %2380 = vmatpush1.xpose.msra.mxu0 0.0
    %2381 = vmatprep.subr.mxu0 0.0
    %2382 = vmatpush1.xpose.msra.mxu0 0.0
    %2383 = vmatprep.subr.mxu0 0.0
    %2384 = vmatpush1.xpose.msra.mxu0 0.0
    %2385 = vmatprep.subr.mxu0 0.0
    %2386 = vmatpush1.xpose.msra.mxu0 0.0
    %2387 = vmatprep.subr.mxu0 0.0
    %2388 = vmatpush1.xpose.msra.mxu0 0.0
    %2389 = vmatprep.subr.mxu0 0.0
    %2390 = vmatpush1.xpose.msra.mxu0 0.0
    %2391 = vmatprep.subr.mxu0 0.0
    %2392 = vmatpush1.xpose.msra.mxu0 0.0
    %2393 = vmatprep.subr.mxu0 0.0
    %2394 = vmatpush1.xpose.msra.mxu0 0.0
    %2395 = vmatprep.subr.mxu0 0.0
    %2396 = vmatpush1.xpose.msra.mxu0 0.0
    %2397 = vmatprep.subr.mxu0 0.0
    %2398 = vmatpush1.xpose.msra.mxu0 0.0
    %2399 = vmatprep.subr.mxu0 0.0
    %2400 = vmatpush1.xpose.msra.mxu0 0.0
    %2401 = vmatprep.subr.mxu0 0.0
    %2402 = vmatpush1.xpose.msra.mxu0 %v2043
    %2403 = vmatprep.subr.mxu0 0.0
    %2404 = vmatpush1.xpose.msra.mxu0 %v2040
    %2405 = vmatprep.subr.mxu0 0.0
    %2406 = vmatpush1.xpose.msra.mxu0 %v2037
    %2407 = vmatprep.subr.mxu0 0.0
    %2408 = vmatpush1.xpose.msra.mxu0 %v2034
    %2409 = vmatprep.subr.mxu0 0.0
    %2410 = vmatpush2.xpose.msra.mxu0 0.0
    %2411 = vmatprep.subr.mxu0 0.0
    %2412 = vmatpush2.xpose.msra.mxu0 0.0
    %2413 = vmatprep.subr.mxu0 0.0
    %2414 = vmatpush2.xpose.msra.mxu0 0.0
    %2415 = vmatprep.subr.mxu0 0.0
    %2416 = vmatpush2.xpose.msra.mxu0 0.0
    %2417 = vmatprep.subr.mxu0 0.0
    %2418 = vmatpush2.xpose.msra.mxu0 0.0
    %2419 = vmatprep.subr.mxu0 0.0
    %2420 = vmatpush2.xpose.msra.mxu0 0.0
    %2421 = vmatprep.subr.mxu0 0.0
    %2422 = vmatpush2.xpose.msra.mxu0 0.0
    %2423 = vmatprep.subr.mxu0 0.0
    %2424 = vmatpush2.xpose.msra.mxu0 0.0
    %2425 = vmatprep.subr.mxu0 0.0
    %2426 = vmatpush2.xpose.msra.mxu0 0.0
    %2427 = vmatprep.subr.mxu0 0.0
    %2428 = vmatpush2.xpose.msra.mxu0 0.0
    %2429 = vmatprep.subr.mxu0 0.0
    %2430 = vmatpush2.xpose.msra.mxu0 0.0
    %2431 = vmatprep.subr.mxu0 0.0
    %2432 = vmatpush2.xpose.msra.mxu0 0.0
    %2433 = vmatprep.subr.mxu0 0.0
    %2434 = vmatpush2.xpose.msra.mxu0 0.0
    %2435 = vmatprep.subr.mxu0 0.0
    %2436 = vmatpush2.xpose.msra.mxu0 0.0
    %2437 = vmatprep.subr.mxu0 0.0
    %2438 = vmatpush2.xpose.msra.mxu0 0.0
    %2439 = vmatprep.subr.mxu0 0.0
    %2440 = vmatpush2.xpose.msra.mxu0 0.0
    %2441 = vmatprep.mubr.f32.mxu0 0.0
    %2442 = vmatmul.mubr.f32.gmra.mxu0 %v2369
    %v2443 = vpop.f32.mrf.mxu0
    %v2444 = vadd.f32 %v615, %v2443
    %v2445 = vpop.f32.mrf.mxu0
    %2446 = vmatprep.mubr.f32.mxu0 0.0
    %2447 = vmatmul.mubr.f32.gmra.mxu0 %v2371
    %v2448 = vpop.f32.mrf.mxu0
    %v2449 = vadd.f32 %v616, %v2448
    %v2450 = vpop.f32.mrf.mxu0
    %2451 = vmatprep.mubr.f32.mxu0 0.0
    %2452 = vmatmul.mubr.f32.gmra.mxu0 %v2373
    %v2453 = vpop.f32.mrf.mxu0
    %v2454 = vadd.f32 %v617, %v2453
    %v2455 = vpop.f32.mrf.mxu0
    %2456 = vmatprep.mubr.f32.mxu0 0.0
    %2457 = vmatmul.mubr.f32.gmra.mxu0 %v2375
    %v2458 = vpop.f32.mrf.mxu0
    %v2459 = vadd.f32 %v618, %v2458
    %v2460 = vpop.f32.mrf.mxu0
    %2461 = vdwg.mxu0
    %v2462 = vsel %vm355, %v2444, -inf
    %2463 = vmax.xlane.f32.xlu0 %v2462
    %v2464 = vpop.xlane.xlu0 %2463
    %v2465 = vsel %vm355, %v2449, -inf
    %2466 = vmax.xlane.f32.xlu0 %v2465
    %v2467 = vpop.xlane.xlu0 %2466
    %v2468 = vsel %vm355, %v2454, -inf
    %2469 = vmax.xlane.f32.xlu0 %v2468
    %v2470 = vpop.xlane.xlu0 %2469
    %v2471 = vsel %vm355, %v2459, -inf
    %2472 = vmax.xlane.f32.xlu0 %v2471
    %v2473 = vpop.xlane.xlu0 %2472
    %v2474 = vsub.f32 %v2444, %v2464
    %v2475 = vsub.f32 %v2449, %v2467
    %v2476 = vsub.f32 %v2454, %v2470
    %v2477 = vsub.f32 %v2459, %v2473
    %v2478 = vmul.f32 %v2474, 1.442695
    %v2479 = vpow.pop %v2478
    %v2480 = vmul.f32 %v2475, 1.442695
    %v2481 = vpow.pop %v2480
    %v2482 = vmul.f32 %v2476, 1.442695
    %v2483 = vpow.pop %v2482
    %v2484 = vmul.f32 %v2477, 1.442695
    %v2485 = vpow.pop %v2484
    %v2486 = vsel %vm355, %v2479, 0.0
    %2487 = vadd.xlane.f32.xlu0 %v2486
    %v2488 = vpop.xlane.xlu0 %2487
    %v2489 = vsel %vm355, %v2481, 0.0
    %2490 = vadd.xlane.f32.xlu0 %v2489
    %v2491 = vpop.xlane.xlu0 %2490
    %v2492 = vsel %vm355, %v2483, 0.0
    %2493 = vadd.xlane.f32.xlu0 %v2492
    %v2494 = vpop.xlane.xlu0 %2493
    %v2495 = vsel %vm355, %v2485, 0.0
    %2496 = vadd.xlane.f32.xlu0 %v2495
    %v2497 = vpop.xlane.xlu0 %2496
    %v2498 = vrcp.pop %v2488
    %v2499 = vrcp.pop %v2491
    %v2500 = vrcp.pop %v2494
    %v2501 = vrcp.pop %v2497
    %v2502 = vmul.f32 %v2479, %v2498
    %v2503 = vmul.f32 %v2481, %v2499
    %v2504 = vmul.f32 %v2483, %v2500
    %v2505 = vmul.f32 %v2485, %v2501
    %2510 = vrot.lane.b32.xlu0 %v2202, 96
    %v2511 = vpop.permute.xlu0 %2510
    %2512 = vrot.lane.b32.xlu0 %v2207, 96
    %v2513 = vpop.permute.xlu0 %2512
    %2514 = vrot.lane.b32.xlu0 %v2212, 96
    %v2515 = vpop.permute.xlu0 %2514
    %2516 = vrot.lane.b32.xlu0 %v2217, 96
    %v2517 = vpop.permute.xlu0 %2516
    %v2523 = vsel %vm355, %v2502, 0
    %v2526 = vsel %vm355, %v2503, 0
    %v2529 = vsel %vm355, %v2504, 0
    %v2532 = vsel %vm355, %v2505, 0
    %2534 = vmatprep.subr.mxu0 0.0
    %2535 = vmatpush1.msra.mxu0 0.0
    %2536 = vmatprep.subr.mxu0 0.0
    %2537 = vmatpush1.msra.mxu0 0.0
    %2538 = vmatprep.subr.mxu0 0.0
    %2539 = vmatpush1.msra.mxu0 0.0
    %2540 = vmatprep.subr.mxu0 0.0
    %2541 = vmatpush1.msra.mxu0 0.0
    %2542 = vmatprep.subr.mxu0 0.0
    %2543 = vmatpush1.msra.mxu0 0.0
    %2544 = vmatprep.subr.mxu0 0.0
    %2545 = vmatpush1.msra.mxu0 0.0
    %2546 = vmatprep.subr.mxu0 0.0
    %2547 = vmatpush1.msra.mxu0 0.0
    %2548 = vmatprep.subr.mxu0 0.0
    %2549 = vmatpush1.msra.mxu0 0.0
    %2550 = vmatprep.subr.mxu0 0.0
    %2551 = vmatpush1.msra.mxu0 0.0
    %2552 = vmatprep.subr.mxu0 0.0
    %2553 = vmatpush1.msra.mxu0 0.0
    %2554 = vmatprep.subr.mxu0 0.0
    %2555 = vmatpush1.msra.mxu0 0.0
    %2556 = vmatprep.subr.mxu0 0.0
    %2557 = vmatpush1.msra.mxu0 0.0
    %2558 = vmatprep.subr.mxu0 0.0
    %2559 = vmatpush1.msra.mxu0 %v2517
    %2560 = vmatprep.subr.mxu0 0.0
    %2561 = vmatpush1.msra.mxu0 %v2515
    %2562 = vmatprep.subr.mxu0 0.0
    %2563 = vmatpush1.msra.mxu0 %v2513
    %2564 = vmatprep.subr.mxu0 0.0
    %2565 = vmatpush1.msra.mxu0 %v2511
    %2566 = vmatprep.subr.mxu0 0.0
    %2567 = vmatpush2.msra.mxu0 0.0
    %2568 = vmatprep.subr.mxu0 0.0
    %2569 = vmatpush2.msra.mxu0 0.0
    %2570 = vmatprep.subr.mxu0 0.0
    %2571 = vmatpush2.msra.mxu0 0.0
    %2572 = vmatprep.subr.mxu0 0.0
    %2573 = vmatpush2.msra.mxu0 0.0
    %2574 = vmatprep.subr.mxu0 0.0
    %2575 = vmatpush2.msra.mxu0 0.0
    %2576 = vmatprep.subr.mxu0 0.0
    %2577 = vmatpush2.msra.mxu0 0.0
    %2578 = vmatprep.subr.mxu0 0.0
    %2579 = vmatpush2.msra.mxu0 0.0
    %2580 = vmatprep.subr.mxu0 0.0
    %2581 = vmatpush2.msra.mxu0 0.0
    %2582 = vmatprep.subr.mxu0 0.0
    %2583 = vmatpush2.msra.mxu0 0.0
    %2584 = vmatprep.subr.mxu0 0.0
    %2585 = vmatpush2.msra.mxu0 0.0
    %2586 = vmatprep.subr.mxu0 0.0
    %2587 = vmatpush2.msra.mxu0 0.0
    %2588 = vmatprep.subr.mxu0 0.0
    %2589 = vmatpush2.msra.mxu0 0.0
    %2590 = vmatprep.subr.mxu0 0.0
    %2591 = vmatpush2.msra.mxu0 0.0
    %2592 = vmatprep.subr.mxu0 0.0
    %2593 = vmatpush2.msra.mxu0 0.0
    %2594 = vmatprep.subr.mxu0 0.0
    %2595 = vmatpush2.msra.mxu0 0.0
    %2596 = vmatprep.subr.mxu0 0.0
    %2597 = vmatpush2.msra.mxu0 0.0
    %2598 = vmatprep.mubr.f32.mxu0 0.0
    %2599 = vmatmul.mubr.f32.gmra.mxu0 %v2523
    %v2600 = vpop.f32.mrf.mxu0
    %v2601 = vadd.f32 0.0, %v2600
    %v2602 = vpop.f32.mrf.mxu0
    %2603 = vmatprep.mubr.f32.mxu0 0.0
    %2604 = vmatmul.mubr.f32.gmra.mxu0 %v2526
    %v2605 = vpop.f32.mrf.mxu0
    %v2606 = vadd.f32 0.0, %v2605
    %v2607 = vpop.f32.mrf.mxu0
    %2608 = vmatprep.mubr.f32.mxu0 0.0
    %2609 = vmatmul.mubr.f32.gmra.mxu0 %v2529
    %v2610 = vpop.f32.mrf.mxu0
    %v2611 = vadd.f32 0.0, %v2610
    %v2612 = vpop.f32.mrf.mxu0
    %2613 = vmatprep.mubr.f32.mxu0 0.0
    %2614 = vmatmul.mubr.f32.gmra.mxu0 %v2532
    %v2615 = vpop.f32.mrf.mxu0
    %v2616 = vadd.f32 0.0, %v2615
    %v2617 = vpop.f32.mrf.mxu0
    %2618 = vdwg.mxu0
    %v2620 = vsel %vm355, %v2357, 0
    %v2623 = vsel %vm355, %v2358, 0
    %v2626 = vsel %vm355, %v2359, 0
    %v2629 = vsel %vm355, %v2360, 0
    %2631 = vmatprep.subr.mxu0 0.0
    %2632 = vmatpush1.msra.mxu0 0.0
    %2633 = vmatprep.subr.mxu0 0.0
    %2634 = vmatpush1.msra.mxu0 0.0
    %2635 = vmatprep.subr.mxu0 0.0
    %2636 = vmatpush1.msra.mxu0 0.0
    %2637 = vmatprep.subr.mxu0 0.0
    %2638 = vmatpush1.msra.mxu0 0.0
    %2639 = vmatprep.subr.mxu0 0.0
    %2640 = vmatpush1.msra.mxu0 0.0
    %2641 = vmatprep.subr.mxu0 0.0
    %2642 = vmatpush1.msra.mxu0 0.0
    %2643 = vmatprep.subr.mxu0 0.0
    %2644 = vmatpush1.msra.mxu0 0.0
    %2645 = vmatprep.subr.mxu0 0.0
    %2646 = vmatpush1.msra.mxu0 0.0
    %2647 = vmatprep.subr.mxu0 0.0
    %2648 = vmatpush1.msra.mxu0 0.0
    %2649 = vmatprep.subr.mxu0 0.0
    %2650 = vmatpush1.msra.mxu0 0.0
    %2651 = vmatprep.subr.mxu0 0.0
    %2652 = vmatpush1.msra.mxu0 0.0
    %2653 = vmatprep.subr.mxu0 0.0
    %2654 = vmatpush1.msra.mxu0 0.0
    %2655 = vmatprep.subr.mxu0 0.0
    %2656 = vmatpush1.msra.mxu0 %v2217
    %2657 = vmatprep.subr.mxu0 0.0
    %2658 = vmatpush1.msra.mxu0 %v2212
    %2659 = vmatprep.subr.mxu0 0.0
    %2660 = vmatpush1.msra.mxu0 %v2207
    %2661 = vmatprep.subr.mxu0 0.0
    %2662 = vmatpush1.msra.mxu0 %v2202
    %2663 = vmatprep.subr.mxu0 0.0
    %2664 = vmatpush2.msra.mxu0 0.0
    %2665 = vmatprep.subr.mxu0 0.0
    %2666 = vmatpush2.msra.mxu0 0.0
    %2667 = vmatprep.subr.mxu0 0.0
    %2668 = vmatpush2.msra.mxu0 0.0
    %2669 = vmatprep.subr.mxu0 0.0
    %2670 = vmatpush2.msra.mxu0 0.0
    %2671 = vmatprep.subr.mxu0 0.0
    %2672 = vmatpush2.msra.mxu0 0.0
    %2673 = vmatprep.subr.mxu0 0.0
    %2674 = vmatpush2.msra.mxu0 0.0
    %2675 = vmatprep.subr.mxu0 0.0
    %2676 = vmatpush2.msra.mxu0 0.0
    %2677 = vmatprep.subr.mxu0 0.0
    %2678 = vmatpush2.msra.mxu0 0.0
    %2679 = vmatprep.subr.mxu0 0.0
    %2680 = vmatpush2.msra.mxu0 0.0
    %2681 = vmatprep.subr.mxu0 0.0
    %2682 = vmatpush2.msra.mxu0 0.0
    %2683 = vmatprep.subr.mxu0 0.0
    %2684 = vmatpush2.msra.mxu0 0.0
    %2685 = vmatprep.subr.mxu0 0.0
    %2686 = vmatpush2.msra.mxu0 0.0
    %2687 = vmatprep.subr.mxu0 0.0
    %2688 = vmatpush2.msra.mxu0 0.0
    %2689 = vmatprep.subr.mxu0 0.0
    %2690 = vmatpush2.msra.mxu0 0.0
    %2691 = vmatprep.subr.mxu0 0.0
    %2692 = vmatpush2.msra.mxu0 0.0
    %2693 = vmatprep.subr.mxu0 0.0
    %2694 = vmatpush2.msra.mxu0 0.0
    %2695 = vmatprep.mubr.f32.mxu0 0.0
    %2696 = vmatmul.mubr.f32.gmra.mxu0 %v2620
    %v2697 = vpop.f32.mrf.mxu0
    %v2698 = vadd.f32 %v2601, %v2697
    %v2699 = vpop.f32.mrf.mxu0
    %2700 = vmatprep.mubr.f32.mxu0 0.0
    %2701 = vmatmul.mubr.f32.gmra.mxu0 %v2623
    %v2702 = vpop.f32.mrf.mxu0
    %v2703 = vadd.f32 %v2606, %v2702
    %v2704 = vpop.f32.mrf.mxu0
    %2705 = vmatprep.mubr.f32.mxu0 0.0
    %2706 = vmatmul.mubr.f32.gmra.mxu0 %v2626
    %v2707 = vpop.f32.mrf.mxu0
    %v2708 = vadd.f32 %v2611, %v2707
    %v2709 = vpop.f32.mrf.mxu0
    %2710 = vmatprep.mubr.f32.mxu0 0.0
    %2711 = vmatmul.mubr.f32.gmra.mxu0 %v2629
    %v2712 = vpop.f32.mrf.mxu0
    %v2713 = vadd.f32 %v2616, %v2712
    %v2714 = vpop.f32.mrf.mxu0
    %2715 = vdwg.mxu0
    %2716 = vrot.lane.b32.xlu0 %v2112, 64
    %v2717 = vpop.permute.xlu0 %2716
    %2718 = vrot.lane.b32.xlu0 %v2117, 64
    %v2719 = vpop.permute.xlu0 %2718
    %2720 = vrot.lane.b32.xlu0 %v2122, 64
    %v2721 = vpop.permute.xlu0 %2720
    %2722 = vrot.lane.b32.xlu0 %v2127, 64
    %v2723 = vpop.permute.xlu0 %2722
    %v2724 = vsel %vm355, %v2717, 0
    %v2726 = vsel %vm355, %v2719, 0
    %v2728 = vsel %vm355, %v2721, 0
    %v2730 = vsel %vm355, %v2723, 0
    %2732 = vmatprep.subr.mxu0 0.0
    %2733 = vmatpush1.xpose.msra.mxu0 0.0
    %2734 = vmatprep.subr.mxu0 0.0
    %2735 = vmatpush1.xpose.msra.mxu0 0.0
    %2736 = vmatprep.subr.mxu0 0.0
    %2737 = vmatpush1.xpose.msra.mxu0 0.0
    %2738 = vmatprep.subr.mxu0 0.0
    %2739 = vmatpush1.xpose.msra.mxu0 0.0
    %2740 = vmatprep.subr.mxu0 0.0
    %2741 = vmatpush1.xpose.msra.mxu0 0.0
    %2742 = vmatprep.subr.mxu0 0.0
    %2743 = vmatpush1.xpose.msra.mxu0 0.0
    %2744 = vmatprep.subr.mxu0 0.0
    %2745 = vmatpush1.xpose.msra.mxu0 0.0
    %2746 = vmatprep.subr.mxu0 0.0
    %2747 = vmatpush1.xpose.msra.mxu0 0.0
    %2748 = vmatprep.subr.mxu0 0.0
    %2749 = vmatpush1.xpose.msra.mxu0 0.0
    %2750 = vmatprep.subr.mxu0 0.0
    %2751 = vmatpush1.xpose.msra.mxu0 0.0
    %2752 = vmatprep.subr.mxu0 0.0
    %2753 = vmatpush1.xpose.msra.mxu0 0.0
    %2754 = vmatprep.subr.mxu0 0.0
    %2755 = vmatpush1.xpose.msra.mxu0 0.0
    %2756 = vmatprep.subr.mxu0 0.0
    %2757 = vmatpush1.xpose.msra.mxu0 %v2043
    %2758 = vmatprep.subr.mxu0 0.0
    %2759 = vmatpush1.xpose.msra.mxu0 %v2040
    %2760 = vmatprep.subr.mxu0 0.0
    %2761 = vmatpush1.xpose.msra.mxu0 %v2037
    %2762 = vmatprep.subr.mxu0 0.0
    %2763 = vmatpush1.xpose.msra.mxu0 %v2034
    %2764 = vmatprep.subr.mxu0 0.0
    %2765 = vmatpush2.xpose.msra.mxu0 0.0
    %2766 = vmatprep.subr.mxu0 0.0
    %2767 = vmatpush2.xpose.msra.mxu0 0.0
    %2768 = vmatprep.subr.mxu0 0.0
    %2769 = vmatpush2.xpose.msra.mxu0 0.0
    %2770 = vmatprep.subr.mxu0 0.0
    %2771 = vmatpush2.xpose.msra.mxu0 0.0
    %2772 = vmatprep.subr.mxu0 0.0
    %2773 = vmatpush2.xpose.msra.mxu0 0.0
    %2774 = vmatprep.subr.mxu0 0.0
    %2775 = vmatpush2.xpose.msra.mxu0 0.0
    %2776 = vmatprep.subr.mxu0 0.0
    %2777 = vmatpush2.xpose.msra.mxu0 0.0
    %2778 = vmatprep.subr.mxu0 0.0
    %2779 = vmatpush2.xpose.msra.mxu0 0.0
    %2780 = vmatprep.subr.mxu0 0.0
    %2781 = vmatpush2.xpose.msra.mxu0 0.0
    %2782 = vmatprep.subr.mxu0 0.0
    %2783 = vmatpush2.xpose.msra.mxu0 0.0
    %2784 = vmatprep.subr.mxu0 0.0
    %2785 = vmatpush2.xpose.msra.mxu0 0.0
    %2786 = vmatprep.subr.mxu0 0.0
    %2787 = vmatpush2.xpose.msra.mxu0 0.0
    %2788 = vmatprep.subr.mxu0 0.0
    %2789 = vmatpush2.xpose.msra.mxu0 0.0
    %2790 = vmatprep.subr.mxu0 0.0
    %2791 = vmatpush2.xpose.msra.mxu0 0.0
    %2792 = vmatprep.subr.mxu0 0.0
    %2793 = vmatpush2.xpose.msra.mxu0 0.0
    %2794 = vmatprep.subr.mxu0 0.0
    %2795 = vmatpush2.xpose.msra.mxu0 0.0
    %2796 = vmatprep.mubr.f32.mxu0 0.0
    %2797 = vmatmul.mubr.f32.gmra.mxu0 %v2724
    %v2798 = vpop.f32.mrf.mxu0
    %v2799 = vadd.f32 %v615, %v2798
    %v2800 = vpop.f32.mrf.mxu0
    %2801 = vmatprep.mubr.f32.mxu0 0.0
    %2802 = vmatmul.mubr.f32.gmra.mxu0 %v2726
    %v2803 = vpop.f32.mrf.mxu0
    %v2804 = vadd.f32 %v616, %v2803
    %v2805 = vpop.f32.mrf.mxu0
    %2806 = vmatprep.mubr.f32.mxu0 0.0
    %2807 = vmatmul.mubr.f32.gmra.mxu0 %v2728
    %v2808 = vpop.f32.mrf.mxu0
    %v2809 = vadd.f32 %v617, %v2808
    %v2810 = vpop.f32.mrf.mxu0
    %2811 = vmatprep.mubr.f32.mxu0 0.0
    %2812 = vmatmul.mubr.f32.gmra.mxu0 %v2730
    %v2813 = vpop.f32.mrf.mxu0
    %v2814 = vadd.f32 %v618, %v2813
    %v2815 = vpop.f32.mrf.mxu0
    %2816 = vdwg.mxu0
    %v2817 = vsel %vm355, %v2799, -inf
    %2818 = vmax.xlane.f32.xlu0 %v2817
    %v2819 = vpop.xlane.xlu0 %2818
    %v2820 = vsel %vm355, %v2804, -inf
    %2821 = vmax.xlane.f32.xlu0 %v2820
    %v2822 = vpop.xlane.xlu0 %2821
    %v2823 = vsel %vm355, %v2809, -inf
    %2824 = vmax.xlane.f32.xlu0 %v2823
    %v2825 = vpop.xlane.xlu0 %2824
    %v2826 = vsel %vm355, %v2814, -inf
    %2827 = vmax.xlane.f32.xlu0 %v2826
    %v2828 = vpop.xlane.xlu0 %2827
    %v2829 = vsub.f32 %v2799, %v2819
    %v2830 = vsub.f32 %v2804, %v2822
    %v2831 = vsub.f32 %v2809, %v2825
    %v2832 = vsub.f32 %v2814, %v2828
    %v2833 = vmul.f32 %v2829, 1.442695
    %v2834 = vpow.pop %v2833
    %v2835 = vmul.f32 %v2830, 1.442695
    %v2836 = vpow.pop %v2835
    %v2837 = vmul.f32 %v2831, 1.442695
    %v2838 = vpow.pop %v2837
    %v2839 = vmul.f32 %v2832, 1.442695
    %v2840 = vpow.pop %v2839
    %v2841 = vsel %vm355, %v2834, 0.0
    %2842 = vadd.xlane.f32.xlu0 %v2841
    %v2843 = vpop.xlane.xlu0 %2842
    %v2844 = vsel %vm355, %v2836, 0.0
    %2845 = vadd.xlane.f32.xlu0 %v2844
    %v2846 = vpop.xlane.xlu0 %2845
    %v2847 = vsel %vm355, %v2838, 0.0
    %2848 = vadd.xlane.f32.xlu0 %v2847
    %v2849 = vpop.xlane.xlu0 %2848
    %v2850 = vsel %vm355, %v2840, 0.0
    %2851 = vadd.xlane.f32.xlu0 %v2850
    %v2852 = vpop.xlane.xlu0 %2851
    %v2853 = vrcp.pop %v2843
    %v2854 = vrcp.pop %v2846
    %v2855 = vrcp.pop %v2849
    %v2856 = vrcp.pop %v2852
    %v2857 = vmul.f32 %v2834, %v2853
    %v2858 = vmul.f32 %v2836, %v2854
    %v2859 = vmul.f32 %v2838, %v2855
    %v2860 = vmul.f32 %v2840, %v2856
    %2861 = vrot.lane.b32.xlu0 %v2202, 64
    %v2862 = vpop.permute.xlu0 %2861
    %2863 = vrot.lane.b32.xlu0 %v2207, 64
    %v2864 = vpop.permute.xlu0 %2863
    %2865 = vrot.lane.b32.xlu0 %v2212, 64
    %v2866 = vpop.permute.xlu0 %2865
    %2867 = vrot.lane.b32.xlu0 %v2217, 64
    %v2868 = vpop.permute.xlu0 %2867
    %v2874 = vsel %vm355, %v2857, 0
    %v2877 = vsel %vm355, %v2858, 0
    %v2880 = vsel %vm355, %v2859, 0
    %v2883 = vsel %vm355, %v2860, 0
    %2885 = vmatprep.subr.mxu0 0.0
    %2886 = vmatpush1.msra.mxu0 0.0
    %2887 = vmatprep.subr.mxu0 0.0
    %2888 = vmatpush1.msra.mxu0 0.0
    %2889 = vmatprep.subr.mxu0 0.0
    %2890 = vmatpush1.msra.mxu0 0.0
    %2891 = vmatprep.subr.mxu0 0.0
    %2892 = vmatpush1.msra.mxu0 0.0
    %2893 = vmatprep.subr.mxu0 0.0
    %2894 = vmatpush1.msra.mxu0 0.0
    %2895 = vmatprep.subr.mxu0 0.0
    %2896 = vmatpush1.msra.mxu0 0.0
    %2897 = vmatprep.subr.mxu0 0.0
    %2898 = vmatpush1.msra.mxu0 0.0
    %2899 = vmatprep.subr.mxu0 0.0
    %2900 = vmatpush1.msra.mxu0 0.0
    %2901 = vmatprep.subr.mxu0 0.0
    %2902 = vmatpush1.msra.mxu0 0.0
    %2903 = vmatprep.subr.mxu0 0.0
    %2904 = vmatpush1.msra.mxu0 0.0
    %2905 = vmatprep.subr.mxu0 0.0
    %2906 = vmatpush1.msra.mxu0 0.0
    %2907 = vmatprep.subr.mxu0 0.0
    %2908 = vmatpush1.msra.mxu0 0.0
    %2909 = vmatprep.subr.mxu0 0.0
    %2910 = vmatpush1.msra.mxu0 %v2868
    %2911 = vmatprep.subr.mxu0 0.0
    %2912 = vmatpush1.msra.mxu0 %v2866
    %2913 = vmatprep.subr.mxu0 0.0
    %2914 = vmatpush1.msra.mxu0 %v2864
    %2915 = vmatprep.subr.mxu0 0.0
    %2916 = vmatpush1.msra.mxu0 %v2862
    %2917 = vmatprep.subr.mxu0 0.0
    %2918 = vmatpush2.msra.mxu0 0.0
    %2919 = vmatprep.subr.mxu0 0.0
    %2920 = vmatpush2.msra.mxu0 0.0
    %2921 = vmatprep.subr.mxu0 0.0
    %2922 = vmatpush2.msra.mxu0 0.0
    %2923 = vmatprep.subr.mxu0 0.0
    %2924 = vmatpush2.msra.mxu0 0.0
    %2925 = vmatprep.subr.mxu0 0.0
    %2926 = vmatpush2.msra.mxu0 0.0
    %2927 = vmatprep.subr.mxu0 0.0
    %2928 = vmatpush2.msra.mxu0 0.0
    %2929 = vmatprep.subr.mxu0 0.0
    %2930 = vmatpush2.msra.mxu0 0.0
    %2931 = vmatprep.subr.mxu0 0.0
    %2932 = vmatpush2.msra.mxu0 0.0
    %2933 = vmatprep.subr.mxu0 0.0
    %2934 = vmatpush2.msra.mxu0 0.0
    %2935 = vmatprep.subr.mxu0 0.0
    %2936 = vmatpush2.msra.mxu0 0.0
    %2937 = vmatprep.subr.mxu0 0.0
    %2938 = vmatpush2.msra.mxu0 0.0
    %2939 = vmatprep.subr.mxu0 0.0
    %2940 = vmatpush2.msra.mxu0 0.0
    %2941 = vmatprep.subr.mxu0 0.0
    %2942 = vmatpush2.msra.mxu0 0.0
    %2943 = vmatprep.subr.mxu0 0.0
    %2944 = vmatpush2.msra.mxu0 0.0
    %2945 = vmatprep.subr.mxu0 0.0
    %2946 = vmatpush2.msra.mxu0 0.0
    %2947 = vmatprep.subr.mxu0 0.0
    %2948 = vmatpush2.msra.mxu0 0.0
    %2949 = vmatprep.mubr.f32.mxu0 0.0
    %2950 = vmatmul.mubr.f32.gmra.mxu0 %v2874
    %v2951 = vpop.f32.mrf.mxu0
    %v2952 = vadd.f32 0.0, %v2951
    %v2953 = vpop.f32.mrf.mxu0
    %2954 = vmatprep.mubr.f32.mxu0 0.0
    %2955 = vmatmul.mubr.f32.gmra.mxu0 %v2877
    %v2956 = vpop.f32.mrf.mxu0
    %v2957 = vadd.f32 0.0, %v2956
    %v2958 = vpop.f32.mrf.mxu0
    %2959 = vmatprep.mubr.f32.mxu0 0.0
    %2960 = vmatmul.mubr.f32.gmra.mxu0 %v2880
    %v2961 = vpop.f32.mrf.mxu0
    %v2962 = vadd.f32 0.0, %v2961
    %v2963 = vpop.f32.mrf.mxu0
    %2964 = vmatprep.mubr.f32.mxu0 0.0
    %2965 = vmatmul.mubr.f32.gmra.mxu0 %v2883
    %v2966 = vpop.f32.mrf.mxu0
    %v2967 = vadd.f32 0.0, %v2966
    %v2968 = vpop.f32.mrf.mxu0
    %2969 = vdwg.mxu0
    %v2970 = vadd.f32 %v2698, %v2952
    %v2971 = vadd.f32 %v2703, %v2957
    %v2972 = vadd.f32 %v2708, %v2962
    %v2973 = vadd.f32 %v2713, %v2967
    %2974 = vrot.lane.b32.xlu0 %v2112, 32
    %v2975 = vpop.permute.xlu0 %2974
    %2976 = vrot.lane.b32.xlu0 %v2117, 32
    %v2977 = vpop.permute.xlu0 %2976
    %2978 = vrot.lane.b32.xlu0 %v2122, 32
    %v2979 = vpop.permute.xlu0 %2978
    %2980 = vrot.lane.b32.xlu0 %v2127, 32
    %v2981 = vpop.permute.xlu0 %2980
    %v2982 = vsel %vm355, %v2975, 0
    %v2984 = vsel %vm355, %v2977, 0
    %v2986 = vsel %vm355, %v2979, 0
    %v2988 = vsel %vm355, %v2981, 0
    %2990 = vmatprep.subr.mxu0 0.0
    %2991 = vmatpush1.xpose.msra.mxu0 0.0
    %2992 = vmatprep.subr.mxu0 0.0
    %2993 = vmatpush1.xpose.msra.mxu0 0.0
    %2994 = vmatprep.subr.mxu0 0.0
    %2995 = vmatpush1.xpose.msra.mxu0 0.0
    %2996 = vmatprep.subr.mxu0 0.0
    %2997 = vmatpush1.xpose.msra.mxu0 0.0
    %2998 = vmatprep.subr.mxu0 0.0
    %2999 = vmatpush1.xpose.msra.mxu0 0.0
    %3000 = vmatprep.subr.mxu0 0.0
    %3001 = vmatpush1.xpose.msra.mxu0 0.0
    %3002 = vmatprep.subr.mxu0 0.0
    %3003 = vmatpush1.xpose.msra.mxu0 0.0
    %3004 = vmatprep.subr.mxu0 0.0
    %3005 = vmatpush1.xpose.msra.mxu0 0.0
    %3006 = vmatprep.subr.mxu0 0.0
    %3007 = vmatpush1.xpose.msra.mxu0 0.0
    %3008 = vmatprep.subr.mxu0 0.0
    %3009 = vmatpush1.xpose.msra.mxu0 0.0
    %3010 = vmatprep.subr.mxu0 0.0
    %3011 = vmatpush1.xpose.msra.mxu0 0.0
    %3012 = vmatprep.subr.mxu0 0.0
    %3013 = vmatpush1.xpose.msra.mxu0 0.0
    %3014 = vmatprep.subr.mxu0 0.0
    %3015 = vmatpush1.xpose.msra.mxu0 %v2043
    %3016 = vmatprep.subr.mxu0 0.0
    %3017 = vmatpush1.xpose.msra.mxu0 %v2040
    %3018 = vmatprep.subr.mxu0 0.0
    %3019 = vmatpush1.xpose.msra.mxu0 %v2037
    %3020 = vmatprep.subr.mxu0 0.0
    %3021 = vmatpush1.xpose.msra.mxu0 %v2034
    %3022 = vmatprep.subr.mxu0 0.0
    %3023 = vmatpush2.xpose.msra.mxu0 0.0
    %3024 = vmatprep.subr.mxu0 0.0
    %3025 = vmatpush2.xpose.msra.mxu0 0.0
    %3026 = vmatprep.subr.mxu0 0.0
    %3027 = vmatpush2.xpose.msra.mxu0 0.0
    %3028 = vmatprep.subr.mxu0 0.0
    %3029 = vmatpush2.xpose.msra.mxu0 0.0
    %3030 = vmatprep.subr.mxu0 0.0
    %3031 = vmatpush2.xpose.msra.mxu0 0.0
    %3032 = vmatprep.subr.mxu0 0.0
    %3033 = vmatpush2.xpose.msra.mxu0 0.0
    %3034 = vmatprep.subr.mxu0 0.0
    %3035 = vmatpush2.xpose.msra.mxu0 0.0
    %3036 = vmatprep.subr.mxu0 0.0
    %3037 = vmatpush2.xpose.msra.mxu0 0.0
    %3038 = vmatprep.subr.mxu0 0.0
    %3039 = vmatpush2.xpose.msra.mxu0 0.0
    %3040 = vmatprep.subr.mxu0 0.0
    %3041 = vmatpush2.xpose.msra.mxu0 0.0
    %3042 = vmatprep.subr.mxu0 0.0
    %3043 = vmatpush2.xpose.msra.mxu0 0.0
    %3044 = vmatprep.subr.mxu0 0.0
    %3045 = vmatpush2.xpose.msra.mxu0 0.0
    %3046 = vmatprep.subr.mxu0 0.0
    %3047 = vmatpush2.xpose.msra.mxu0 0.0
    %3048 = vmatprep.subr.mxu0 0.0
    %3049 = vmatpush2.xpose.msra.mxu0 0.0
    %3050 = vmatprep.subr.mxu0 0.0
    %3051 = vmatpush2.xpose.msra.mxu0 0.0
    %3052 = vmatprep.subr.mxu0 0.0
    %3053 = vmatpush2.xpose.msra.mxu0 0.0
    %3054 = vmatprep.mubr.f32.mxu0 0.0
    %3055 = vmatmul.mubr.f32.gmra.mxu0 %v2982
    %v3056 = vpop.f32.mrf.mxu0
    %v3057 = vadd.f32 %v615, %v3056
    %v3058 = vpop.f32.mrf.mxu0
    %3059 = vmatprep.mubr.f32.mxu0 0.0
    %3060 = vmatmul.mubr.f32.gmra.mxu0 %v2984
    %v3061 = vpop.f32.mrf.mxu0
    %v3062 = vadd.f32 %v616, %v3061
    %v3063 = vpop.f32.mrf.mxu0
    %3064 = vmatprep.mubr.f32.mxu0 0.0
    %3065 = vmatmul.mubr.f32.gmra.mxu0 %v2986
    %v3066 = vpop.f32.mrf.mxu0
    %v3067 = vadd.f32 %v617, %v3066
    %v3068 = vpop.f32.mrf.mxu0
    %3069 = vmatprep.mubr.f32.mxu0 0.0
    %3070 = vmatmul.mubr.f32.gmra.mxu0 %v2988
    %v3071 = vpop.f32.mrf.mxu0
    %v3072 = vadd.f32 %v618, %v3071
    %v3073 = vpop.f32.mrf.mxu0
    %3074 = vdwg.mxu0
    %v3075 = vsel %vm355, %v3057, -inf
    %3076 = vmax.xlane.f32.xlu0 %v3075
    %v3077 = vpop.xlane.xlu0 %3076
    %v3078 = vsel %vm355, %v3062, -inf
    %3079 = vmax.xlane.f32.xlu0 %v3078
    %v3080 = vpop.xlane.xlu0 %3079
    %v3081 = vsel %vm355, %v3067, -inf
    %3082 = vmax.xlane.f32.xlu0 %v3081
    %v3083 = vpop.xlane.xlu0 %3082
    %v3084 = vsel %vm355, %v3072, -inf
    %3085 = vmax.xlane.f32.xlu0 %v3084
    %v3086 = vpop.xlane.xlu0 %3085
    %v3087 = vsub.f32 %v3057, %v3077
    %v3088 = vsub.f32 %v3062, %v3080
    %v3089 = vsub.f32 %v3067, %v3083
    %v3090 = vsub.f32 %v3072, %v3086
    %v3091 = vmul.f32 %v3087, 1.442695
    %v3092 = vpow.pop %v3091
    %v3093 = vmul.f32 %v3088, 1.442695
    %v3094 = vpow.pop %v3093
    %v3095 = vmul.f32 %v3089, 1.442695
    %v3096 = vpow.pop %v3095
    %v3097 = vmul.f32 %v3090, 1.442695
    %v3098 = vpow.pop %v3097
    %v3099 = vsel %vm355, %v3092, 0.0
    %3100 = vadd.xlane.f32.xlu0 %v3099
    %v3101 = vpop.xlane.xlu0 %3100
    %v3102 = vsel %vm355, %v3094, 0.0
    %3103 = vadd.xlane.f32.xlu0 %v3102
    %v3104 = vpop.xlane.xlu0 %3103
    %v3105 = vsel %vm355, %v3096, 0.0
    %3106 = vadd.xlane.f32.xlu0 %v3105
    %v3107 = vpop.xlane.xlu0 %3106
    %v3108 = vsel %vm355, %v3098, 0.0
    %3109 = vadd.xlane.f32.xlu0 %v3108
    %v3110 = vpop.xlane.xlu0 %3109
    %v3111 = vrcp.pop %v3101
    %v3112 = vrcp.pop %v3104
    %v3113 = vrcp.pop %v3107
    %v3114 = vrcp.pop %v3110
    %v3115 = vmul.f32 %v3092, %v3111
    %v3116 = vmul.f32 %v3094, %v3112
    %v3117 = vmul.f32 %v3096, %v3113
    %v3118 = vmul.f32 %v3098, %v3114
    %3119 = vrot.lane.b32.xlu0 %v2202, 32
    %v3120 = vpop.permute.xlu0 %3119
    %3121 = vrot.lane.b32.xlu0 %v2207, 32
    %v3122 = vpop.permute.xlu0 %3121
    %3123 = vrot.lane.b32.xlu0 %v2212, 32
    %v3124 = vpop.permute.xlu0 %3123
    %3125 = vrot.lane.b32.xlu0 %v2217, 32
    %v3126 = vpop.permute.xlu0 %3125
    %v3132 = vsel %vm355, %v3115, 0
    %v3135 = vsel %vm355, %v3116, 0
    %v3138 = vsel %vm355, %v3117, 0
    %v3141 = vsel %vm355, %v3118, 0
    %3143 = vmatprep.subr.mxu0 0.0
    %3144 = vmatpush1.msra.mxu0 0.0
    %3145 = vmatprep.subr.mxu0 0.0
    %3146 = vmatpush1.msra.mxu0 0.0
    %3147 = vmatprep.subr.mxu0 0.0
    %3148 = vmatpush1.msra.mxu0 0.0
    %3149 = vmatprep.subr.mxu0 0.0
    %3150 = vmatpush1.msra.mxu0 0.0
    %3151 = vmatprep.subr.mxu0 0.0
    %3152 = vmatpush1.msra.mxu0 0.0
    %3153 = vmatprep.subr.mxu0 0.0
    %3154 = vmatpush1.msra.mxu0 0.0
    %3155 = vmatprep.subr.mxu0 0.0
    %3156 = vmatpush1.msra.mxu0 0.0
    %3157 = vmatprep.subr.mxu0 0.0
    %3158 = vmatpush1.msra.mxu0 0.0
    %3159 = vmatprep.subr.mxu0 0.0
    %3160 = vmatpush1.msra.mxu0 0.0
    %3161 = vmatprep.subr.mxu0 0.0
    %3162 = vmatpush1.msra.mxu0 0.0
    %3163 = vmatprep.subr.mxu0 0.0
    %3164 = vmatpush1.msra.mxu0 0.0
    %3165 = vmatprep.subr.mxu0 0.0
    %3166 = vmatpush1.msra.mxu0 0.0
    %3167 = vmatprep.subr.mxu0 0.0
    %3168 = vmatpush1.msra.mxu0 %v3126
    %3169 = vmatprep.subr.mxu0 0.0
    %3170 = vmatpush1.msra.mxu0 %v3124
    %3171 = vmatprep.subr.mxu0 0.0
    %3172 = vmatpush1.msra.mxu0 %v3122
    %3173 = vmatprep.subr.mxu0 0.0
    %3174 = vmatpush1.msra.mxu0 %v3120
    %3175 = vmatprep.subr.mxu0 0.0
    %3176 = vmatpush2.msra.mxu0 0.0
    %3177 = vmatprep.subr.mxu0 0.0
    %3178 = vmatpush2.msra.mxu0 0.0
    %3179 = vmatprep.subr.mxu0 0.0
    %3180 = vmatpush2.msra.mxu0 0.0
    %3181 = vmatprep.subr.mxu0 0.0
    %3182 = vmatpush2.msra.mxu0 0.0
    %3183 = vmatprep.subr.mxu0 0.0
    %3184 = vmatpush2.msra.mxu0 0.0
    %3185 = vmatprep.subr.mxu0 0.0
    %3186 = vmatpush2.msra.mxu0 0.0
    %3187 = vmatprep.subr.mxu0 0.0
    %3188 = vmatpush2.msra.mxu0 0.0
    %3189 = vmatprep.subr.mxu0 0.0
    %3190 = vmatpush2.msra.mxu0 0.0
    %3191 = vmatprep.subr.mxu0 0.0
    %3192 = vmatpush2.msra.mxu0 0.0
    %3193 = vmatprep.subr.mxu0 0.0
    %3194 = vmatpush2.msra.mxu0 0.0
    %3195 = vmatprep.subr.mxu0 0.0
    %3196 = vmatpush2.msra.mxu0 0.0
    %3197 = vmatprep.subr.mxu0 0.0
    %3198 = vmatpush2.msra.mxu0 0.0
    %3199 = vmatprep.subr.mxu0 0.0
    %3200 = vmatpush2.msra.mxu0 0.0
    %3201 = vmatprep.subr.mxu0 0.0
    %3202 = vmatpush2.msra.mxu0 0.0
    %3203 = vmatprep.subr.mxu0 0.0
    %3204 = vmatpush2.msra.mxu0 0.0
    %3205 = vmatprep.subr.mxu0 0.0
    %3206 = vmatpush2.msra.mxu0 0.0
    %3207 = vmatprep.mubr.f32.mxu0 0.0
    %3208 = vmatmul.mubr.f32.gmra.mxu0 %v3132
    %v3209 = vpop.f32.mrf.mxu0
    %v3210 = vadd.f32 0.0, %v3209
    %v3211 = vpop.f32.mrf.mxu0
    %3212 = vmatprep.mubr.f32.mxu0 0.0
    %3213 = vmatmul.mubr.f32.gmra.mxu0 %v3135
    %v3214 = vpop.f32.mrf.mxu0
    %v3215 = vadd.f32 0.0, %v3214
    %v3216 = vpop.f32.mrf.mxu0
    %3217 = vmatprep.mubr.f32.mxu0 0.0
    %3218 = vmatmul.mubr.f32.gmra.mxu0 %v3138
    %v3219 = vpop.f32.mrf.mxu0
    %v3220 = vadd.f32 0.0, %v3219
    %v3221 = vpop.f32.mrf.mxu0
    %3222 = vmatprep.mubr.f32.mxu0 0.0
    %3223 = vmatmul.mubr.f32.gmra.mxu0 %v3141
    %v3224 = vpop.f32.mrf.mxu0
    %v3225 = vadd.f32 0.0, %v3224
    %v3226 = vpop.f32.mrf.mxu0
    %3227 = vdwg.mxu0
    %v3228 = vadd.f32 %v2970, %v3210
    %v3229 = vadd.f32 %v2971, %v3215
    %v3230 = vadd.f32 %v2972, %v3220
    %v3231 = vadd.f32 %v2973, %v3225
    %v3232 = vadd.f32 %v1949, %v3228
    %v3233 = vadd.f32 %v1950, %v3229
    %v3234 = vadd.f32 %v1951, %v3230
    %v3235 = vadd.f32 %v1952, %v3231
    %v3236 = vlaneseq
    %v3237 = vshrl.u32 %v3236, 7
    %v3238 = vsub.s32 0, %v3237
    %v3239 = vrot.slane %v1955, %v3238
    %v3240 = vadd.f32 %v3232, %v3239
    %v3241 = vadd.f32 %v3233, %v3239
    %v3242 = vadd.f32 %v3234, %v3239
    %v3243 = vadd.f32 %v3235, %v3239
    %v3244 = vsel %vm355, %v3240, 0.0
    %3245 = vadd.xlane.f32.xlu0 %v3244
    %v3246 = vpop.xlane.xlu0 %3245
    %v3247 = vsel %vm355, %v3241, 0.0
    %3248 = vadd.xlane.f32.xlu0 %v3247
    %v3249 = vpop.xlane.xlu0 %3248
    %v3250 = vsel %vm355, %v3242, 0.0
    %3251 = vadd.xlane.f32.xlu0 %v3250
    %v3252 = vpop.xlane.xlu0 %3251
    %v3253 = vsel %vm355, %v3243, 0.0
    %3254 = vadd.xlane.f32.xlu0 %v3253
    %v3255 = vpop.xlane.xlu0 %3254
    %v3256 = vmul.f32 %v3246, %v368
    %v3257 = vmul.f32 %v3249, %v368
    %v3258 = vmul.f32 %v3252, %v368
    %v3259 = vmul.f32 %v3255, %v368
    %v3260 = vsub.f32 %v3240, %v3256
    %v3261 = vsub.f32 %v3241, %v3257
    %v3262 = vsub.f32 %v3242, %v3258
    %v3263 = vsub.f32 %v3243, %v3259
    %v3264 = vmul.f32 %v3260, %v3260
    %v3265 = vmul.f32 %v3261, %v3261
    %v3266 = vmul.f32 %v3262, %v3262
    %v3267 = vmul.f32 %v3263, %v3263
    %v3268 = vsel %vm355, %v3264, 0.0
    %3269 = vadd.xlane.f32.xlu0 %v3268
    %v3270 = vpop.xlane.xlu0 %3269
    %v3271 = vsel %vm355, %v3265, 0.0
    %3272 = vadd.xlane.f32.xlu0 %v3271
    %v3273 = vpop.xlane.xlu0 %3272
    %v3274 = vsel %vm355, %v3266, 0.0
    %3275 = vadd.xlane.f32.xlu0 %v3274
    %v3276 = vpop.xlane.xlu0 %3275
    %v3277 = vsel %vm355, %v3267, 0.0
    %3278 = vadd.xlane.f32.xlu0 %v3277
    %v3279 = vpop.xlane.xlu0 %3278
    %v3280 = vmul.f32 %v3270, %v368
    %v3281 = vmul.f32 %v3273, %v368
    %v3282 = vmul.f32 %v3276, %v368
    %v3283 = vmul.f32 %v3279, %v368
    %v3284 = vadd.f32 %v3280, 1e-05
    %v3285 = vadd.f32 %v3281, 1e-05
    %v3286 = vadd.f32 %v3282, 1e-05
    %v3287 = vadd.f32 %v3283, 1e-05
    %v3288 = vrsqrt.pop %v3284
    %v3289 = vrsqrt.pop %v3285
    %v3290 = vrsqrt.pop %v3286
    %v3291 = vrsqrt.pop %v3287
    %v3292 = vmul.f32 %v3260, %v3288
    %v3293 = vmul.f32 %v3261, %v3289
    %v3294 = vmul.f32 %v3262, %v3290
    %v3295 = vmul.f32 %v3263, %v3291
    %v3296 = vlaneseq
    %v3297 = vshrl.u32 %v3296, 7
    %v3298 = vsub.s32 0, %v3297
    %v3299 = vrot.slane %v1956, %v3298
    %v3300 = vmul.f32 %v3292, %v3299
    %v3301 = vmul.f32 %v3293, %v3299
    %v3302 = vmul.f32 %v3294, %v3299
    %v3303 = vmul.f32 %v3295, %v3299
    %v3304 = vlaneseq
    %v3305 = vshrl.u32 %v3304, 7
    %v3306 = vsub.s32 0, %v3305
    %v3307 = vrot.slane %v1957, %v3306
    %v3308 = vadd.f32 %v3300, %v3307
    %v3309 = vadd.f32 %v3301, %v3307
    %v3310 = vadd.f32 %v3302, %v3307
    %v3311 = vadd.f32 %v3303, %v3307
    %s3312 = scalar_lea.vmem %s5, 32
    %v3313 = vld [vmem:[%s3312] sm:$0xff]
    %v3314 = vld [vmem:[%s3312 + $0x8] sm:$0xff]
    %v3315 = vld [vmem:[%s3312 + $0x10] sm:$0xff]
    %v3316 = vld [vmem:[%s3312 + $0x18] sm:$0xff]
    %v3317 = vlaneseq
    %v3318 = vshrl.u32 %v3317, 7
    %v3319 = vsub.s32 0, %v3318
    %v3320 = vrot.slane %v1959, %v3319
    %v3322 = vsel %vm355, %v3308, 0
    %v3325 = vsel %vm355, %v3309, 0
    %v3328 = vsel %vm355, %v3310, 0
    %v3331 = vsel %vm355, %v3311, 0
    %3333 = vmatprep.subr.mxu0 0.0
    %3334 = vmatpush1.msra.mxu0 0.0
    %3335 = vmatprep.subr.mxu0 0.0
    %3336 = vmatpush1.msra.mxu0 0.0
    %3337 = vmatprep.subr.mxu0 0.0
    %3338 = vmatpush1.msra.mxu0 0.0
    %3339 = vmatprep.subr.mxu0 0.0
    %3340 = vmatpush1.msra.mxu0 0.0
    %3341 = vmatprep.subr.mxu0 0.0
    %3342 = vmatpush1.msra.mxu0 0.0
    %3343 = vmatprep.subr.mxu0 0.0
    %3344 = vmatpush1.msra.mxu0 0.0
    %3345 = vmatprep.subr.mxu0 0.0
    %3346 = vmatpush1.msra.mxu0 0.0
    %3347 = vmatprep.subr.mxu0 0.0
    %3348 = vmatpush1.msra.mxu0 0.0
    %3349 = vmatprep.subr.mxu0 0.0
    %3350 = vmatpush1.msra.mxu0 0.0
    %3351 = vmatprep.subr.mxu0 0.0
    %3352 = vmatpush1.msra.mxu0 0.0
    %3353 = vmatprep.subr.mxu0 0.0
    %3354 = vmatpush1.msra.mxu0 0.0
    %3355 = vmatprep.subr.mxu0 0.0
    %3356 = vmatpush1.msra.mxu0 0.0
    %3357 = vmatprep.subr.mxu0 0.0
    %3358 = vmatpush1.msra.mxu0 %v3316
    %3359 = vmatprep.subr.mxu0 0.0
    %3360 = vmatpush1.msra.mxu0 %v3315
    %3361 = vmatprep.subr.mxu0 0.0
    %3362 = vmatpush1.msra.mxu0 %v3314
    %3363 = vmatprep.subr.mxu0 0.0
    %3364 = vmatpush1.msra.mxu0 %v3313
    %3365 = vmatprep.subr.mxu0 0.0
    %3366 = vmatpush2.msra.mxu0 0.0
    %3367 = vmatprep.subr.mxu0 0.0
    %3368 = vmatpush2.msra.mxu0 0.0
    %3369 = vmatprep.subr.mxu0 0.0
    %3370 = vmatpush2.msra.mxu0 0.0
    %3371 = vmatprep.subr.mxu0 0.0
    %3372 = vmatpush2.msra.mxu0 0.0
    %3373 = vmatprep.subr.mxu0 0.0
    %3374 = vmatpush2.msra.mxu0 0.0
    %3375 = vmatprep.subr.mxu0 0.0
    %3376 = vmatpush2.msra.mxu0 0.0
    %3377 = vmatprep.subr.mxu0 0.0
    %3378 = vmatpush2.msra.mxu0 0.0
    %3379 = vmatprep.subr.mxu0 0.0
    %3380 = vmatpush2.msra.mxu0 0.0
    %3381 = vmatprep.subr.mxu0 0.0
    %3382 = vmatpush2.msra.mxu0 0.0
    %3383 = vmatprep.subr.mxu0 0.0
    %3384 = vmatpush2.msra.mxu0 0.0
    %3385 = vmatprep.subr.mxu0 0.0
    %3386 = vmatpush2.msra.mxu0 0.0
    %3387 = vmatprep.subr.mxu0 0.0
    %3388 = vmatpush2.msra.mxu0 0.0
    %3389 = vmatprep.subr.mxu0 0.0
    %3390 = vmatpush2.msra.mxu0 0.0
    %3391 = vmatprep.subr.mxu0 0.0
    %3392 = vmatpush2.msra.mxu0 0.0
    %3393 = vmatprep.subr.mxu0 0.0
    %3394 = vmatpush2.msra.mxu0 0.0
    %3395 = vmatprep.subr.mxu0 0.0
    %3396 = vmatpush2.msra.mxu0 0.0
    %3397 = vmatprep.mubr.f32.mxu0 0.0
    %3398 = vmatmul.mubr.f32.gmra.mxu0 %v3322
    %v3399 = vpop.f32.mrf.mxu0
    %v3400 = vadd.f32 %v3320, %v3399
    %v3401 = vpop.f32.mrf.mxu0
    %3402 = vmatprep.mubr.f32.mxu0 0.0
    %3403 = vmatmul.mubr.f32.gmra.mxu0 %v3325
    %v3404 = vpop.f32.mrf.mxu0
    %v3405 = vadd.f32 %v3320, %v3404
    %v3406 = vpop.f32.mrf.mxu0
    %3407 = vmatprep.mubr.f32.mxu0 0.0
    %3408 = vmatmul.mubr.f32.gmra.mxu0 %v3328
    %v3409 = vpop.f32.mrf.mxu0
    %v3410 = vadd.f32 %v3320, %v3409
    %v3411 = vpop.f32.mrf.mxu0
    %3412 = vmatprep.mubr.f32.mxu0 0.0
    %3413 = vmatmul.mubr.f32.gmra.mxu0 %v3331
    %v3414 = vpop.f32.mrf.mxu0
    %v3415 = vadd.f32 %v3320, %v3414
    %v3416 = vpop.f32.mrf.mxu0
    %3417 = vdwg.mxu0
    %v3418 = vmul.f32 %v3400, 0.5
    %v3419 = vmul.f32 %v3405, 0.5
    %v3420 = vmul.f32 %v3410, 0.5
    %v3421 = vmul.f32 %v3415, 0.5
    %v3422 = vmul.f32 %v3400, 0.70710677
    %v3423 = vmul.f32 %v3405, 0.70710677
    %v3424 = vmul.f32 %v3410, 0.70710677
    %v3425 = vmul.f32 %v3415, 0.70710677
    %v3426 = verf.f32.pop %v3422
    %v3427 = verf.f32.pop %v3423
    %v3428 = verf.f32.pop %v3424
    %v3429 = verf.f32.pop %v3425
    %v3430 = vadd.f32 %v3426, 1.0
    %v3431 = vadd.f32 %v3427, 1.0
    %v3432 = vadd.f32 %v3428, 1.0
    %v3433 = vadd.f32 %v3429, 1.0
    %v3434 = vmul.f32 %v3418, %v3430
    %v3435 = vmul.f32 %v3419, %v3431
    %v3436 = vmul.f32 %v3420, %v3432
    %v3437 = vmul.f32 %v3421, %v3433
    %s3438 = scalar_lea.vmem %s6, 64
    %v3439 = vld [vmem:[%s3438] sm:$0xff]
    %v3440 = vld [vmem:[%s3438 + $0x8] sm:$0xff]
    %v3441 = vld [vmem:[%s3438 + $0x10] sm:$0xff]
    %v3442 = vld [vmem:[%s3438 + $0x18] sm:$0xff]
    %v3443 = vld [vmem:[%s3438 + $0x20] sm:$0xff]
    %v3444 = vld [vmem:[%s3438 + $0x28] sm:$0xff]
    %v3445 = vld [vmem:[%s3438 + $0x30] sm:$0xff]
    %v3446 = vld [vmem:[%s3438 + $0x38] sm:$0xff]
    %v3448 = vsel %vm66, %v3434, 0
    %v3451 = vsel %vm66, %v3435, 0
    %v3454 = vsel %vm66, %v3436, 0
    %v3457 = vsel %vm66, %v3437, 0
    %3459 = vmatprep.subr.mxu0 0.0
    %3460 = vmatpush1.msra.mxu0 0.0
    %3461 = vmatprep.subr.mxu0 0.0
    %3462 = vmatpush1.msra.mxu0 0.0
    %3463 = vmatprep.subr.mxu0 0.0
    %3464 = vmatpush1.msra.mxu0 0.0
    %3465 = vmatprep.subr.mxu0 0.0
    %3466 = vmatpush1.msra.mxu0 0.0
    %3467 = vmatprep.subr.mxu0 0.0
    %3468 = vmatpush1.msra.mxu0 0.0
    %3469 = vmatprep.subr.mxu0 0.0
    %3470 = vmatpush1.msra.mxu0 0.0
    %3471 = vmatprep.subr.mxu0 0.0
    %3472 = vmatpush1.msra.mxu0 0.0
    %3473 = vmatprep.subr.mxu0 0.0
    %3474 = vmatpush1.msra.mxu0 0.0
    %3475 = vmatprep.subr.mxu0 0.0
    %3476 = vmatpush1.msra.mxu0 %v3446
    %3477 = vmatprep.subr.mxu0 0.0
    %3478 = vmatpush1.msra.mxu0 %v3445
    %3479 = vmatprep.subr.mxu0 0.0
    %3480 = vmatpush1.msra.mxu0 %v3444
    %3481 = vmatprep.subr.mxu0 0.0
    %3482 = vmatpush1.msra.mxu0 %v3443
    %3483 = vmatprep.subr.mxu0 0.0
    %3484 = vmatpush1.msra.mxu0 %v3442
    %3485 = vmatprep.subr.mxu0 0.0
    %3486 = vmatpush1.msra.mxu0 %v3441
    %3487 = vmatprep.subr.mxu0 0.0
    %3488 = vmatpush1.msra.mxu0 %v3440
    %3489 = vmatprep.subr.mxu0 0.0
    %3490 = vmatpush1.msra.mxu0 %v3439
    %3491 = vmatprep.subr.mxu0 0.0
    %3492 = vmatpush2.msra.mxu0 0.0
    %3493 = vmatprep.subr.mxu0 0.0
    %3494 = vmatpush2.msra.mxu0 0.0
    %3495 = vmatprep.subr.mxu0 0.0
    %3496 = vmatpush2.msra.mxu0 0.0
    %3497 = vmatprep.subr.mxu0 0.0
    %3498 = vmatpush2.msra.mxu0 0.0
    %3499 = vmatprep.subr.mxu0 0.0
    %3500 = vmatpush2.msra.mxu0 0.0
    %3501 = vmatprep.subr.mxu0 0.0
    %3502 = vmatpush2.msra.mxu0 0.0
    %3503 = vmatprep.subr.mxu0 0.0
    %3504 = vmatpush2.msra.mxu0 0.0
    %3505 = vmatprep.subr.mxu0 0.0
    %3506 = vmatpush2.msra.mxu0 0.0
    %3507 = vmatprep.subr.mxu0 0.0
    %3508 = vmatpush2.msra.mxu0 0.0
    %3509 = vmatprep.subr.mxu0 0.0
    %3510 = vmatpush2.msra.mxu0 0.0
    %3511 = vmatprep.subr.mxu0 0.0
    %3512 = vmatpush2.msra.mxu0 0.0
    %3513 = vmatprep.subr.mxu0 0.0
    %3514 = vmatpush2.msra.mxu0 0.0
    %3515 = vmatprep.subr.mxu0 0.0
    %3516 = vmatpush2.msra.mxu0 0.0
    %3517 = vmatprep.subr.mxu0 0.0
    %3518 = vmatpush2.msra.mxu0 0.0
    %3519 = vmatprep.subr.mxu0 0.0
    %3520 = vmatpush2.msra.mxu0 0.0
    %3521 = vmatprep.subr.mxu0 0.0
    %3522 = vmatpush2.msra.mxu0 0.0
    %3523 = vmatprep.mubr.f32.mxu0 0.0
    %3524 = vmatmul.mubr.f32.gmra.mxu0 %v3448
    %v3525 = vpop.f32.mrf.mxu0
    %v3526 = vadd.f32 0.0, %v3525
    %v3527 = vpop.f32.mrf.mxu0
    %3528 = vmatprep.mubr.f32.mxu0 0.0
    %3529 = vmatmul.mubr.f32.gmra.mxu0 %v3451
    %v3530 = vpop.f32.mrf.mxu0
    %v3531 = vadd.f32 0.0, %v3530
    %v3532 = vpop.f32.mrf.mxu0
    %3533 = vmatprep.mubr.f32.mxu0 0.0
    %3534 = vmatmul.mubr.f32.gmra.mxu0 %v3454
    %v3535 = vpop.f32.mrf.mxu0
    %v3536 = vadd.f32 0.0, %v3535
    %v3537 = vpop.f32.mrf.mxu0
    %3538 = vmatprep.mubr.f32.mxu0 0.0
    %3539 = vmatmul.mubr.f32.gmra.mxu0 %v3457
    %v3540 = vpop.f32.mrf.mxu0
    %v3541 = vadd.f32 0.0, %v3540
    %v3542 = vpop.f32.mrf.mxu0
    %3543 = vdwg.mxu0
    %v3544 = vadd.f32 %v3240, %v3526
    %v3545 = vadd.f32 %v3241, %v3531
    %v3546 = vadd.f32 %v3242, %v3536
    %v3547 = vadd.f32 %v3243, %v3541
    %v3548 = vlaneseq
    %v3549 = vshrl.u32 %v3548, 7
    %v3550 = vsub.s32 0, %v3549
    %v3551 = vrot.slane %v1958, %v3550
    %v3552 = vadd.f32 %v3544, %v3551
    %v3553 = vadd.f32 %v3545, %v3551
    %v3554 = vadd.f32 %v3546, %v3551
    %v3555 = vadd.f32 %v3547, %v3551
    %v3556 = vld [vmem:[%s14] sm:$0x3]
    %v3558 = vsel %vm355, %v3556, 0
    %3560 = vmatprep.subr.mxu0 0.0
    %3561 = vmatpush1.msra.mxu0 0.0
    %3562 = vmatprep.subr.mxu0 0.0
    %3563 = vmatpush1.msra.mxu0 0.0
    %3564 = vmatprep.subr.mxu0 0.0
    %3565 = vmatpush1.msra.mxu0 0.0
    %3566 = vmatprep.subr.mxu0 0.0
    %3567 = vmatpush1.msra.mxu0 0.0
    %3568 = vmatprep.subr.mxu0 0.0
    %3569 = vmatpush1.msra.mxu0 0.0
    %3570 = vmatprep.subr.mxu0 0.0
    %3571 = vmatpush1.msra.mxu0 0.0
    %3572 = vmatprep.subr.mxu0 0.0
    %3573 = vmatpush1.msra.mxu0 0.0
    %3574 = vmatprep.subr.mxu0 0.0
    %3575 = vmatpush1.msra.mxu0 0.0
    %3576 = vmatprep.subr.mxu0 0.0
    %3577 = vmatpush1.msra.mxu0 0.0
    %3578 = vmatprep.subr.mxu0 0.0
    %3579 = vmatpush1.msra.mxu0 0.0
    %3580 = vmatprep.subr.mxu0 0.0
    %3581 = vmatpush1.msra.mxu0 0.0
    %3582 = vmatprep.subr.mxu0 0.0
    %3583 = vmatpush1.msra.mxu0 0.0
    %3584 = vmatprep.subr.mxu0 0.0
    %3585 = vmatpush1.msra.mxu0 %v3555
    %3586 = vmatprep.subr.mxu0 0.0
    %3587 = vmatpush1.msra.mxu0 %v3554
    %3588 = vmatprep.subr.mxu0 0.0
    %3589 = vmatpush1.msra.mxu0 %v3553
    %3590 = vmatprep.subr.mxu0 0.0
    %3591 = vmatpush1.msra.mxu0 %v3552
    %3592 = vmatprep.subr.mxu0 0.0
    %3593 = vmatpush2.msra.mxu0 0.0
    %3594 = vmatprep.subr.mxu0 0.0
    %3595 = vmatpush2.msra.mxu0 0.0
    %3596 = vmatprep.subr.mxu0 0.0
    %3597 = vmatpush2.msra.mxu0 0.0
    %3598 = vmatprep.subr.mxu0 0.0
    %3599 = vmatpush2.msra.mxu0 0.0
    %3600 = vmatprep.subr.mxu0 0.0
    %3601 = vmatpush2.msra.mxu0 0.0
    %3602 = vmatprep.subr.mxu0 0.0
    %3603 = vmatpush2.msra.mxu0 0.0
    %3604 = vmatprep.subr.mxu0 0.0
    %3605 = vmatpush2.msra.mxu0 0.0
    %3606 = vmatprep.subr.mxu0 0.0
    %3607 = vmatpush2.msra.mxu0 0.0
    %3608 = vmatprep.subr.mxu0 0.0
    %3609 = vmatpush2.msra.mxu0 0.0
    %3610 = vmatprep.subr.mxu0 0.0
    %3611 = vmatpush2.msra.mxu0 0.0
    %3612 = vmatprep.subr.mxu0 0.0
    %3613 = vmatpush2.msra.mxu0 0.0
    %3614 = vmatprep.subr.mxu0 0.0
    %3615 = vmatpush2.msra.mxu0 0.0
    %3616 = vmatprep.subr.mxu0 0.0
    %3617 = vmatpush2.msra.mxu0 0.0
    %3618 = vmatprep.subr.mxu0 0.0
    %3619 = vmatpush2.msra.mxu0 0.0
    %3620 = vmatprep.subr.mxu0 0.0
    %3621 = vmatpush2.msra.mxu0 0.0
    %3622 = vmatprep.subr.mxu0 0.0
    %3623 = vmatpush2.msra.mxu0 0.0
    %3624 = vmatprep.mubr.f32.mxu0 0.0
    %3625 = vmatmul.mubr.f32.gmra.mxu0 %v3558
    %v3626 = vpop.f32.mrf.mxu0
    %v3627 = vadd.f32 0.0, %v3626
    %v3628 = vpop.f32.mrf.mxu0
    %3629 = vdwg.mxu0
    %v3630 = vld [vmem:[%s9 + $0x1] sm:$0x1]
    %v3631 = vld [vmem:[%s9 + $0x2] sm:$0x1]
    %vm3632 = vcmask 254976
    %v3633 = vsel %vm3632, %v3627, 0.0
    %3634 = vadd.xlane.f32.xlu0 %v3633
    %v3635 = vpop.xlane.xlu0 %3634
    %v3636 = vmul.f32 %v3635, %v368
    %v3637 = vsub.f32 %v3627, %v3636
    %v3638 = vmul.f32 %v3637, %v3637
    %v3639 = vsel %vm3632, %v3638, 0.0
    %3640 = vadd.xlane.f32.xlu0 %v3639
    %v3641 = vpop.xlane.xlu0 %3640
    %v3642 = vmul.f32 %v3641, %v368
    %v3643 = vadd.f32 %v3642, 1e-05
    %v3644 = vrsqrt.pop %v3643
    %v3645 = vmul.f32 %v3637, %v3644
    %v3646 = vlaneseq
    %v3647 = vshrl.u32 %v3646, 7
    %v3648 = vsub.s32 0, %v3647
    %v3649 = vrot.slane %v3630, %v3648
    %v3650 = vmul.f32 %v3645, %v3649
    %v3651 = vlaneseq
    %v3652 = vshrl.u32 %v3651, 7
    %v3653 = vsub.s32 0, %v3652
    %v3654 = vrot.slane %v3631, %v3653
    %v3655 = vadd.f32 %v3650, %v3654
    %v3656 = vld [vmem:[%s7] sm:$0xff]
    %v3657 = vld [vmem:[%s7 + $0x8] sm:$0xff]
    %v3658 = vld [vmem:[%s7 + $0x10] sm:$0xff]
    %v3659 = vld [vmem:[%s7 + $0x18] sm:$0xff]
    %v3660 = vld [vmem:[%s8] sm:$0x1]
    %v3662 = vlaneseq
    %v3663 = vshrl.u32 %v3662, 7
    %v3664 = vsub.s32 0, %v3663
    %v3665 = vrot.slane %v3660, %v3664
    %v3668 = vsel %vm355, %v3655, 0
    %3670 = vmatprep.subr.mxu0 0.0
    %3671 = vmatpush1.msra.mxu0 0.0
    %3672 = vmatprep.subr.mxu0 0.0
    %3673 = vmatpush1.msra.mxu0 0.0
    %3674 = vmatprep.subr.mxu0 0.0
    %3675 = vmatpush1.msra.mxu0 0.0
    %3676 = vmatprep.subr.mxu0 0.0
    %3677 = vmatpush1.msra.mxu0 0.0
    %3678 = vmatprep.subr.mxu0 0.0
    %3679 = vmatpush1.msra.mxu0 0.0
    %3680 = vmatprep.subr.mxu0 0.0
    %3681 = vmatpush1.msra.mxu0 0.0
    %3682 = vmatprep.subr.mxu0 0.0
    %3683 = vmatpush1.msra.mxu0 0.0
    %3684 = vmatprep.subr.mxu0 0.0
    %3685 = vmatpush1.msra.mxu0 0.0
    %3686 = vmatprep.subr.mxu0 0.0
    %3687 = vmatpush1.msra.mxu0 0.0
    %3688 = vmatprep.subr.mxu0 0.0
    %3689 = vmatpush1.msra.mxu0 0.0
    %3690 = vmatprep.subr.mxu0 0.0
    %3691 = vmatpush1.msra.mxu0 0.0
    %3692 = vmatprep.subr.mxu0 0.0
    %3693 = vmatpush1.msra.mxu0 0.0
    %3694 = vmatprep.subr.mxu0 0.0
    %3695 = vmatpush1.msra.mxu0 %v3659
    %3696 = vmatprep.subr.mxu0 0.0
    %3697 = vmatpush1.msra.mxu0 %v3658
    %3698 = vmatprep.subr.mxu0 0.0
    %3699 = vmatpush1.msra.mxu0 %v3657
    %3700 = vmatprep.subr.mxu0 0.0
    %3701 = vmatpush1.msra.mxu0 %v3656
    %3702 = vmatprep.subr.mxu0 0.0
    %3703 = vmatpush2.msra.mxu0 0.0
    %3704 = vmatprep.subr.mxu0 0.0
    %3705 = vmatpush2.msra.mxu0 0.0
    %3706 = vmatprep.subr.mxu0 0.0
    %3707 = vmatpush2.msra.mxu0 0.0
    %3708 = vmatprep.subr.mxu0 0.0
    %3709 = vmatpush2.msra.mxu0 0.0
    %3710 = vmatprep.subr.mxu0 0.0
    %3711 = vmatpush2.msra.mxu0 0.0
    %3712 = vmatprep.subr.mxu0 0.0
    %3713 = vmatpush2.msra.mxu0 0.0
    %3714 = vmatprep.subr.mxu0 0.0
    %3715 = vmatpush2.msra.mxu0 0.0
    %3716 = vmatprep.subr.mxu0 0.0
    %3717 = vmatpush2.msra.mxu0 0.0
    %3718 = vmatprep.subr.mxu0 0.0
    %3719 = vmatpush2.msra.mxu0 0.0
    %3720 = vmatprep.subr.mxu0 0.0
    %3721 = vmatpush2.msra.mxu0 0.0
    %3722 = vmatprep.subr.mxu0 0.0
    %3723 = vmatpush2.msra.mxu0 0.0
    %3724 = vmatprep.subr.mxu0 0.0
    %3725 = vmatpush2.msra.mxu0 0.0
    %3726 = vmatprep.subr.mxu0 0.0
    %3727 = vmatpush2.msra.mxu0 0.0
    %3728 = vmatprep.subr.mxu0 0.0
    %3729 = vmatpush2.msra.mxu0 0.0
    %3730 = vmatprep.subr.mxu0 0.0
    %3731 = vmatpush2.msra.mxu0 0.0
    %3732 = vmatprep.subr.mxu0 0.0
    %3733 = vmatpush2.msra.mxu0 0.0
    %3734 = vmatprep.mubr.f32.mxu0 0.0
    %3735 = vmatmul.mubr.f32.gmra.mxu0 %v3668
    %v3736 = vpop.f32.mrf.mxu0
    %v3737 = vadd.f32 %v3665, %v3736
    %v3738 = vpop.f32.mrf.mxu0
    %3739 = vdwg.mxu0
    %3740 = vst [vmem:[#allocation2] sm:$0x3] %v3737
    // Predicated region
    $region62: #{speckk_forward.1} parent=1 // pred_check
      _
    $region63: #{speckk_forward.1} parent=1 // pred_check_branch
      %3742 = sbr.rel (0) target = $region65
    $region64: #{speckk_forward.1} parent=1 // pred_region
      %s3744 = ssub.s32 32, 32
      %3745 = vsyncadd [#allocation3], %s3744
      %s3747 = sshll.u32 [#allocation2], 4
      %s3748 = int_to_ptr.vmem [resolvable:$true] %s3747
      %3750 = dma.vmem_to_hbm [thread:$0]  %s3748, 32, %s15, [#allocation3]
    $region65: #{speckk_forward.1} parent=1 // pred_fallthru
      _
    // Predicated region
    $region66: #{speckk_forward.1} parent=1 // pred_check
      _
    $region67: #{speckk_forward.1} parent=1 // pred_check_branch
      %3752 = sbr.rel (0) target = $region69
    $region68: #{speckk_forward.1} parent=1 // pred_region
      %3753 = dma.done [#allocation3], 32
    $region69: #{speckk_forward.1} parent=1 // pred_fallthru
      _
    %3754 = vsyncpa [#allocation3], 1

</llo_original>
